<compile_context>
chip_gen: v6e
topology: v6e:2x2x1
jax: 0.10.0
libtpu: 0.0.40
codegen_flags: <defaults>
</compile_context>

<pallas_src>
import numpy as np
import jax
import jax.numpy as jnp
from jax import lax
from jax.experimental import pallas as pl
from jax.experimental.pallas import tpu as pltpu

EPS = 1e-5


def _round_up(a, b):
    return (a + b - 1) // b * b


def _cdiv(a, b):
    return (a + b - 1) // b


# ---------------------------------------------------------------------------
# Fused kernel over one row tile, all T frames at once:
#   out[t] = relu( x[t-1]@W0 + x[t]@W1 + x[t+1]@W2 + shift + x[t] )
# (BN scale already folded into W0/W1/W2; residual == center tap.)
# ---------------------------------------------------------------------------
def _tconv_bn_res_relu_kernel(x_ref, w_ref, shift_ref, o_ref):
    # x_ref: (T, tr, C) bf16 | w_ref: (3, C, C) bf16 | shift_ref: (1, C) f32
    # o_ref: (T, tr, C) bf16
    T, tr, C = x_ref.shape
    x = x_ref[...]                                            # read once
    zero = jnp.zeros((1, tr, C), dtype=x.dtype)
    # Temporal halo built in-kernel: zero frame at t = -1 and t = T.
    xm1 = jnp.concatenate([zero, x[:-1]], axis=0).reshape(T * tr, C)
    xp1 = jnp.concatenate([x[1:], zero], axis=0).reshape(T * tr, C)
    x0 = x.reshape(T * tr, C)

    acc = jnp.dot(xm1, w_ref[0], preferred_element_type=jnp.float32)
    acc = acc + jnp.dot(x0, w_ref[1], preferred_element_type=jnp.float32)
    acc = acc + jnp.dot(xp1, w_ref[2], preferred_element_type=jnp.float32)

    # BN shift + residual (center tap) + ReLU; store bf16.
    y = acc + shift_ref[...] + x0.astype(jnp.float32)
    o_ref[...] = jnp.maximum(y, 0.0).reshape(T, tr, C).astype(o_ref.dtype)


def t_basicblock_pallas(x_ncdhw, w_conv, bn_params, *, row_tile=512,
                        out_dtype=jnp.float32):
    """T_BasicBlock forward. x: (N, C, T, H, W) f32. Returns (N, C, T, H, W)."""
    N, C, T, H, W = x_ncdhw.shape
    Cout, Cin, Kt, Kh, Kw = w_conv.shape
    assert (Cin, Kt, Kh, Kw) == (C, 3, 1, 1) and Cout == C, \
        "residual add requires inplanes == planes, stride == 1"
    assert T >= 2, "kernel assumes at least 2 temporal frames"

    gamma, beta, mean, var = bn_params
    scale = gamma / jnp.sqrt(var + EPS)
    shift = (beta - mean * scale).reshape(1, C).astype(jnp.float32)

    # Fold BN scale into the conv taps: (3, Cin, Cout), bf16.
    w_taps = (jnp.transpose(w_conv[:, :, :, 0, 0], (2, 1, 0))
              * scale[None, None, :]).astype(jnp.bfloat16)

    # Channels-last, N and H*W folded into one row axis: (T, N*H*W, C).
    # Single fused transpose+cast copy in the wrapper; no T-halo / channel padding.
    R = N * H * W
    x = jnp.transpose(x_ncdhw, (2, 0, 3, 4, 1)).reshape(T, R, C).astype(jnp.bfloat16)

    # Row tile: balanced via cdiv (waste <= 16 rows/tile), 16-aligned (bf16 sublane
    # packing), clamped so one (T, tr, C) bf16 block stays ~<= 2 MiB of VMEM.
    vmem_rows = max(16, (2 * 1024 * 1024) // max(1, T * C * 2))
    cap = max(16, min(row_tile, vmem_rows))
    ntiles = _cdiv(R, cap)
    tr = _round_up(_cdiv(R, ntiles), 16)
    Rp = ntiles * tr
    if Rp != R:
        x = jnp.pad(x, ((0, 0), (0, Rp - R), (0, 0)))

    out = pl.pallas_call(
        _tconv_bn_res_relu_kernel,
        out_shape=jax.ShapeDtypeStruct((T, Rp, C), jnp.bfloat16),
        grid_spec=pltpu.PrefetchScalarGridSpec(
            num_scalar_prefetch=0,
            grid=(ntiles,),
            in_specs=[
                pl.BlockSpec((T, tr, C), lambda r: (0, r, 0)),   # activations (read once)
                pl.BlockSpec((3, C, C), lambda r: (0, 0, 0)),    # folded weights, resident
                pl.BlockSpec((1, C), lambda r: (0, 0)),          # BN shift, resident
            ],
            out_specs=pl.BlockSpec((T, tr, C), lambda r: (0, r, 0)),
        ),
        compiler_params=pltpu.CompilerParams(
            dimension_semantics=("parallel",),           # row tiles -> both TCs on v7x
            vmem_limit_bytes=64 * 1024 * 1024,
        ),
    )(x, w_taps, shift)

    out = out[:, :R, :].reshape(T, N, H, W, C)
    # Exit transpose back to NCDHW; f32 cast fused into this copy.
    return jnp.transpose(out, (1, 4, 0, 2, 3)).astype(out_dtype)


# ---------------------------------------------------------------------------
# Pure-JAX reference (matches the PyTorch module in eval mode)
# ---------------------------------------------------------------------------
def t_basicblock_ref(x, w_conv, bn_params):
    dn = ("NCDHW", "OIDHW", "NCDHW")
    out = lax.conv_general_dilated(x, w_conv, window_strides=(1, 1, 1),
                                   padding=[(1, 1), (0, 0), (0, 0)],
                                   dimension_numbers=dn)
    g, b, m, v = (a.reshape(1, -1, 1, 1, 1) for a in bn_params)
    out = (out - m) / jnp.sqrt(v + EPS) * g + b
    return jax.nn.relu(out + x)


if __name__ == "__main__":
    key = jax.random.PRNGKey(0)
    kx, kw, k1, k2, k3, k4 = jax.random.split(key, 6)

    inplanes = planes = 64          # residual add requires inplanes == planes, stride == 1
    N, T, H, W = 2, 8, 8, 8

    x = jax.random.normal(kx, (N, inplanes, T, H, W), jnp.float32)
    w_conv = 0.1 * jax.random.normal(kw, (planes, inplanes, 3, 1, 1), jnp.float32)
    gamma = 1.0 + 0.1 * jax.random.normal(k1, (planes,), jnp.float32)
    beta = 0.1 * jax.random.normal(k2, (planes,), jnp.float32)
    mean = 0.1 * jax.random.normal(k3, (planes,), jnp.float32)
    var = 0.5 + jax.random.uniform(k4, (planes,), jnp.float32)
    bn_params = (gamma, beta, mean, var)

    out = jax.block_until_ready(t_basicblock_pallas(x, w_conv, bn_params))
    ref = jax.block_until_ready(t_basicblock_ref(x, w_conv, bn_params))

    assert out.shape == ref.shape == x.shape
    # bf16 activations/weights/output with f32 accumulation -> relaxed tolerance.
    np.testing.assert_allclose(np.asarray(out), np.asarray(ref), rtol=3e-2, atol=3e-2)
    print("KERNEL_OK")
</pallas_src>

<mosaic_0001>
module attributes {stable_mosaic.version = 11 : i64} {
  func.func @_tconv_bn_res_relu_kernel(%arg0: i32, %arg1: memref<8x128x64xbf16, #tpu.memory_space<vmem>>, %arg2: memref<3x64x64xbf16, #tpu.memory_space<vmem>>, %arg3: memref<1x64xf32, #tpu.memory_space<vmem>>, %arg4: memref<8x128x64xbf16, #tpu.memory_space<vmem>>) attributes {dimension_semantics = [#tpu.dimension_semantics<parallel>], iteration_bounds = array<i64: 1>, scalar_prefetch = 0 : i64, scratch_operands = 0 : i64, tpu.core_type = #tpu.core_type<tc>, window_params = [{transform_indices = @transform_0, window_bounds = array<i64: 8, 128, 64>}, {pipeline_mode = #tpu.pipeline_mode<synchronous>, transform_indices = @transform_1, window_bounds = array<i64: 3, 64, 64>}, {pipeline_mode = #tpu.pipeline_mode<synchronous>, transform_indices = @transform_2, window_bounds = array<i64: 1, 64>}, {transform_indices = @transform_3, window_bounds = array<i64: 8, 128, 64>}]} {
    %c0 = arith.constant 0 : index
    %c0_0 = arith.constant 0 : index
    %c0_1 = arith.constant 0 : index
    %0 = vector.load %arg1[%c0, %c0_0, %c0_1] : memref<8x128x64xbf16, #tpu.memory_space<vmem>>, vector<8x128x64xbf16>
    %cst = arith.constant 0.000000e+00 : bf16
    %1 = vector.broadcast %cst : bf16 to vector<1x128x64xbf16>
    %2 = vector.extract_strided_slice %0 {offsets = [0, 0, 0], sizes = [7, 128, 64], strides = [1, 1, 1]} : vector<8x128x64xbf16> to vector<7x128x64xbf16>
    %3 = tpu.concatenate %1, %2 in 0 : vector<1x128x64xbf16>, vector<7x128x64xbf16> -> vector<8x128x64xbf16>
    %4 = vector.shape_cast %3 : vector<8x128x64xbf16> to vector<1024x64xbf16>
    %5 = vector.extract_strided_slice %0 {offsets = [1, 0, 0], sizes = [7, 128, 64], strides = [1, 1, 1]} : vector<8x128x64xbf16> to vector<7x128x64xbf16>
    %6 = tpu.concatenate %5, %1 in 0 : vector<7x128x64xbf16>, vector<1x128x64xbf16> -> vector<8x128x64xbf16>
    %7 = vector.shape_cast %6 : vector<8x128x64xbf16> to vector<1024x64xbf16>
    %8 = vector.shape_cast %0 : vector<8x128x64xbf16> to vector<1024x64xbf16>
    %c0_2 = arith.constant 0 : index
    %c0_3 = arith.constant 0 : index
    %c0_4 = arith.constant 0 : index
    %9 = vector.load %arg2[%c0_2, %c0_3, %c0_4] : memref<3x64x64xbf16, #tpu.memory_space<vmem>>, vector<1x64x64xbf16>
    %10 = vector.shape_cast %9 : vector<1x64x64xbf16> to vector<64x64xbf16>
    %cst_5 = arith.constant dense<0.000000e+00> : vector<1024x64xf32>
    %11 = tpu.matmul %4, %10, %cst_5 {dimension_numbers = #tpu.dot_dimension_numbers<[1], [0], [0], [1], [0, 0, 1, 1], [], []>} : vector<1024x64xbf16>, vector<64x64xbf16>, vector<1024x64xf32> -> vector<1024x64xf32>
    %c1 = arith.constant 1 : index
    %c0_6 = arith.constant 0 : index
    %c0_7 = arith.constant 0 : index
    %12 = vector.load %arg2[%c1, %c0_6, %c0_7] : memref<3x64x64xbf16, #tpu.memory_space<vmem>>, vector<1x64x64xbf16>
    %13 = vector.shape_cast %12 : vector<1x64x64xbf16> to vector<64x64xbf16>
    %cst_8 = arith.constant dense<0.000000e+00> : vector<1024x64xf32>
    %14 = tpu.matmul %8, %13, %cst_8 {dimension_numbers = #tpu.dot_dimension_numbers<[1], [0], [0], [1], [0, 0, 1, 1], [], []>} : vector<1024x64xbf16>, vector<64x64xbf16>, vector<1024x64xf32> -> vector<1024x64xf32>
    %15 = arith.addf %11, %14 : vector<1024x64xf32>
    %c2 = arith.constant 2 : index
    %c0_9 = arith.constant 0 : index
    %c0_10 = arith.constant 0 : index
    %16 = vector.load %arg2[%c2, %c0_9, %c0_10] : memref<3x64x64xbf16, #tpu.memory_space<vmem>>, vector<1x64x64xbf16>
    %17 = vector.shape_cast %16 : vector<1x64x64xbf16> to vector<64x64xbf16>
    %cst_11 = arith.constant dense<0.000000e+00> : vector<1024x64xf32>
    %18 = tpu.matmul %7, %17, %cst_11 {dimension_numbers = #tpu.dot_dimension_numbers<[1], [0], [0], [1], [0, 0, 1, 1], [], []>} : vector<1024x64xbf16>, vector<64x64xbf16>, vector<1024x64xf32> -> vector<1024x64xf32>
    %19 = arith.addf %15, %18 : vector<1024x64xf32>
    %c0_12 = arith.constant 0 : index
    %c0_13 = arith.constant 0 : index
    %20 = vector.load %arg3[%c0_12, %c0_13] : memref<1x64xf32, #tpu.memory_space<vmem>>, vector<1x64xf32>
    %21 = vector.broadcast %20 : vector<1x64xf32> to vector<1024x64xf32>
    %22 = arith.addf %19, %21 : vector<1024x64xf32>
    %23 = arith.extf %8 : vector<1024x64xbf16> to vector<1024x64xf32>
    %24 = arith.addf %22, %23 : vector<1024x64xf32>
    %cst_14 = arith.constant 0.000000e+00 : f32
    %25 = vector.broadcast %cst_14 : f32 to vector<1024x64xf32>
    %26 = arith.maximumf %24, %25 : vector<1024x64xf32>
    %27 = vector.shape_cast %26 : vector<1024x64xf32> to vector<8x128x64xf32>
    %28 = arith.truncf %27 : vector<8x128x64xf32> to vector<8x128x64xbf16>
    %c0_15 = arith.constant 0 : index
    %c0_16 = arith.constant 0 : index
    %c0_17 = arith.constant 0 : index
    %29 = vector.load %arg4[%c0_15, %c0_16, %c0_17] : memref<8x128x64xbf16, #tpu.memory_space<vmem>>, vector<8x128x64xbf16>
    tpu.vector_store %arg4[%c0_15, %c0_16, %c0_17], %28 {strides = array<i32>} : memref<8x128x64xbf16, #tpu.memory_space<vmem>>, vector<8x128x64xbf16>,
    return
  }
  func.func @transform_0(%arg0: i32) -> (i32, i32, i32) {
    %c0_i32 = arith.constant 0 : i32
    %c0_i32_0 = arith.constant 0 : i32
    %c0_i32_1 = arith.constant 0 : i32
    return %c0_i32, %arg0, %c0_i32_0 : i32, i32, i32
  }
  func.func @transform_1(%arg0: i32) -> (i32, i32, i32) {
    %c0_i32 = arith.constant 0 : i32
    %c0_i32_0 = arith.constant 0 : i32
    %c0_i32_1 = arith.constant 0 : i32
    %c0_i32_2 = arith.constant 0 : i32
    return %c0_i32, %c0_i32_0, %c0_i32_1 : i32, i32, i32
  }
  func.func @transform_2(%arg0: i32) -> (i32, i32) {
    %c0_i32 = arith.constant 0 : i32
    %c0_i32_0 = arith.constant 0 : i32
    %c0_i32_1 = arith.constant 0 : i32
    return %c0_i32, %c0_i32_0 : i32, i32
  }
  func.func @transform_3(%arg0: i32) -> (i32, i32, i32) {
    %c0_i32 = arith.constant 0 : i32
    %c0_i32_0 = arith.constant 0 : i32
    %c0_i32_1 = arith.constant 0 : i32
    return %c0_i32, %arg0, %c0_i32_0 : i32, i32, i32
  }
}

</mosaic_0001>

<llo_original>
// kernel: tpu_custom_call.1
$region0: #{tpu_custom_call.1}
  #allocation0 [shape = 'u32[]', space=smem, size = 0x4, offset = 0x4, fixed_abs, tag = 'smem constant byte address 0x4 - core index']
  #allocation1 [shape = 'u32[144,128]{1,0:T(1,128)}', space=vmem, size = 0x12000, scoped, tag = 'internal scratch']
  %s0 = inlined_call_operand.vmem [shape: bf16[8,128,64], index: 0, kind: input, shape index: {}]
  %s1 = inlined_call_operand.vmem [shape: bf16[3,64,64], index: 1, kind: input, shape index: {}]
  %s2 = inlined_call_operand.vmem [shape: f32[1,64], index: 2, kind: input, shape index: {}]
  %s3 = inlined_call_operand.vmem [shape: bf16[8,128,64], index: 3, kind: output, shape index: {}]
  %s4 = sld [smem:[#allocation0]]
  $region22: #{tpu_custom_call.1} parent=0
    _
  %s6 = ssub.s32 1, %s4
  %s7 = scalar_select 0, %s6, %s4
  // Predicated region
  $region2: #{tpu_custom_call.1} parent=0 // pred_check
    _
  $region3: #{tpu_custom_call.1} parent=0 // pred_check_branch
    %9 = sbr.rel (0) target = $region5
  $region4: #{tpu_custom_call.1} parent=0 // pred_region
    _
  $region5: #{tpu_custom_call.1} parent=0 // pred_fallthru
    _
  // Predicated region
  $region6: #{tpu_custom_call.1} parent=0 // pred_check
    _
  $region7: #{tpu_custom_call.1} parent=0 // pred_check_branch
    %11 = sbr.rel (0) target = $region9
  $region8: #{tpu_custom_call.1} parent=0 // pred_region
    _
  $region9: #{tpu_custom_call.1} parent=0 // pred_fallthru
    _
  // Predicated region
  $region10: #{tpu_custom_call.1} parent=0 // pred_check
    _
  $region11: #{tpu_custom_call.1} parent=0 // pred_check_branch
    %13 = sbr.rel (0) target = $region13
  $region12: #{tpu_custom_call.1} parent=0 // pred_region
    _
  $region13: #{tpu_custom_call.1} parent=0 // pred_fallthru
    _
  %v15 = vld [vmem:[%s0] sm:$0xf]
  %v16 = vld [vmem:[%s0 + $0x4] sm:$0xf]
  %v17 = vld [vmem:[%s0 + $0x8] sm:$0xf]
  %v18 = vld [vmem:[%s0 + $0xc] sm:$0xf]
  %v19 = vld [vmem:[%s0 + $0x10] sm:$0xf]
  %v20 = vld [vmem:[%s0 + $0x14] sm:$0xf]
  %v21 = vld [vmem:[%s0 + $0x18] sm:$0xf]
  %v22 = vld [vmem:[%s0 + $0x1c] sm:$0xf]
  %v23 = vld [vmem:[%s0 + $0x20] sm:$0xf]
  %v24 = vld [vmem:[%s0 + $0x24] sm:$0xf]
  %v25 = vld [vmem:[%s0 + $0x28] sm:$0xf]
  %v26 = vld [vmem:[%s0 + $0x2c] sm:$0xf]
  %v27 = vld [vmem:[%s0 + $0x30] sm:$0xf]
  %v28 = vld [vmem:[%s0 + $0x34] sm:$0xf]
  %v29 = vld [vmem:[%s0 + $0x38] sm:$0xf]
  %v30 = vld [vmem:[%s0 + $0x3c] sm:$0xf]
  %v31 = vld [vmem:[%s0 + $0x40] sm:$0xf]
  %v32 = vld [vmem:[%s0 + $0x44] sm:$0xf]
  %v33 = vld [vmem:[%s0 + $0x48] sm:$0xf]
  %v34 = vld [vmem:[%s0 + $0x4c] sm:$0xf]
  %v35 = vld [vmem:[%s0 + $0x50] sm:$0xf]
  %v36 = vld [vmem:[%s0 + $0x54] sm:$0xf]
  %v37 = vld [vmem:[%s0 + $0x58] sm:$0xf]
  %v38 = vld [vmem:[%s0 + $0x5c] sm:$0xf]
  %v39 = vld [vmem:[%s0 + $0x60] sm:$0xf]
  %v40 = vld [vmem:[%s0 + $0x64] sm:$0xf]
  %v41 = vld [vmem:[%s0 + $0x68] sm:$0xf]
  %v42 = vld [vmem:[%s0 + $0x6c] sm:$0xf]
  %v43 = vld [vmem:[%s0 + $0x70] sm:$0xf]
  %v44 = vld [vmem:[%s0 + $0x74] sm:$0xf]
  %v45 = vld [vmem:[%s0 + $0x78] sm:$0xf]
  %v46 = vld [vmem:[%s0 + $0x7c] sm:$0xf]
  %v47 = vld [vmem:[%s0 + $0x80] sm:$0xf]
  %v48 = vld [vmem:[%s0 + $0x84] sm:$0xf]
  %v49 = vld [vmem:[%s0 + $0x88] sm:$0xf]
  %v50 = vld [vmem:[%s0 + $0x8c] sm:$0xf]
  %v51 = vld [vmem:[%s0 + $0x90] sm:$0xf]
  %v52 = vld [vmem:[%s0 + $0x94] sm:$0xf]
  %v53 = vld [vmem:[%s0 + $0x98] sm:$0xf]
  %v54 = vld [vmem:[%s0 + $0x9c] sm:$0xf]
  %v55 = vld [vmem:[%s0 + $0xa0] sm:$0xf]
  %v56 = vld [vmem:[%s0 + $0xa4] sm:$0xf]
  %v57 = vld [vmem:[%s0 + $0xa8] sm:$0xf]
  %v58 = vld [vmem:[%s0 + $0xac] sm:$0xf]
  %v59 = vld [vmem:[%s0 + $0xb0] sm:$0xf]
  %v60 = vld [vmem:[%s0 + $0xb4] sm:$0xf]
  %v61 = vld [vmem:[%s0 + $0xb8] sm:$0xf]
  %v62 = vld [vmem:[%s0 + $0xbc] sm:$0xf]
  %v63 = vld [vmem:[%s0 + $0xc0] sm:$0xf]
  %v64 = vld [vmem:[%s0 + $0xc4] sm:$0xf]
  %v65 = vld [vmem:[%s0 + $0xc8] sm:$0xf]
  %v66 = vld [vmem:[%s0 + $0xcc] sm:$0xf]
  %v67 = vld [vmem:[%s0 + $0xd0] sm:$0xf]
  %v68 = vld [vmem:[%s0 + $0xd4] sm:$0xf]
  %v69 = vld [vmem:[%s0 + $0xd8] sm:$0xf]
  %v70 = vld [vmem:[%s0 + $0xdc] sm:$0xf]
  %v71 = vld [vmem:[%s0 + $0xe0] sm:$0xf]
  %v72 = vld [vmem:[%s0 + $0xe4] sm:$0xf]
  %v73 = vld [vmem:[%s0 + $0xe8] sm:$0xf]
  %v74 = vld [vmem:[%s0 + $0xec] sm:$0xf]
  %v75 = vld [vmem:[%s0 + $0xf0] sm:$0xf]
  %v76 = vld [vmem:[%s0 + $0xf4] sm:$0xf]
  %v77 = vld [vmem:[%s0 + $0xf8] sm:$0xf]
  %v78 = vld [vmem:[%s0 + $0xfc] sm:$0xf]
  %v79 = vld [vmem:[%s0 + $0x100] sm:$0xf]
  %v80 = vld [vmem:[%s0 + $0x104] sm:$0xf]
  %v81 = vld [vmem:[%s0 + $0x108] sm:$0xf]
  %v82 = vld [vmem:[%s0 + $0x10c] sm:$0xf]
  %v83 = vld [vmem:[%s0 + $0x110] sm:$0xf]
  %v84 = vld [vmem:[%s0 + $0x114] sm:$0xf]
  %v85 = vld [vmem:[%s0 + $0x118] sm:$0xf]
  %v86 = vld [vmem:[%s0 + $0x11c] sm:$0xf]
  %v87 = vld [vmem:[%s0 + $0x120] sm:$0xf]
  %v88 = vld [vmem:[%s0 + $0x124] sm:$0xf]
  %v89 = vld [vmem:[%s0 + $0x128] sm:$0xf]
  %v90 = vld [vmem:[%s0 + $0x12c] sm:$0xf]
  %v91 = vld [vmem:[%s0 + $0x130] sm:$0xf]
  %v92 = vld [vmem:[%s0 + $0x134] sm:$0xf]
  %v93 = vld [vmem:[%s0 + $0x138] sm:$0xf]
  %v94 = vld [vmem:[%s0 + $0x13c] sm:$0xf]
  %v95 = vld [vmem:[%s0 + $0x140] sm:$0xf]
  %v96 = vld [vmem:[%s0 + $0x144] sm:$0xf]
  %v97 = vld [vmem:[%s0 + $0x148] sm:$0xf]
  %v98 = vld [vmem:[%s0 + $0x14c] sm:$0xf]
  %v99 = vld [vmem:[%s0 + $0x150] sm:$0xf]
  %v100 = vld [vmem:[%s0 + $0x154] sm:$0xf]
  %v101 = vld [vmem:[%s0 + $0x158] sm:$0xf]
  %v102 = vld [vmem:[%s0 + $0x15c] sm:$0xf]
  %v103 = vld [vmem:[%s0 + $0x160] sm:$0xf]
  %v104 = vld [vmem:[%s0 + $0x164] sm:$0xf]
  %v105 = vld [vmem:[%s0 + $0x168] sm:$0xf]
  %v106 = vld [vmem:[%s0 + $0x16c] sm:$0xf]
  %v107 = vld [vmem:[%s0 + $0x170] sm:$0xf]
  %v108 = vld [vmem:[%s0 + $0x174] sm:$0xf]
  %v109 = vld [vmem:[%s0 + $0x178] sm:$0xf]
  %v110 = vld [vmem:[%s0 + $0x17c] sm:$0xf]
  %v111 = vld [vmem:[%s0 + $0x180] sm:$0xf]
  %v112 = vld [vmem:[%s0 + $0x184] sm:$0xf]
  %v113 = vld [vmem:[%s0 + $0x188] sm:$0xf]
  %v114 = vld [vmem:[%s0 + $0x18c] sm:$0xf]
  %v115 = vld [vmem:[%s0 + $0x190] sm:$0xf]
  %v116 = vld [vmem:[%s0 + $0x194] sm:$0xf]
  %v117 = vld [vmem:[%s0 + $0x198] sm:$0xf]
  %v118 = vld [vmem:[%s0 + $0x19c] sm:$0xf]
  %v119 = vld [vmem:[%s0 + $0x1a0] sm:$0xf]
  %v120 = vld [vmem:[%s0 + $0x1a4] sm:$0xf]
  %v121 = vld [vmem:[%s0 + $0x1a8] sm:$0xf]
  %v122 = vld [vmem:[%s0 + $0x1ac] sm:$0xf]
  %v123 = vld [vmem:[%s0 + $0x1b0] sm:$0xf]
  %v124 = vld [vmem:[%s0 + $0x1b4] sm:$0xf]
  %v125 = vld [vmem:[%s0 + $0x1b8] sm:$0xf]
  %v126 = vld [vmem:[%s0 + $0x1bc] sm:$0xf]
  %v127 = vld [vmem:[%s0 + $0x1c0] sm:$0xf]
  %v128 = vld [vmem:[%s0 + $0x1c4] sm:$0xf]
  %v129 = vld [vmem:[%s0 + $0x1c8] sm:$0xf]
  %v130 = vld [vmem:[%s0 + $0x1cc] sm:$0xf]
  %v131 = vld [vmem:[%s0 + $0x1d0] sm:$0xf]
  %v132 = vld [vmem:[%s0 + $0x1d4] sm:$0xf]
  %v133 = vld [vmem:[%s0 + $0x1d8] sm:$0xf]
  %v134 = vld [vmem:[%s0 + $0x1dc] sm:$0xf]
  %v135 = vld [vmem:[%s0 + $0x1e0] sm:$0xf]
  %v136 = vld [vmem:[%s0 + $0x1e4] sm:$0xf]
  %v137 = vld [vmem:[%s0 + $0x1e8] sm:$0xf]
  %v138 = vld [vmem:[%s0 + $0x1ec] sm:$0xf]
  %v139 = vld [vmem:[%s0 + $0x1f0] sm:$0xf]
  %v140 = vld [vmem:[%s0 + $0x1f4] sm:$0xf]
  %v141 = vld [vmem:[%s0 + $0x1f8] sm:$0xf]
  %v142 = vld [vmem:[%s0 + $0x1fc] sm:$0xf]
  %v255 = vunpack.c.l.b16 %v15
  %v256 = vunpack.c.l.b16 %v16
  %v257 = vunpack.c.l.b16 %v17
  %v258 = vunpack.c.l.b16 %v18
  %v259 = vunpack.c.l.b16 %v19
  %v260 = vunpack.c.l.b16 %v20
  %v261 = vunpack.c.l.b16 %v21
  %v262 = vunpack.c.l.b16 %v22
  %v263 = vunpack.c.l.b16 %v23
  %v264 = vunpack.c.l.b16 %v24
  %v265 = vunpack.c.l.b16 %v25
  %v266 = vunpack.c.l.b16 %v26
  %v267 = vunpack.c.l.b16 %v27
  %v268 = vunpack.c.l.b16 %v28
  %v269 = vunpack.c.l.b16 %v29
  %v270 = vunpack.c.l.b16 %v30
  %v271 = vunpack.c.l.b16 %v31
  %v272 = vunpack.c.l.b16 %v32
  %v273 = vunpack.c.l.b16 %v33
  %v274 = vunpack.c.l.b16 %v34
  %v275 = vunpack.c.l.b16 %v35
  %v276 = vunpack.c.l.b16 %v36
  %v277 = vunpack.c.l.b16 %v37
  %v278 = vunpack.c.l.b16 %v38
  %v279 = vunpack.c.l.b16 %v39
  %v280 = vunpack.c.l.b16 %v40
  %v281 = vunpack.c.l.b16 %v41
  %v282 = vunpack.c.l.b16 %v42
  %v283 = vunpack.c.l.b16 %v43
  %v284 = vunpack.c.l.b16 %v44
  %v285 = vunpack.c.l.b16 %v45
  %v286 = vunpack.c.l.b16 %v46
  %v287 = vunpack.c.l.b16 %v47
  %v288 = vunpack.c.l.b16 %v48
  %v289 = vunpack.c.l.b16 %v49
  %v290 = vunpack.c.l.b16 %v50
  %v291 = vunpack.c.l.b16 %v51
  %v292 = vunpack.c.l.b16 %v52
  %v293 = vunpack.c.l.b16 %v53
  %v294 = vunpack.c.l.b16 %v54
  %v295 = vunpack.c.l.b16 %v55
  %v296 = vunpack.c.l.b16 %v56
  %v297 = vunpack.c.l.b16 %v57
  %v298 = vunpack.c.l.b16 %v58
  %v299 = vunpack.c.l.b16 %v59
  %v300 = vunpack.c.l.b16 %v60
  %v301 = vunpack.c.l.b16 %v61
  %v302 = vunpack.c.l.b16 %v62
  %v303 = vunpack.c.l.b16 %v63
  %v304 = vunpack.c.l.b16 %v64
  %v305 = vunpack.c.l.b16 %v65
  %v306 = vunpack.c.l.b16 %v66
  %v307 = vunpack.c.l.b16 %v67
  %v308 = vunpack.c.l.b16 %v68
  %v309 = vunpack.c.l.b16 %v69
  %v310 = vunpack.c.l.b16 %v70
  %v311 = vunpack.c.l.b16 %v71
  %v312 = vunpack.c.l.b16 %v72
  %v313 = vunpack.c.l.b16 %v73
  %v314 = vunpack.c.l.b16 %v74
  %v315 = vunpack.c.l.b16 %v75
  %v316 = vunpack.c.l.b16 %v76
  %v317 = vunpack.c.l.b16 %v77
  %v318 = vunpack.c.l.b16 %v78
  %v319 = vunpack.c.l.b16 %v79
  %v320 = vunpack.c.l.b16 %v80
  %v321 = vunpack.c.l.b16 %v81
  %v322 = vunpack.c.l.b16 %v82
  %v323 = vunpack.c.l.b16 %v83
  %v324 = vunpack.c.l.b16 %v84
  %v325 = vunpack.c.l.b16 %v85
  %v326 = vunpack.c.l.b16 %v86
  %v327 = vunpack.c.l.b16 %v87
  %v328 = vunpack.c.l.b16 %v88
  %v329 = vunpack.c.l.b16 %v89
  %v330 = vunpack.c.l.b16 %v90
  %v331 = vunpack.c.l.b16 %v91
  %v332 = vunpack.c.l.b16 %v92
  %v333 = vunpack.c.l.b16 %v93
  %v334 = vunpack.c.l.b16 %v94
  %v335 = vunpack.c.l.b16 %v95
  %v336 = vunpack.c.l.b16 %v96
  %v337 = vunpack.c.l.b16 %v97
  %v338 = vunpack.c.l.b16 %v98
  %v339 = vunpack.c.l.b16 %v99
  %v340 = vunpack.c.l.b16 %v100
  %v341 = vunpack.c.l.b16 %v101
  %v342 = vunpack.c.l.b16 %v102
  %v343 = vunpack.c.l.b16 %v103
  %v344 = vunpack.c.l.b16 %v104
  %v345 = vunpack.c.l.b16 %v105
  %v346 = vunpack.c.l.b16 %v106
  %v347 = vunpack.c.l.b16 %v107
  %v348 = vunpack.c.l.b16 %v108
  %v349 = vunpack.c.l.b16 %v109
  %v350 = vunpack.c.l.b16 %v110
  %v351 = vunpack.c.l.b16 %v111
  %v352 = vunpack.c.l.b16 %v112
  %v353 = vunpack.c.l.b16 %v113
  %v354 = vunpack.c.l.b16 %v114
  %v355 = vunpack.c.l.b16 %v115
  %v356 = vunpack.c.l.b16 %v116
  %v357 = vunpack.c.l.b16 %v117
  %v358 = vunpack.c.l.b16 %v118
  %v359 = vunpack.c.l.b16 %v119
  %v360 = vunpack.c.l.b16 %v120
  %v361 = vunpack.c.l.b16 %v121
  %v362 = vunpack.c.l.b16 %v122
  %v363 = vunpack.c.l.b16 %v123
  %v364 = vunpack.c.l.b16 %v124
  %v365 = vunpack.c.l.b16 %v125
  %v366 = vunpack.c.l.b16 %v126
  %v367 = vpack.c.b16 %v256, %v255
  %v368 = vpack.c.b16 %v258, %v257
  %v369 = vpack.c.b16 %v260, %v259
  %v370 = vpack.c.b16 %v262, %v261
  %v371 = vpack.c.b16 %v264, %v263
  %v372 = vpack.c.b16 %v266, %v265
  %v373 = vpack.c.b16 %v268, %v267
  %v374 = vpack.c.b16 %v270, %v269
  %v375 = vpack.c.b16 %v272, %v271
  %v376 = vpack.c.b16 %v274, %v273
  %v377 = vpack.c.b16 %v276, %v275
  %v378 = vpack.c.b16 %v278, %v277
  %v379 = vpack.c.b16 %v280, %v279
  %v380 = vpack.c.b16 %v282, %v281
  %v381 = vpack.c.b16 %v284, %v283
  %v382 = vpack.c.b16 %v286, %v285
  %v383 = vpack.c.b16 %v288, %v287
  %v384 = vpack.c.b16 %v290, %v289
  %v385 = vpack.c.b16 %v292, %v291
  %v386 = vpack.c.b16 %v294, %v293
  %v387 = vpack.c.b16 %v296, %v295
  %v388 = vpack.c.b16 %v298, %v297
  %v389 = vpack.c.b16 %v300, %v299
  %v390 = vpack.c.b16 %v302, %v301
  %v391 = vpack.c.b16 %v304, %v303
  %v392 = vpack.c.b16 %v306, %v305
  %v393 = vpack.c.b16 %v308, %v307
  %v394 = vpack.c.b16 %v310, %v309
  %v395 = vpack.c.b16 %v312, %v311
  %v396 = vpack.c.b16 %v314, %v313
  %v397 = vpack.c.b16 %v316, %v315
  %v398 = vpack.c.b16 %v318, %v317
  %v399 = vpack.c.b16 %v320, %v319
  %v400 = vpack.c.b16 %v322, %v321
  %v401 = vpack.c.b16 %v324, %v323
  %v402 = vpack.c.b16 %v326, %v325
  %v403 = vpack.c.b16 %v328, %v327
  %v404 = vpack.c.b16 %v330, %v329
  %v405 = vpack.c.b16 %v332, %v331
  %v406 = vpack.c.b16 %v334, %v333
  %v407 = vpack.c.b16 %v336, %v335
  %v408 = vpack.c.b16 %v338, %v337
  %v409 = vpack.c.b16 %v340, %v339
  %v410 = vpack.c.b16 %v342, %v341
  %v411 = vpack.c.b16 %v344, %v343
  %v412 = vpack.c.b16 %v346, %v345
  %v413 = vpack.c.b16 %v348, %v347
  %v414 = vpack.c.b16 %v350, %v349
  %v415 = vpack.c.b16 %v352, %v351
  %v416 = vpack.c.b16 %v354, %v353
  %v417 = vpack.c.b16 %v356, %v355
  %v418 = vpack.c.b16 %v358, %v357
  %v419 = vpack.c.b16 %v360, %v359
  %v420 = vpack.c.b16 %v362, %v361
  %v421 = vpack.c.b16 %v364, %v363
  %v422 = vpack.c.b16 %v366, %v365
  %v423 = vld [vmem:[%s1] sm:$0xf]
  %v424 = vld [vmem:[%s1 + $0x4] sm:$0xf]
  %v425 = vld [vmem:[%s1 + $0x8] sm:$0xf]
  %v426 = vld [vmem:[%s1 + $0xc] sm:$0xf]
  %v427 = vld [vmem:[%s1 + $0x10] sm:$0xf]
  %v428 = vld [vmem:[%s1 + $0x14] sm:$0xf]
  %v429 = vld [vmem:[%s1 + $0x18] sm:$0xf]
  %v430 = vld [vmem:[%s1 + $0x1c] sm:$0xf]
  %s431 = scalar_lea.vmem %s1, 32
  %v432 = vld [vmem:[%s431] sm:$0xf]
  %v433 = vld [vmem:[%s431 + $0x4] sm:$0xf]
  %v434 = vld [vmem:[%s431 + $0x8] sm:$0xf]
  %v435 = vld [vmem:[%s431 + $0xc] sm:$0xf]
  %v436 = vld [vmem:[%s431 + $0x10] sm:$0xf]
  %v437 = vld [vmem:[%s431 + $0x14] sm:$0xf]
  %v438 = vld [vmem:[%s431 + $0x18] sm:$0xf]
  %v439 = vld [vmem:[%s431 + $0x1c] sm:$0xf]
  %v456 = vunpack.c.l.b16 %v127
  %v457 = vunpack.c.l.b16 %v128
  %v458 = vunpack.c.l.b16 %v129
  %v459 = vunpack.c.l.b16 %v130
  %v460 = vunpack.c.l.b16 %v131
  %v461 = vunpack.c.l.b16 %v132
  %v462 = vunpack.c.l.b16 %v133
  %v463 = vunpack.c.l.b16 %v134
  %v464 = vunpack.c.l.b16 %v135
  %v465 = vunpack.c.l.b16 %v136
  %v466 = vunpack.c.l.b16 %v137
  %v467 = vunpack.c.l.b16 %v138
  %v468 = vunpack.c.l.b16 %v139
  %v469 = vunpack.c.l.b16 %v140
  %v470 = vunpack.c.l.b16 %v141
  %v471 = vunpack.c.l.b16 %v142
  %v472 = vpack.c.b16 %v457, %v456
  %v473 = vpack.c.b16 %v459, %v458
  %v474 = vpack.c.b16 %v461, %v460
  %v475 = vpack.c.b16 %v463, %v462
  %v476 = vpack.c.b16 %v465, %v464
  %v477 = vpack.c.b16 %v467, %v466
  %v478 = vpack.c.b16 %v469, %v468
  %v479 = vpack.c.b16 %v471, %v470
  %v488 = vunpack.c.l.b16 %v432
  %v489 = vunpack.c.l.b16 %v433
  %v490 = vunpack.c.l.b16 %v434
  %v491 = vunpack.c.l.b16 %v435
  %v492 = vunpack.c.l.b16 %v436
  %v493 = vunpack.c.l.b16 %v437
  %v494 = vunpack.c.l.b16 %v438
  %v495 = vunpack.c.l.b16 %v439
  %v496 = vpack.c.b16 %v489, %v488
  %v497 = vpack.c.b16 %v491, %v490
  %v498 = vpack.c.b16 %v493, %v492
  %v499 = vpack.c.b16 %v495, %v494
  %vm504 = vcmask 523264
  %v506 = vsel %vm504, %v367, 0
  %v509 = vsel %vm504, %v368, 0
  %v512 = vsel %vm504, %v369, 0
  %v515 = vsel %vm504, %v370, 0
  %v518 = vsel %vm504, %v371, 0
  %v521 = vsel %vm504, %v372, 0
  %v524 = vsel %vm504, %v373, 0
  %v527 = vsel %vm504, %v374, 0
  %v530 = vsel %vm504, %v375, 0
  %v533 = vsel %vm504, %v376, 0
  %v536 = vsel %vm504, %v377, 0
  %v539 = vsel %vm504, %v378, 0
  %v542 = vsel %vm504, %v379, 0
  %v545 = vsel %vm504, %v380, 0
  %v548 = vsel %vm504, %v381, 0
  %v551 = vsel %vm504, %v382, 0
  %v554 = vsel %vm504, %v383, 0
  %v557 = vsel %vm504, %v384, 0
  %v560 = vsel %vm504, %v385, 0
  %v563 = vsel %vm504, %v386, 0
  %v566 = vsel %vm504, %v387, 0
  %v569 = vsel %vm504, %v388, 0
  %v572 = vsel %vm504, %v389, 0
  %v575 = vsel %vm504, %v390, 0
  %v578 = vsel %vm504, %v391, 0
  %v581 = vsel %vm504, %v392, 0
  %v584 = vsel %vm504, %v393, 0
  %v587 = vsel %vm504, %v394, 0
  %v590 = vsel %vm504, %v395, 0
  %v593 = vsel %vm504, %v396, 0
  %v596 = vsel %vm504, %v397, 0
  %v599 = vsel %vm504, %v398, 0
  %v602 = vsel %vm504, %v399, 0
  %v605 = vsel %vm504, %v400, 0
  %v608 = vsel %vm504, %v401, 0
  %v611 = vsel %vm504, %v402, 0
  %v614 = vsel %vm504, %v403, 0
  %v617 = vsel %vm504, %v404, 0
  %v620 = vsel %vm504, %v405, 0
  %v623 = vsel %vm504, %v406, 0
  %v626 = vsel %vm504, %v407, 0
  %v629 = vsel %vm504, %v408, 0
  %v632 = vsel %vm504, %v409, 0
  %v635 = vsel %vm504, %v410, 0
  %v638 = vsel %vm504, %v411, 0
  %v641 = vsel %vm504, %v412, 0
  %v644 = vsel %vm504, %v413, 0
  %v647 = vsel %vm504, %v414, 0
  %v650 = vsel %vm504, %v415, 0
  %v653 = vsel %vm504, %v416, 0
  %v656 = vsel %vm504, %v417, 0
  %v659 = vsel %vm504, %v418, 0
  %v662 = vsel %vm504, %v419, 0
  %v665 = vsel %vm504, %v420, 0
  %v668 = vsel %vm504, %v421, 0
  %v671 = vsel %vm504, %v422, 0
  %v674 = vsel %vm504, %v472, 0
  %v677 = vsel %vm504, %v473, 0
  %v680 = vsel %vm504, %v474, 0
  %v683 = vsel %vm504, %v475, 0
  %v686 = vsel %vm504, %v476, 0
  %v689 = vsel %vm504, %v477, 0
  %v692 = vsel %vm504, %v478, 0
  %v695 = vsel %vm504, %v479, 0
  %697 = vmatprep.subr.bf16.mxu0 0
  %698 = vmatpush1.bf16.msra.mxu0 0
  %699 = vmatprep.subr.bf16.mxu0 0
  %700 = vmatpush1.bf16.msra.mxu0 0
  %701 = vmatprep.subr.bf16.mxu0 0
  %702 = vmatpush1.bf16.msra.mxu0 0
  %703 = vmatprep.subr.bf16.mxu0 0
  %704 = vmatpush1.bf16.msra.mxu0 0
  %705 = vmatprep.subr.bf16.mxu0 0
  %706 = vmatpush1.bf16.msra.mxu0 %v499
  %707 = vmatprep.subr.bf16.mxu0 0
  %708 = vmatpush1.bf16.msra.mxu0 %v498
  %709 = vmatprep.subr.bf16.mxu0 0
  %710 = vmatpush1.bf16.msra.mxu0 %v497
  %711 = vmatprep.subr.bf16.mxu0 0
  %712 = vmatpush1.bf16.msra.mxu0 %v496
  %713 = vmatprep.subr.bf16.mxu0 0
  %714 = vmatpush2.bf16.msra.mxu0 0
  %715 = vmatprep.subr.bf16.mxu0 0
  %716 = vmatpush2.bf16.msra.mxu0 0
  %717 = vmatprep.subr.bf16.mxu0 0
  %718 = vmatpush2.bf16.msra.mxu0 0
  %719 = vmatprep.subr.bf16.mxu0 0
  %720 = vmatpush2.bf16.msra.mxu0 0
  %721 = vmatprep.subr.bf16.mxu0 0
  %722 = vmatpush2.bf16.msra.mxu0 0
  %723 = vmatprep.subr.bf16.mxu0 0
  %724 = vmatpush2.bf16.msra.mxu0 0
  %725 = vmatprep.subr.bf16.mxu0 0
  %726 = vmatpush2.bf16.msra.mxu0 0
  %727 = vmatprep.subr.bf16.mxu0 0
  %728 = vmatpush2.bf16.msra.mxu0 0
  %729 = vmatprep.mubr.bf16.mxu0 0
  %730 = vmatmul.mubr.bf16.gmra.mxu0 %v506
  %v731 = vpop.f32.mrf.mxu0
  %v732 = vadd.f32 0.0, %v731
  %v733 = vpop.f32.mrf.mxu0
  %v734 = vpop.f32.mrf.mxu0
  %v735 = vadd.f32 0.0, %v734
  %v736 = vpop.f32.mrf.mxu0
  %737 = vmatprep.mubr.bf16.mxu0 0
  %738 = vmatmul.mubr.bf16.gmra.mxu0 %v509
  %v739 = vpop.f32.mrf.mxu0
  %v740 = vadd.f32 0.0, %v739
  %v741 = vpop.f32.mrf.mxu0
  %v742 = vpop.f32.mrf.mxu0
  %v743 = vadd.f32 0.0, %v742
  %v744 = vpop.f32.mrf.mxu0
  %745 = vmatprep.mubr.bf16.mxu0 0
  %746 = vmatmul.mubr.bf16.gmra.mxu0 %v512
  %v747 = vpop.f32.mrf.mxu0
  %v748 = vadd.f32 0.0, %v747
  %v749 = vpop.f32.mrf.mxu0
  %v750 = vpop.f32.mrf.mxu0
  %v751 = vadd.f32 0.0, %v750
  %v752 = vpop.f32.mrf.mxu0
  %753 = vmatprep.mubr.bf16.mxu0 0
  %754 = vmatmul.mubr.bf16.gmra.mxu0 %v515
  %v755 = vpop.f32.mrf.mxu0
  %v756 = vadd.f32 0.0, %v755
  %v757 = vpop.f32.mrf.mxu0
  %v758 = vpop.f32.mrf.mxu0
  %v759 = vadd.f32 0.0, %v758
  %v760 = vpop.f32.mrf.mxu0
  %761 = vmatprep.mubr.bf16.mxu0 0
  %762 = vmatmul.mubr.bf16.gmra.mxu0 %v518
  %v763 = vpop.f32.mrf.mxu0
  %v764 = vadd.f32 0.0, %v763
  %v765 = vpop.f32.mrf.mxu0
  %v766 = vpop.f32.mrf.mxu0
  %v767 = vadd.f32 0.0, %v766
  %v768 = vpop.f32.mrf.mxu0
  %769 = vmatprep.mubr.bf16.mxu0 0
  %770 = vmatmul.mubr.bf16.gmra.mxu0 %v521
  %v771 = vpop.f32.mrf.mxu0
  %v772 = vadd.f32 0.0, %v771
  %v773 = vpop.f32.mrf.mxu0
  %v774 = vpop.f32.mrf.mxu0
  %v775 = vadd.f32 0.0, %v774
  %v776 = vpop.f32.mrf.mxu0
  %777 = vmatprep.mubr.bf16.mxu0 0
  %778 = vmatmul.mubr.bf16.gmra.mxu0 %v524
  %v779 = vpop.f32.mrf.mxu0
  %v780 = vadd.f32 0.0, %v779
  %v781 = vpop.f32.mrf.mxu0
  %v782 = vpop.f32.mrf.mxu0
  %v783 = vadd.f32 0.0, %v782
  %v784 = vpop.f32.mrf.mxu0
  %785 = vmatprep.mubr.bf16.mxu0 0
  %786 = vmatmul.mubr.bf16.gmra.mxu0 %v527
  %v787 = vpop.f32.mrf.mxu0
  %v788 = vadd.f32 0.0, %v787
  %v789 = vpop.f32.mrf.mxu0
  %v790 = vpop.f32.mrf.mxu0
  %v791 = vadd.f32 0.0, %v790
  %v792 = vpop.f32.mrf.mxu0
  %793 = vmatprep.mubr.bf16.mxu0 0
  %794 = vmatmul.mubr.bf16.gmra.mxu0 %v530
  %v795 = vpop.f32.mrf.mxu0
  %v796 = vadd.f32 0.0, %v795
  %v797 = vpop.f32.mrf.mxu0
  %v798 = vpop.f32.mrf.mxu0
  %v799 = vadd.f32 0.0, %v798
  %v800 = vpop.f32.mrf.mxu0
  %801 = vmatprep.mubr.bf16.mxu0 0
  %802 = vmatmul.mubr.bf16.gmra.mxu0 %v533
  %v803 = vpop.f32.mrf.mxu0
  %v804 = vadd.f32 0.0, %v803
  %v805 = vpop.f32.mrf.mxu0
  %v806 = vpop.f32.mrf.mxu0
  %v807 = vadd.f32 0.0, %v806
  %v808 = vpop.f32.mrf.mxu0
  %809 = vmatprep.mubr.bf16.mxu0 0
  %810 = vmatmul.mubr.bf16.gmra.mxu0 %v536
  %v811 = vpop.f32.mrf.mxu0
  %v812 = vadd.f32 0.0, %v811
  %v813 = vpop.f32.mrf.mxu0
  %v814 = vpop.f32.mrf.mxu0
  %v815 = vadd.f32 0.0, %v814
  %v816 = vpop.f32.mrf.mxu0
  %817 = vmatprep.mubr.bf16.mxu0 0
  %818 = vmatmul.mubr.bf16.gmra.mxu0 %v539
  %v819 = vpop.f32.mrf.mxu0
  %v820 = vadd.f32 0.0, %v819
  %v821 = vpop.f32.mrf.mxu0
  %v822 = vpop.f32.mrf.mxu0
  %v823 = vadd.f32 0.0, %v822
  %v824 = vpop.f32.mrf.mxu0
  %825 = vmatprep.mubr.bf16.mxu0 0
  %826 = vmatmul.mubr.bf16.gmra.mxu0 %v542
  %v827 = vpop.f32.mrf.mxu0
  %v828 = vadd.f32 0.0, %v827
  %v829 = vpop.f32.mrf.mxu0
  %v830 = vpop.f32.mrf.mxu0
  %v831 = vadd.f32 0.0, %v830
  %v832 = vpop.f32.mrf.mxu0
  %833 = vmatprep.mubr.bf16.mxu0 0
  %834 = vmatmul.mubr.bf16.gmra.mxu0 %v545
  %v835 = vpop.f32.mrf.mxu0
  %v836 = vadd.f32 0.0, %v835
  %v837 = vpop.f32.mrf.mxu0
  %v838 = vpop.f32.mrf.mxu0
  %v839 = vadd.f32 0.0, %v838
  %v840 = vpop.f32.mrf.mxu0
  %841 = vmatprep.mubr.bf16.mxu0 0
  %842 = vmatmul.mubr.bf16.gmra.mxu0 %v548
  %v843 = vpop.f32.mrf.mxu0
  %v844 = vadd.f32 0.0, %v843
  %v845 = vpop.f32.mrf.mxu0
  %v846 = vpop.f32.mrf.mxu0
  %v847 = vadd.f32 0.0, %v846
  %v848 = vpop.f32.mrf.mxu0
  %849 = vmatprep.mubr.bf16.mxu0 0
  %850 = vmatmul.mubr.bf16.gmra.mxu0 %v551
  %v851 = vpop.f32.mrf.mxu0
  %v852 = vadd.f32 0.0, %v851
  %v853 = vpop.f32.mrf.mxu0
  %v854 = vpop.f32.mrf.mxu0
  %v855 = vadd.f32 0.0, %v854
  %v856 = vpop.f32.mrf.mxu0
  %857 = vmatprep.mubr.bf16.mxu0 0
  %858 = vmatmul.mubr.bf16.gmra.mxu0 %v554
  %v859 = vpop.f32.mrf.mxu0
  %v860 = vadd.f32 0.0, %v859
  %v861 = vpop.f32.mrf.mxu0
  %v862 = vpop.f32.mrf.mxu0
  %v863 = vadd.f32 0.0, %v862
  %v864 = vpop.f32.mrf.mxu0
  %865 = vmatprep.mubr.bf16.mxu0 0
  %866 = vmatmul.mubr.bf16.gmra.mxu0 %v557
  %v867 = vpop.f32.mrf.mxu0
  %v868 = vadd.f32 0.0, %v867
  %v869 = vpop.f32.mrf.mxu0
  %v870 = vpop.f32.mrf.mxu0
  %v871 = vadd.f32 0.0, %v870
  %v872 = vpop.f32.mrf.mxu0
  %873 = vmatprep.mubr.bf16.mxu0 0
  %874 = vmatmul.mubr.bf16.gmra.mxu0 %v560
  %v875 = vpop.f32.mrf.mxu0
  %v876 = vadd.f32 0.0, %v875
  %v877 = vpop.f32.mrf.mxu0
  %v878 = vpop.f32.mrf.mxu0
  %v879 = vadd.f32 0.0, %v878
  %v880 = vpop.f32.mrf.mxu0
  %881 = vmatprep.mubr.bf16.mxu0 0
  %882 = vmatmul.mubr.bf16.gmra.mxu0 %v563
  %v883 = vpop.f32.mrf.mxu0
  %v884 = vadd.f32 0.0, %v883
  %v885 = vpop.f32.mrf.mxu0
  %v886 = vpop.f32.mrf.mxu0
  %v887 = vadd.f32 0.0, %v886
  %v888 = vpop.f32.mrf.mxu0
  %889 = vmatprep.mubr.bf16.mxu0 0
  %890 = vmatmul.mubr.bf16.gmra.mxu0 %v566
  %v891 = vpop.f32.mrf.mxu0
  %v892 = vadd.f32 0.0, %v891
  %v893 = vpop.f32.mrf.mxu0
  %v894 = vpop.f32.mrf.mxu0
  %v895 = vadd.f32 0.0, %v894
  %v896 = vpop.f32.mrf.mxu0
  %897 = vmatprep.mubr.bf16.mxu0 0
  %898 = vmatmul.mubr.bf16.gmra.mxu0 %v569
  %v899 = vpop.f32.mrf.mxu0
  %v900 = vadd.f32 0.0, %v899
  %v901 = vpop.f32.mrf.mxu0
  %v902 = vpop.f32.mrf.mxu0
  %v903 = vadd.f32 0.0, %v902
  %v904 = vpop.f32.mrf.mxu0
  %905 = vmatprep.mubr.bf16.mxu0 0
  %906 = vmatmul.mubr.bf16.gmra.mxu0 %v572
  %v907 = vpop.f32.mrf.mxu0
  %v908 = vadd.f32 0.0, %v907
  %v909 = vpop.f32.mrf.mxu0
  %v910 = vpop.f32.mrf.mxu0
  %v911 = vadd.f32 0.0, %v910
  %v912 = vpop.f32.mrf.mxu0
  %913 = vmatprep.mubr.bf16.mxu0 0
  %914 = vmatmul.mubr.bf16.gmra.mxu0 %v575
  %v915 = vpop.f32.mrf.mxu0
  %v916 = vadd.f32 0.0, %v915
  %v917 = vpop.f32.mrf.mxu0
  %v918 = vpop.f32.mrf.mxu0
  %v919 = vadd.f32 0.0, %v918
  %v920 = vpop.f32.mrf.mxu0
  %921 = vmatprep.mubr.bf16.mxu0 0
  %922 = vmatmul.mubr.bf16.gmra.mxu0 %v578
  %v923 = vpop.f32.mrf.mxu0
  %v924 = vadd.f32 0.0, %v923
  %v925 = vpop.f32.mrf.mxu0
  %v926 = vpop.f32.mrf.mxu0
  %v927 = vadd.f32 0.0, %v926
  %v928 = vpop.f32.mrf.mxu0
  %929 = vmatprep.mubr.bf16.mxu0 0
  %930 = vmatmul.mubr.bf16.gmra.mxu0 %v581
  %v931 = vpop.f32.mrf.mxu0
  %v932 = vadd.f32 0.0, %v931
  %v933 = vpop.f32.mrf.mxu0
  %v934 = vpop.f32.mrf.mxu0
  %v935 = vadd.f32 0.0, %v934
  %v936 = vpop.f32.mrf.mxu0
  %937 = vmatprep.mubr.bf16.mxu0 0
  %938 = vmatmul.mubr.bf16.gmra.mxu0 %v584
  %v939 = vpop.f32.mrf.mxu0
  %v940 = vadd.f32 0.0, %v939
  %v941 = vpop.f32.mrf.mxu0
  %v942 = vpop.f32.mrf.mxu0
  %v943 = vadd.f32 0.0, %v942
  %v944 = vpop.f32.mrf.mxu0
  %945 = vmatprep.mubr.bf16.mxu0 0
  %946 = vmatmul.mubr.bf16.gmra.mxu0 %v587
  %v947 = vpop.f32.mrf.mxu0
  %v948 = vadd.f32 0.0, %v947
  %v949 = vpop.f32.mrf.mxu0
  %v950 = vpop.f32.mrf.mxu0
  %v951 = vadd.f32 0.0, %v950
  %v952 = vpop.f32.mrf.mxu0
  %953 = vmatprep.mubr.bf16.mxu0 0
  %954 = vmatmul.mubr.bf16.gmra.mxu0 %v590
  %v955 = vpop.f32.mrf.mxu0
  %v956 = vadd.f32 0.0, %v955
  %v957 = vpop.f32.mrf.mxu0
  %v958 = vpop.f32.mrf.mxu0
  %v959 = vadd.f32 0.0, %v958
  %v960 = vpop.f32.mrf.mxu0
  %961 = vmatprep.mubr.bf16.mxu0 0
  %962 = vmatmul.mubr.bf16.gmra.mxu0 %v593
  %v963 = vpop.f32.mrf.mxu0
  %v964 = vadd.f32 0.0, %v963
  %v965 = vpop.f32.mrf.mxu0
  %v966 = vpop.f32.mrf.mxu0
  %v967 = vadd.f32 0.0, %v966
  %v968 = vpop.f32.mrf.mxu0
  %969 = vmatprep.mubr.bf16.mxu0 0
  %970 = vmatmul.mubr.bf16.gmra.mxu0 %v596
  %v971 = vpop.f32.mrf.mxu0
  %v972 = vadd.f32 0.0, %v971
  %v973 = vpop.f32.mrf.mxu0
  %v974 = vpop.f32.mrf.mxu0
  %v975 = vadd.f32 0.0, %v974
  %v976 = vpop.f32.mrf.mxu0
  %977 = vmatprep.mubr.bf16.mxu0 0
  %978 = vmatmul.mubr.bf16.gmra.mxu0 %v599
  %v979 = vpop.f32.mrf.mxu0
  %v980 = vadd.f32 0.0, %v979
  %v981 = vpop.f32.mrf.mxu0
  %v982 = vpop.f32.mrf.mxu0
  %v983 = vadd.f32 0.0, %v982
  %v984 = vpop.f32.mrf.mxu0
  %985 = vmatprep.mubr.bf16.mxu0 0
  %986 = vmatmul.mubr.bf16.gmra.mxu0 %v602
  %v987 = vpop.f32.mrf.mxu0
  %v988 = vadd.f32 0.0, %v987
  %v989 = vpop.f32.mrf.mxu0
  %v990 = vpop.f32.mrf.mxu0
  %v991 = vadd.f32 0.0, %v990
  %v992 = vpop.f32.mrf.mxu0
  %993 = vmatprep.mubr.bf16.mxu0 0
  %994 = vmatmul.mubr.bf16.gmra.mxu0 %v605
  %v995 = vpop.f32.mrf.mxu0
  %v996 = vadd.f32 0.0, %v995
  %v997 = vpop.f32.mrf.mxu0
  %v998 = vpop.f32.mrf.mxu0
  %v999 = vadd.f32 0.0, %v998
  %v1000 = vpop.f32.mrf.mxu0
  %1001 = vmatprep.mubr.bf16.mxu0 0
  %1002 = vmatmul.mubr.bf16.gmra.mxu0 %v608
  %v1003 = vpop.f32.mrf.mxu0
  %v1004 = vadd.f32 0.0, %v1003
  %v1005 = vpop.f32.mrf.mxu0
  %v1006 = vpop.f32.mrf.mxu0
  %v1007 = vadd.f32 0.0, %v1006
  %v1008 = vpop.f32.mrf.mxu0
  %1009 = vmatprep.mubr.bf16.mxu0 0
  %1010 = vmatmul.mubr.bf16.gmra.mxu0 %v611
  %v1011 = vpop.f32.mrf.mxu0
  %v1012 = vadd.f32 0.0, %v1011
  %v1013 = vpop.f32.mrf.mxu0
  %v1014 = vpop.f32.mrf.mxu0
  %v1015 = vadd.f32 0.0, %v1014
  %v1016 = vpop.f32.mrf.mxu0
  %1017 = vmatprep.mubr.bf16.mxu0 0
  %1018 = vmatmul.mubr.bf16.gmra.mxu0 %v614
  %v1019 = vpop.f32.mrf.mxu0
  %v1020 = vadd.f32 0.0, %v1019
  %v1021 = vpop.f32.mrf.mxu0
  %v1022 = vpop.f32.mrf.mxu0
  %v1023 = vadd.f32 0.0, %v1022
  %v1024 = vpop.f32.mrf.mxu0
  %1025 = vmatprep.mubr.bf16.mxu0 0
  %1026 = vmatmul.mubr.bf16.gmra.mxu0 %v617
  %v1027 = vpop.f32.mrf.mxu0
  %v1028 = vadd.f32 0.0, %v1027
  %v1029 = vpop.f32.mrf.mxu0
  %v1030 = vpop.f32.mrf.mxu0
  %v1031 = vadd.f32 0.0, %v1030
  %v1032 = vpop.f32.mrf.mxu0
  %1033 = vmatprep.mubr.bf16.mxu0 0
  %1034 = vmatmul.mubr.bf16.gmra.mxu0 %v620
  %v1035 = vpop.f32.mrf.mxu0
  %v1036 = vadd.f32 0.0, %v1035
  %v1037 = vpop.f32.mrf.mxu0
  %v1038 = vpop.f32.mrf.mxu0
  %v1039 = vadd.f32 0.0, %v1038
  %v1040 = vpop.f32.mrf.mxu0
  %1041 = vmatprep.mubr.bf16.mxu0 0
  %1042 = vmatmul.mubr.bf16.gmra.mxu0 %v623
  %v1043 = vpop.f32.mrf.mxu0
  %v1044 = vadd.f32 0.0, %v1043
  %v1045 = vpop.f32.mrf.mxu0
  %v1046 = vpop.f32.mrf.mxu0
  %v1047 = vadd.f32 0.0, %v1046
  %v1048 = vpop.f32.mrf.mxu0
  %1049 = vmatprep.mubr.bf16.mxu0 0
  %1050 = vmatmul.mubr.bf16.gmra.mxu0 %v626
  %v1051 = vpop.f32.mrf.mxu0
  %v1052 = vadd.f32 0.0, %v1051
  %v1053 = vpop.f32.mrf.mxu0
  %v1054 = vpop.f32.mrf.mxu0
  %v1055 = vadd.f32 0.0, %v1054
  %v1056 = vpop.f32.mrf.mxu0
  %1057 = vmatprep.mubr.bf16.mxu0 0
  %1058 = vmatmul.mubr.bf16.gmra.mxu0 %v629
  %v1059 = vpop.f32.mrf.mxu0
  %v1060 = vadd.f32 0.0, %v1059
  %v1061 = vpop.f32.mrf.mxu0
  %v1062 = vpop.f32.mrf.mxu0
  %v1063 = vadd.f32 0.0, %v1062
  %v1064 = vpop.f32.mrf.mxu0
  %1065 = vmatprep.mubr.bf16.mxu0 0
  %1066 = vmatmul.mubr.bf16.gmra.mxu0 %v632
  %v1067 = vpop.f32.mrf.mxu0
  %v1068 = vadd.f32 0.0, %v1067
  %v1069 = vpop.f32.mrf.mxu0
  %v1070 = vpop.f32.mrf.mxu0
  %v1071 = vadd.f32 0.0, %v1070
  %v1072 = vpop.f32.mrf.mxu0
  %1073 = vmatprep.mubr.bf16.mxu0 0
  %1074 = vmatmul.mubr.bf16.gmra.mxu0 %v635
  %v1075 = vpop.f32.mrf.mxu0
  %v1076 = vadd.f32 0.0, %v1075
  %v1077 = vpop.f32.mrf.mxu0
  %v1078 = vpop.f32.mrf.mxu0
  %v1079 = vadd.f32 0.0, %v1078
  %v1080 = vpop.f32.mrf.mxu0
  %1081 = vmatprep.mubr.bf16.mxu0 0
  %1082 = vmatmul.mubr.bf16.gmra.mxu0 %v638
  %v1083 = vpop.f32.mrf.mxu0
  %v1084 = vadd.f32 0.0, %v1083
  %v1085 = vpop.f32.mrf.mxu0
  %v1086 = vpop.f32.mrf.mxu0
  %v1087 = vadd.f32 0.0, %v1086
  %v1088 = vpop.f32.mrf.mxu0
  %1089 = vmatprep.mubr.bf16.mxu0 0
  %1090 = vmatmul.mubr.bf16.gmra.mxu0 %v641
  %v1091 = vpop.f32.mrf.mxu0
  %v1092 = vadd.f32 0.0, %v1091
  %v1093 = vpop.f32.mrf.mxu0
  %v1094 = vpop.f32.mrf.mxu0
  %v1095 = vadd.f32 0.0, %v1094
  %v1096 = vpop.f32.mrf.mxu0
  %1097 = vmatprep.mubr.bf16.mxu0 0
  %1098 = vmatmul.mubr.bf16.gmra.mxu0 %v644
  %v1099 = vpop.f32.mrf.mxu0
  %v1100 = vadd.f32 0.0, %v1099
  %v1101 = vpop.f32.mrf.mxu0
  %v1102 = vpop.f32.mrf.mxu0
  %v1103 = vadd.f32 0.0, %v1102
  %v1104 = vpop.f32.mrf.mxu0
  %1105 = vmatprep.mubr.bf16.mxu0 0
  %1106 = vmatmul.mubr.bf16.gmra.mxu0 %v647
  %v1107 = vpop.f32.mrf.mxu0
  %v1108 = vadd.f32 0.0, %v1107
  %v1109 = vpop.f32.mrf.mxu0
  %v1110 = vpop.f32.mrf.mxu0
  %v1111 = vadd.f32 0.0, %v1110
  %v1112 = vpop.f32.mrf.mxu0
  %1113 = vmatprep.mubr.bf16.mxu0 0
  %1114 = vmatmul.mubr.bf16.gmra.mxu0 %v650
  %v1115 = vpop.f32.mrf.mxu0
  %v1116 = vadd.f32 0.0, %v1115
  %v1117 = vpop.f32.mrf.mxu0
  %v1118 = vpop.f32.mrf.mxu0
  %v1119 = vadd.f32 0.0, %v1118
  %v1120 = vpop.f32.mrf.mxu0
  %1121 = vmatprep.mubr.bf16.mxu0 0
  %1122 = vmatmul.mubr.bf16.gmra.mxu0 %v653
  %v1123 = vpop.f32.mrf.mxu0
  %v1124 = vadd.f32 0.0, %v1123
  %v1125 = vpop.f32.mrf.mxu0
  %v1126 = vpop.f32.mrf.mxu0
  %v1127 = vadd.f32 0.0, %v1126
  %v1128 = vpop.f32.mrf.mxu0
  %1129 = vmatprep.mubr.bf16.mxu0 0
  %1130 = vmatmul.mubr.bf16.gmra.mxu0 %v656
  %v1131 = vpop.f32.mrf.mxu0
  %v1132 = vadd.f32 0.0, %v1131
  %v1133 = vpop.f32.mrf.mxu0
  %v1134 = vpop.f32.mrf.mxu0
  %v1135 = vadd.f32 0.0, %v1134
  %v1136 = vpop.f32.mrf.mxu0
  %1137 = vmatprep.mubr.bf16.mxu0 0
  %1138 = vmatmul.mubr.bf16.gmra.mxu0 %v659
  %v1139 = vpop.f32.mrf.mxu0
  %v1140 = vadd.f32 0.0, %v1139
  %v1141 = vpop.f32.mrf.mxu0
  %v1142 = vpop.f32.mrf.mxu0
  %v1143 = vadd.f32 0.0, %v1142
  %v1144 = vpop.f32.mrf.mxu0
  %1145 = vmatprep.mubr.bf16.mxu0 0
  %1146 = vmatmul.mubr.bf16.gmra.mxu0 %v662
  %v1147 = vpop.f32.mrf.mxu0
  %v1148 = vadd.f32 0.0, %v1147
  %v1149 = vpop.f32.mrf.mxu0
  %v1150 = vpop.f32.mrf.mxu0
  %v1151 = vadd.f32 0.0, %v1150
  %v1152 = vpop.f32.mrf.mxu0
  %1153 = vmatprep.mubr.bf16.mxu0 0
  %1154 = vmatmul.mubr.bf16.gmra.mxu0 %v665
  %v1155 = vpop.f32.mrf.mxu0
  %v1156 = vadd.f32 0.0, %v1155
  %v1157 = vpop.f32.mrf.mxu0
  %v1158 = vpop.f32.mrf.mxu0
  %v1159 = vadd.f32 0.0, %v1158
  %v1160 = vpop.f32.mrf.mxu0
  %1161 = vmatprep.mubr.bf16.mxu0 0
  %1162 = vmatmul.mubr.bf16.gmra.mxu0 %v668
  %v1163 = vpop.f32.mrf.mxu0
  %v1164 = vadd.f32 0.0, %v1163
  %v1165 = vpop.f32.mrf.mxu0
  %v1166 = vpop.f32.mrf.mxu0
  %v1167 = vadd.f32 0.0, %v1166
  %v1168 = vpop.f32.mrf.mxu0
  %1169 = vmatprep.mubr.bf16.mxu0 0
  %1170 = vmatmul.mubr.bf16.gmra.mxu0 %v671
  %v1171 = vpop.f32.mrf.mxu0
  %v1172 = vadd.f32 0.0, %v1171
  %v1173 = vpop.f32.mrf.mxu0
  %v1174 = vpop.f32.mrf.mxu0
  %v1175 = vadd.f32 0.0, %v1174
  %v1176 = vpop.f32.mrf.mxu0
  %1177 = vmatprep.mubr.bf16.mxu0 0
  %1178 = vmatmul.mubr.bf16.gmra.mxu0 %v674
  %v1179 = vpop.f32.mrf.mxu0
  %v1180 = vadd.f32 0.0, %v1179
  %v1181 = vpop.f32.mrf.mxu0
  %v1182 = vpop.f32.mrf.mxu0
  %v1183 = vadd.f32 0.0, %v1182
  %v1184 = vpop.f32.mrf.mxu0
  %1185 = vmatprep.mubr.bf16.mxu0 0
  %1186 = vmatmul.mubr.bf16.gmra.mxu0 %v677
  %v1187 = vpop.f32.mrf.mxu0
  %v1188 = vadd.f32 0.0, %v1187
  %v1189 = vpop.f32.mrf.mxu0
  %v1190 = vpop.f32.mrf.mxu0
  %v1191 = vadd.f32 0.0, %v1190
  %v1192 = vpop.f32.mrf.mxu0
  %1193 = vmatprep.mubr.bf16.mxu0 0
  %1194 = vmatmul.mubr.bf16.gmra.mxu0 %v680
  %v1195 = vpop.f32.mrf.mxu0
  %v1196 = vadd.f32 0.0, %v1195
  %v1197 = vpop.f32.mrf.mxu0
  %v1198 = vpop.f32.mrf.mxu0
  %v1199 = vadd.f32 0.0, %v1198
  %v1200 = vpop.f32.mrf.mxu0
  %1201 = vmatprep.mubr.bf16.mxu0 0
  %1202 = vmatmul.mubr.bf16.gmra.mxu0 %v683
  %v1203 = vpop.f32.mrf.mxu0
  %v1204 = vadd.f32 0.0, %v1203
  %v1205 = vpop.f32.mrf.mxu0
  %v1206 = vpop.f32.mrf.mxu0
  %v1207 = vadd.f32 0.0, %v1206
  %v1208 = vpop.f32.mrf.mxu0
  %1209 = vmatprep.mubr.bf16.mxu0 0
  %1210 = vmatmul.mubr.bf16.gmra.mxu0 %v686
  %v1211 = vpop.f32.mrf.mxu0
  %v1212 = vadd.f32 0.0, %v1211
  %v1213 = vpop.f32.mrf.mxu0
  %v1214 = vpop.f32.mrf.mxu0
  %v1215 = vadd.f32 0.0, %v1214
  %v1216 = vpop.f32.mrf.mxu0
  %1217 = vmatprep.mubr.bf16.mxu0 0
  %1218 = vmatmul.mubr.bf16.gmra.mxu0 %v689
  %v1219 = vpop.f32.mrf.mxu0
  %v1220 = vadd.f32 0.0, %v1219
  %v1221 = vpop.f32.mrf.mxu0
  %v1222 = vpop.f32.mrf.mxu0
  %v1223 = vadd.f32 0.0, %v1222
  %v1224 = vpop.f32.mrf.mxu0
  %1225 = vmatprep.mubr.bf16.mxu0 0
  %1226 = vmatmul.mubr.bf16.gmra.mxu0 %v692
  %v1227 = vpop.f32.mrf.mxu0
  %v1228 = vadd.f32 0.0, %v1227
  %v1229 = vpop.f32.mrf.mxu0
  %v1230 = vpop.f32.mrf.mxu0
  %v1231 = vadd.f32 0.0, %v1230
  %v1232 = vpop.f32.mrf.mxu0
  %1233 = vmatprep.mubr.bf16.mxu0 0
  %1234 = vmatmul.mubr.bf16.gmra.mxu0 %v695
  %v1235 = vpop.f32.mrf.mxu0
  %v1236 = vadd.f32 0.0, %v1235
  %v1237 = vpop.f32.mrf.mxu0
  %v1238 = vpop.f32.mrf.mxu0
  %v1239 = vadd.f32 0.0, %v1238
  %v1240 = vpop.f32.mrf.mxu0
  %1241 = vdwg.mxu0
  %v1250 = vunpack.c.l.b16 %v423
  %v1251 = vunpack.c.l.b16 %v424
  %v1252 = vunpack.c.l.b16 %v425
  %v1253 = vunpack.c.l.b16 %v426
  %v1254 = vunpack.c.l.b16 %v427
  %v1255 = vunpack.c.l.b16 %v428
  %v1256 = vunpack.c.l.b16 %v429
  %v1257 = vunpack.c.l.b16 %v430
  %v1258 = vpack.c.b16 %v1251, %v1250
  %v1259 = vpack.c.b16 %v1253, %v1252
  %v1260 = vpack.c.b16 %v1255, %v1254
  %v1261 = vpack.c.b16 %v1257, %v1256
  %v1267 = vsel %vm504, 0, 0
  %1269 = vmatprep.subr.bf16.mxu0 0
  %1270 = vmatpush1.bf16.msra.mxu0 0
  %1271 = vmatprep.subr.bf16.mxu0 0
  %1272 = vmatpush1.bf16.msra.mxu0 0
  %1273 = vmatprep.subr.bf16.mxu0 0
  %1274 = vmatpush1.bf16.msra.mxu0 0
  %1275 = vmatprep.subr.bf16.mxu0 0
  %1276 = vmatpush1.bf16.msra.mxu0 0
  %1277 = vmatprep.subr.bf16.mxu0 0
  %1278 = vmatpush1.bf16.msra.mxu0 %v1261
  %1279 = vmatprep.subr.bf16.mxu0 0
  %1280 = vmatpush1.bf16.msra.mxu0 %v1260
  %1281 = vmatprep.subr.bf16.mxu0 0
  %1282 = vmatpush1.bf16.msra.mxu0 %v1259
  %1283 = vmatprep.subr.bf16.mxu0 0
  %1284 = vmatpush1.bf16.msra.mxu0 %v1258
  %1285 = vmatprep.subr.bf16.mxu0 0
  %1286 = vmatpush2.bf16.msra.mxu0 0
  %1287 = vmatprep.subr.bf16.mxu0 0
  %1288 = vmatpush2.bf16.msra.mxu0 0
  %1289 = vmatprep.subr.bf16.mxu0 0
  %1290 = vmatpush2.bf16.msra.mxu0 0
  %1291 = vmatprep.subr.bf16.mxu0 0
  %1292 = vmatpush2.bf16.msra.mxu0 0
  %1293 = vmatprep.subr.bf16.mxu0 0
  %1294 = vmatpush2.bf16.msra.mxu0 0
  %1295 = vmatprep.subr.bf16.mxu0 0
  %1296 = vmatpush2.bf16.msra.mxu0 0
  %1297 = vmatprep.subr.bf16.mxu0 0
  %1298 = vmatpush2.bf16.msra.mxu0 0
  %1299 = vmatprep.subr.bf16.mxu0 0
  %1300 = vmatpush2.bf16.msra.mxu0 0
  %1301 = vmatprep.mubr.bf16.mxu0 0
  %1302 = vmatmul.mubr.bf16.gmra.mxu0 %v1267
  %v1303 = vpop.f32.mrf.mxu0
  %v1304 = vadd.f32 %v732, %v1303
  %v1305 = vpop.f32.mrf.mxu0
  %v1306 = vpop.f32.mrf.mxu0
  %v1307 = vadd.f32 %v735, %v1306
  %v1308 = vpop.f32.mrf.mxu0
  %1309 = vmatprep.mubr.bf16.mxu0 0
  %1310 = vmatmul.mubr.bf16.gmra.mxu0 %v1267
  %v1311 = vpop.f32.mrf.mxu0
  %v1312 = vadd.f32 %v740, %v1311
  %v1313 = vpop.f32.mrf.mxu0
  %v1314 = vpop.f32.mrf.mxu0
  %v1315 = vadd.f32 %v743, %v1314
  %v1316 = vpop.f32.mrf.mxu0
  %1317 = vmatprep.mubr.bf16.mxu0 0
  %1318 = vmatmul.mubr.bf16.gmra.mxu0 %v1267
  %v1319 = vpop.f32.mrf.mxu0
  %v1320 = vadd.f32 %v748, %v1319
  %v1321 = vpop.f32.mrf.mxu0
  %v1322 = vpop.f32.mrf.mxu0
  %v1323 = vadd.f32 %v751, %v1322
  %v1324 = vpop.f32.mrf.mxu0
  %1325 = vmatprep.mubr.bf16.mxu0 0
  %1326 = vmatmul.mubr.bf16.gmra.mxu0 %v1267
  %v1327 = vpop.f32.mrf.mxu0
  %v1328 = vadd.f32 %v756, %v1327
  %v1329 = vpop.f32.mrf.mxu0
  %v1330 = vpop.f32.mrf.mxu0
  %v1331 = vadd.f32 %v759, %v1330
  %v1332 = vpop.f32.mrf.mxu0
  %1333 = vmatprep.mubr.bf16.mxu0 0
  %1334 = vmatmul.mubr.bf16.gmra.mxu0 %v1267
  %v1335 = vpop.f32.mrf.mxu0
  %v1336 = vadd.f32 %v764, %v1335
  %v1337 = vpop.f32.mrf.mxu0
  %v1338 = vpop.f32.mrf.mxu0
  %v1339 = vadd.f32 %v767, %v1338
  %v1340 = vpop.f32.mrf.mxu0
  %1341 = vmatprep.mubr.bf16.mxu0 0
  %1342 = vmatmul.mubr.bf16.gmra.mxu0 %v1267
  %v1343 = vpop.f32.mrf.mxu0
  %v1344 = vadd.f32 %v772, %v1343
  %v1345 = vpop.f32.mrf.mxu0
  %v1346 = vpop.f32.mrf.mxu0
  %v1347 = vadd.f32 %v775, %v1346
  %v1348 = vpop.f32.mrf.mxu0
  %1349 = vmatprep.mubr.bf16.mxu0 0
  %1350 = vmatmul.mubr.bf16.gmra.mxu0 %v1267
  %v1351 = vpop.f32.mrf.mxu0
  %v1352 = vadd.f32 %v780, %v1351
  %v1353 = vpop.f32.mrf.mxu0
  %v1354 = vpop.f32.mrf.mxu0
  %v1355 = vadd.f32 %v783, %v1354
  %v1356 = vpop.f32.mrf.mxu0
  %1357 = vmatprep.mubr.bf16.mxu0 0
  %1358 = vmatmul.mubr.bf16.gmra.mxu0 %v1267
  %v1359 = vpop.f32.mrf.mxu0
  %v1360 = vadd.f32 %v788, %v1359
  %v1361 = vpop.f32.mrf.mxu0
  %v1362 = vpop.f32.mrf.mxu0
  %v1363 = vadd.f32 %v791, %v1362
  %v1364 = vpop.f32.mrf.mxu0
  %1365 = vmatprep.mubr.bf16.mxu0 0
  %1366 = vmatmul.mubr.bf16.gmra.mxu0 %v506
  %v1367 = vpop.f32.mrf.mxu0
  %v1368 = vadd.f32 %v796, %v1367
  %v1369 = vpop.f32.mrf.mxu0
  %v1370 = vpop.f32.mrf.mxu0
  %v1371 = vadd.f32 %v799, %v1370
  %v1372 = vpop.f32.mrf.mxu0
  %1373 = vmatprep.mubr.bf16.mxu0 0
  %1374 = vmatmul.mubr.bf16.gmra.mxu0 %v509
  %v1375 = vpop.f32.mrf.mxu0
  %v1376 = vadd.f32 %v804, %v1375
  %v1377 = vpop.f32.mrf.mxu0
  %v1378 = vpop.f32.mrf.mxu0
  %v1379 = vadd.f32 %v807, %v1378
  %v1380 = vpop.f32.mrf.mxu0
  %1381 = vmatprep.mubr.bf16.mxu0 0
  %1382 = vmatmul.mubr.bf16.gmra.mxu0 %v512
  %v1383 = vpop.f32.mrf.mxu0
  %v1384 = vadd.f32 %v812, %v1383
  %v1385 = vpop.f32.mrf.mxu0
  %v1386 = vpop.f32.mrf.mxu0
  %v1387 = vadd.f32 %v815, %v1386
  %v1388 = vpop.f32.mrf.mxu0
  %1389 = vmatprep.mubr.bf16.mxu0 0
  %1390 = vmatmul.mubr.bf16.gmra.mxu0 %v515
  %v1391 = vpop.f32.mrf.mxu0
  %v1392 = vadd.f32 %v820, %v1391
  %v1393 = vpop.f32.mrf.mxu0
  %v1394 = vpop.f32.mrf.mxu0
  %v1395 = vadd.f32 %v823, %v1394
  %v1396 = vpop.f32.mrf.mxu0
  %1397 = vmatprep.mubr.bf16.mxu0 0
  %1398 = vmatmul.mubr.bf16.gmra.mxu0 %v518
  %v1399 = vpop.f32.mrf.mxu0
  %v1400 = vadd.f32 %v828, %v1399
  %v1401 = vpop.f32.mrf.mxu0
  %v1402 = vpop.f32.mrf.mxu0
  %v1403 = vadd.f32 %v831, %v1402
  %v1404 = vpop.f32.mrf.mxu0
  %1405 = vmatprep.mubr.bf16.mxu0 0
  %1406 = vmatmul.mubr.bf16.gmra.mxu0 %v521
  %v1407 = vpop.f32.mrf.mxu0
  %v1408 = vadd.f32 %v836, %v1407
  %v1409 = vpop.f32.mrf.mxu0
  %v1410 = vpop.f32.mrf.mxu0
  %v1411 = vadd.f32 %v839, %v1410
  %v1412 = vpop.f32.mrf.mxu0
  %1413 = vmatprep.mubr.bf16.mxu0 0
  %1414 = vmatmul.mubr.bf16.gmra.mxu0 %v524
  %v1415 = vpop.f32.mrf.mxu0
  %v1416 = vadd.f32 %v844, %v1415
  %v1417 = vpop.f32.mrf.mxu0
  %v1418 = vpop.f32.mrf.mxu0
  %v1419 = vadd.f32 %v847, %v1418
  %v1420 = vpop.f32.mrf.mxu0
  %1421 = vmatprep.mubr.bf16.mxu0 0
  %1422 = vmatmul.mubr.bf16.gmra.mxu0 %v527
  %v1423 = vpop.f32.mrf.mxu0
  %v1424 = vadd.f32 %v852, %v1423
  %v1425 = vpop.f32.mrf.mxu0
  %v1426 = vpop.f32.mrf.mxu0
  %v1427 = vadd.f32 %v855, %v1426
  %v1428 = vpop.f32.mrf.mxu0
  %1429 = vmatprep.mubr.bf16.mxu0 0
  %1430 = vmatmul.mubr.bf16.gmra.mxu0 %v530
  %v1431 = vpop.f32.mrf.mxu0
  %v1432 = vadd.f32 %v860, %v1431
  %v1433 = vpop.f32.mrf.mxu0
  %v1434 = vpop.f32.mrf.mxu0
  %v1435 = vadd.f32 %v863, %v1434
  %v1436 = vpop.f32.mrf.mxu0
  %1437 = vmatprep.mubr.bf16.mxu0 0
  %1438 = vmatmul.mubr.bf16.gmra.mxu0 %v533
  %v1439 = vpop.f32.mrf.mxu0
  %v1440 = vadd.f32 %v868, %v1439
  %v1441 = vpop.f32.mrf.mxu0
  %v1442 = vpop.f32.mrf.mxu0
  %v1443 = vadd.f32 %v871, %v1442
  %v1444 = vpop.f32.mrf.mxu0
  %1445 = vmatprep.mubr.bf16.mxu0 0
  %1446 = vmatmul.mubr.bf16.gmra.mxu0 %v536
  %v1447 = vpop.f32.mrf.mxu0
  %v1448 = vadd.f32 %v876, %v1447
  %v1449 = vpop.f32.mrf.mxu0
  %v1450 = vpop.f32.mrf.mxu0
  %v1451 = vadd.f32 %v879, %v1450
  %v1452 = vpop.f32.mrf.mxu0
  %1453 = vmatprep.mubr.bf16.mxu0 0
  %1454 = vmatmul.mubr.bf16.gmra.mxu0 %v539
  %v1455 = vpop.f32.mrf.mxu0
  %v1456 = vadd.f32 %v884, %v1455
  %v1457 = vpop.f32.mrf.mxu0
  %v1458 = vpop.f32.mrf.mxu0
  %v1459 = vadd.f32 %v887, %v1458
  %v1460 = vpop.f32.mrf.mxu0
  %1461 = vmatprep.mubr.bf16.mxu0 0
  %1462 = vmatmul.mubr.bf16.gmra.mxu0 %v542
  %v1463 = vpop.f32.mrf.mxu0
  %v1464 = vadd.f32 %v892, %v1463
  %v1465 = vpop.f32.mrf.mxu0
  %v1466 = vpop.f32.mrf.mxu0
  %v1467 = vadd.f32 %v895, %v1466
  %v1468 = vpop.f32.mrf.mxu0
  %1469 = vmatprep.mubr.bf16.mxu0 0
  %1470 = vmatmul.mubr.bf16.gmra.mxu0 %v545
  %v1471 = vpop.f32.mrf.mxu0
  %v1472 = vadd.f32 %v900, %v1471
  %v1473 = vpop.f32.mrf.mxu0
  %v1474 = vpop.f32.mrf.mxu0
  %v1475 = vadd.f32 %v903, %v1474
  %v1476 = vpop.f32.mrf.mxu0
  %1477 = vmatprep.mubr.bf16.mxu0 0
  %1478 = vmatmul.mubr.bf16.gmra.mxu0 %v548
  %v1479 = vpop.f32.mrf.mxu0
  %v1480 = vadd.f32 %v908, %v1479
  %v1481 = vpop.f32.mrf.mxu0
  %v1482 = vpop.f32.mrf.mxu0
  %v1483 = vadd.f32 %v911, %v1482
  %v1484 = vpop.f32.mrf.mxu0
  %1485 = vmatprep.mubr.bf16.mxu0 0
  %1486 = vmatmul.mubr.bf16.gmra.mxu0 %v551
  %v1487 = vpop.f32.mrf.mxu0
  %v1488 = vadd.f32 %v916, %v1487
  %v1489 = vpop.f32.mrf.mxu0
  %v1490 = vpop.f32.mrf.mxu0
  %v1491 = vadd.f32 %v919, %v1490
  %v1492 = vpop.f32.mrf.mxu0
  %1493 = vmatprep.mubr.bf16.mxu0 0
  %1494 = vmatmul.mubr.bf16.gmra.mxu0 %v554
  %v1495 = vpop.f32.mrf.mxu0
  %v1496 = vadd.f32 %v924, %v1495
  %v1497 = vpop.f32.mrf.mxu0
  %v1498 = vpop.f32.mrf.mxu0
  %v1499 = vadd.f32 %v927, %v1498
  %v1500 = vpop.f32.mrf.mxu0
  %1501 = vmatprep.mubr.bf16.mxu0 0
  %1502 = vmatmul.mubr.bf16.gmra.mxu0 %v557
  %v1503 = vpop.f32.mrf.mxu0
  %v1504 = vadd.f32 %v932, %v1503
  %v1505 = vpop.f32.mrf.mxu0
  %v1506 = vpop.f32.mrf.mxu0
  %v1507 = vadd.f32 %v935, %v1506
  %v1508 = vpop.f32.mrf.mxu0
  %1509 = vmatprep.mubr.bf16.mxu0 0
  %1510 = vmatmul.mubr.bf16.gmra.mxu0 %v560
  %v1511 = vpop.f32.mrf.mxu0
  %v1512 = vadd.f32 %v940, %v1511
  %v1513 = vpop.f32.mrf.mxu0
  %v1514 = vpop.f32.mrf.mxu0
  %v1515 = vadd.f32 %v943, %v1514
  %v1516 = vpop.f32.mrf.mxu0
  %1517 = vmatprep.mubr.bf16.mxu0 0
  %1518 = vmatmul.mubr.bf16.gmra.mxu0 %v563
  %v1519 = vpop.f32.mrf.mxu0
  %v1520 = vadd.f32 %v948, %v1519
  %v1521 = vpop.f32.mrf.mxu0
  %v1522 = vpop.f32.mrf.mxu0
  %v1523 = vadd.f32 %v951, %v1522
  %v1524 = vpop.f32.mrf.mxu0
  %1525 = vmatprep.mubr.bf16.mxu0 0
  %1526 = vmatmul.mubr.bf16.gmra.mxu0 %v566
  %v1527 = vpop.f32.mrf.mxu0
  %v1528 = vadd.f32 %v956, %v1527
  %v1529 = vpop.f32.mrf.mxu0
  %v1530 = vpop.f32.mrf.mxu0
  %v1531 = vadd.f32 %v959, %v1530
  %v1532 = vpop.f32.mrf.mxu0
  %1533 = vmatprep.mubr.bf16.mxu0 0
  %1534 = vmatmul.mubr.bf16.gmra.mxu0 %v569
  %v1535 = vpop.f32.mrf.mxu0
  %v1536 = vadd.f32 %v964, %v1535
  %v1537 = vpop.f32.mrf.mxu0
  %v1538 = vpop.f32.mrf.mxu0
  %v1539 = vadd.f32 %v967, %v1538
  %v1540 = vpop.f32.mrf.mxu0
  %1541 = vmatprep.mubr.bf16.mxu0 0
  %1542 = vmatmul.mubr.bf16.gmra.mxu0 %v572
  %v1543 = vpop.f32.mrf.mxu0
  %v1544 = vadd.f32 %v972, %v1543
  %v1545 = vpop.f32.mrf.mxu0
  %v1546 = vpop.f32.mrf.mxu0
  %v1547 = vadd.f32 %v975, %v1546
  %v1548 = vpop.f32.mrf.mxu0
  %1549 = vmatprep.mubr.bf16.mxu0 0
  %1550 = vmatmul.mubr.bf16.gmra.mxu0 %v575
  %v1551 = vpop.f32.mrf.mxu0
  %v1552 = vadd.f32 %v980, %v1551
  %v1553 = vpop.f32.mrf.mxu0
  %v1554 = vpop.f32.mrf.mxu0
  %v1555 = vadd.f32 %v983, %v1554
  %v1556 = vpop.f32.mrf.mxu0
  %1557 = vmatprep.mubr.bf16.mxu0 0
  %1558 = vmatmul.mubr.bf16.gmra.mxu0 %v578
  %v1559 = vpop.f32.mrf.mxu0
  %v1560 = vadd.f32 %v988, %v1559
  %v1561 = vpop.f32.mrf.mxu0
  %v1562 = vpop.f32.mrf.mxu0
  %v1563 = vadd.f32 %v991, %v1562
  %v1564 = vpop.f32.mrf.mxu0
  %1565 = vmatprep.mubr.bf16.mxu0 0
  %1566 = vmatmul.mubr.bf16.gmra.mxu0 %v581
  %v1567 = vpop.f32.mrf.mxu0
  %v1568 = vadd.f32 %v996, %v1567
  %v1569 = vpop.f32.mrf.mxu0
  %v1570 = vpop.f32.mrf.mxu0
  %v1571 = vadd.f32 %v999, %v1570
  %v1572 = vpop.f32.mrf.mxu0
  %1573 = vmatprep.mubr.bf16.mxu0 0
  %1574 = vmatmul.mubr.bf16.gmra.mxu0 %v584
  %v1575 = vpop.f32.mrf.mxu0
  %v1576 = vadd.f32 %v1004, %v1575
  %v1577 = vpop.f32.mrf.mxu0
  %v1578 = vpop.f32.mrf.mxu0
  %v1579 = vadd.f32 %v1007, %v1578
  %v1580 = vpop.f32.mrf.mxu0
  %1581 = vmatprep.mubr.bf16.mxu0 0
  %1582 = vmatmul.mubr.bf16.gmra.mxu0 %v587
  %v1583 = vpop.f32.mrf.mxu0
  %v1584 = vadd.f32 %v1012, %v1583
  %v1585 = vpop.f32.mrf.mxu0
  %v1586 = vpop.f32.mrf.mxu0
  %v1587 = vadd.f32 %v1015, %v1586
  %v1588 = vpop.f32.mrf.mxu0
  %1589 = vmatprep.mubr.bf16.mxu0 0
  %1590 = vmatmul.mubr.bf16.gmra.mxu0 %v590
  %v1591 = vpop.f32.mrf.mxu0
  %v1592 = vadd.f32 %v1020, %v1591
  %v1593 = vpop.f32.mrf.mxu0
  %v1594 = vpop.f32.mrf.mxu0
  %v1595 = vadd.f32 %v1023, %v1594
  %v1596 = vpop.f32.mrf.mxu0
  %1597 = vmatprep.mubr.bf16.mxu0 0
  %1598 = vmatmul.mubr.bf16.gmra.mxu0 %v593
  %v1599 = vpop.f32.mrf.mxu0
  %v1600 = vadd.f32 %v1028, %v1599
  %v1601 = vpop.f32.mrf.mxu0
  %v1602 = vpop.f32.mrf.mxu0
  %v1603 = vadd.f32 %v1031, %v1602
  %v1604 = vpop.f32.mrf.mxu0
  %1605 = vmatprep.mubr.bf16.mxu0 0
  %1606 = vmatmul.mubr.bf16.gmra.mxu0 %v596
  %v1607 = vpop.f32.mrf.mxu0
  %v1608 = vadd.f32 %v1036, %v1607
  %v1609 = vpop.f32.mrf.mxu0
  %v1610 = vpop.f32.mrf.mxu0
  %v1611 = vadd.f32 %v1039, %v1610
  %v1612 = vpop.f32.mrf.mxu0
  %1613 = vmatprep.mubr.bf16.mxu0 0
  %1614 = vmatmul.mubr.bf16.gmra.mxu0 %v599
  %v1615 = vpop.f32.mrf.mxu0
  %v1616 = vadd.f32 %v1044, %v1615
  %v1617 = vpop.f32.mrf.mxu0
  %v1618 = vpop.f32.mrf.mxu0
  %v1619 = vadd.f32 %v1047, %v1618
  %v1620 = vpop.f32.mrf.mxu0
  %1621 = vmatprep.mubr.bf16.mxu0 0
  %1622 = vmatmul.mubr.bf16.gmra.mxu0 %v602
  %v1623 = vpop.f32.mrf.mxu0
  %v1624 = vadd.f32 %v1052, %v1623
  %v1625 = vpop.f32.mrf.mxu0
  %v1626 = vpop.f32.mrf.mxu0
  %v1627 = vadd.f32 %v1055, %v1626
  %v1628 = vpop.f32.mrf.mxu0
  %1629 = vmatprep.mubr.bf16.mxu0 0
  %1630 = vmatmul.mubr.bf16.gmra.mxu0 %v605
  %v1631 = vpop.f32.mrf.mxu0
  %v1632 = vadd.f32 %v1060, %v1631
  %v1633 = vpop.f32.mrf.mxu0
  %v1634 = vpop.f32.mrf.mxu0
  %v1635 = vadd.f32 %v1063, %v1634
  %v1636 = vpop.f32.mrf.mxu0
  %1637 = vmatprep.mubr.bf16.mxu0 0
  %1638 = vmatmul.mubr.bf16.gmra.mxu0 %v608
  %v1639 = vpop.f32.mrf.mxu0
  %v1640 = vadd.f32 %v1068, %v1639
  %v1641 = vpop.f32.mrf.mxu0
  %v1642 = vpop.f32.mrf.mxu0
  %v1643 = vadd.f32 %v1071, %v1642
  %v1644 = vpop.f32.mrf.mxu0
  %1645 = vmatprep.mubr.bf16.mxu0 0
  %1646 = vmatmul.mubr.bf16.gmra.mxu0 %v611
  %v1647 = vpop.f32.mrf.mxu0
  %v1648 = vadd.f32 %v1076, %v1647
  %v1649 = vpop.f32.mrf.mxu0
  %v1650 = vpop.f32.mrf.mxu0
  %v1651 = vadd.f32 %v1079, %v1650
  %v1652 = vpop.f32.mrf.mxu0
  %1653 = vmatprep.mubr.bf16.mxu0 0
  %1654 = vmatmul.mubr.bf16.gmra.mxu0 %v614
  %v1655 = vpop.f32.mrf.mxu0
  %v1656 = vadd.f32 %v1084, %v1655
  %v1657 = vpop.f32.mrf.mxu0
  %v1658 = vpop.f32.mrf.mxu0
  %v1659 = vadd.f32 %v1087, %v1658
  %v1660 = vpop.f32.mrf.mxu0
  %1661 = vmatprep.mubr.bf16.mxu0 0
  %1662 = vmatmul.mubr.bf16.gmra.mxu0 %v617
  %v1663 = vpop.f32.mrf.mxu0
  %v1664 = vadd.f32 %v1092, %v1663
  %v1665 = vpop.f32.mrf.mxu0
  %v1666 = vpop.f32.mrf.mxu0
  %v1667 = vadd.f32 %v1095, %v1666
  %v1668 = vpop.f32.mrf.mxu0
  %1669 = vmatprep.mubr.bf16.mxu0 0
  %1670 = vmatmul.mubr.bf16.gmra.mxu0 %v620
  %v1671 = vpop.f32.mrf.mxu0
  %v1672 = vadd.f32 %v1100, %v1671
  %v1673 = vpop.f32.mrf.mxu0
  %v1674 = vpop.f32.mrf.mxu0
  %v1675 = vadd.f32 %v1103, %v1674
  %v1676 = vpop.f32.mrf.mxu0
  %1677 = vmatprep.mubr.bf16.mxu0 0
  %1678 = vmatmul.mubr.bf16.gmra.mxu0 %v623
  %v1679 = vpop.f32.mrf.mxu0
  %v1680 = vadd.f32 %v1108, %v1679
  %v1681 = vpop.f32.mrf.mxu0
  %v1682 = vpop.f32.mrf.mxu0
  %v1683 = vadd.f32 %v1111, %v1682
  %v1684 = vpop.f32.mrf.mxu0
  %1685 = vmatprep.mubr.bf16.mxu0 0
  %1686 = vmatmul.mubr.bf16.gmra.mxu0 %v626
  %v1687 = vpop.f32.mrf.mxu0
  %v1688 = vadd.f32 %v1116, %v1687
  %v1689 = vpop.f32.mrf.mxu0
  %v1690 = vpop.f32.mrf.mxu0
  %v1691 = vadd.f32 %v1119, %v1690
  %v1692 = vpop.f32.mrf.mxu0
  %1693 = vmatprep.mubr.bf16.mxu0 0
  %1694 = vmatmul.mubr.bf16.gmra.mxu0 %v629
  %v1695 = vpop.f32.mrf.mxu0
  %v1696 = vadd.f32 %v1124, %v1695
  %v1697 = vpop.f32.mrf.mxu0
  %v1698 = vpop.f32.mrf.mxu0
  %v1699 = vadd.f32 %v1127, %v1698
  %v1700 = vpop.f32.mrf.mxu0
  %1701 = vmatprep.mubr.bf16.mxu0 0
  %1702 = vmatmul.mubr.bf16.gmra.mxu0 %v632
  %v1703 = vpop.f32.mrf.mxu0
  %v1704 = vadd.f32 %v1132, %v1703
  %v1705 = vpop.f32.mrf.mxu0
  %v1706 = vpop.f32.mrf.mxu0
  %v1707 = vadd.f32 %v1135, %v1706
  %v1708 = vpop.f32.mrf.mxu0
  %1709 = vmatprep.mubr.bf16.mxu0 0
  %1710 = vmatmul.mubr.bf16.gmra.mxu0 %v635
  %v1711 = vpop.f32.mrf.mxu0
  %v1712 = vadd.f32 %v1140, %v1711
  %v1713 = vpop.f32.mrf.mxu0
  %v1714 = vpop.f32.mrf.mxu0
  %v1715 = vadd.f32 %v1143, %v1714
  %v1716 = vpop.f32.mrf.mxu0
  %1717 = vmatprep.mubr.bf16.mxu0 0
  %1718 = vmatmul.mubr.bf16.gmra.mxu0 %v638
  %v1719 = vpop.f32.mrf.mxu0
  %v1720 = vadd.f32 %v1148, %v1719
  %v1721 = vpop.f32.mrf.mxu0
  %v1722 = vpop.f32.mrf.mxu0
  %v1723 = vadd.f32 %v1151, %v1722
  %v1724 = vpop.f32.mrf.mxu0
  %1725 = vmatprep.mubr.bf16.mxu0 0
  %1726 = vmatmul.mubr.bf16.gmra.mxu0 %v641
  %v1727 = vpop.f32.mrf.mxu0
  %v1728 = vadd.f32 %v1156, %v1727
  %v1729 = vpop.f32.mrf.mxu0
  %v1730 = vpop.f32.mrf.mxu0
  %v1731 = vadd.f32 %v1159, %v1730
  %v1732 = vpop.f32.mrf.mxu0
  %1733 = vmatprep.mubr.bf16.mxu0 0
  %1734 = vmatmul.mubr.bf16.gmra.mxu0 %v644
  %v1735 = vpop.f32.mrf.mxu0
  %v1736 = vadd.f32 %v1164, %v1735
  %v1737 = vpop.f32.mrf.mxu0
  %v1738 = vpop.f32.mrf.mxu0
  %v1739 = vadd.f32 %v1167, %v1738
  %v1740 = vpop.f32.mrf.mxu0
  %1741 = vmatprep.mubr.bf16.mxu0 0
  %1742 = vmatmul.mubr.bf16.gmra.mxu0 %v647
  %v1743 = vpop.f32.mrf.mxu0
  %v1744 = vadd.f32 %v1172, %v1743
  %v1745 = vpop.f32.mrf.mxu0
  %v1746 = vpop.f32.mrf.mxu0
  %v1747 = vadd.f32 %v1175, %v1746
  %v1748 = vpop.f32.mrf.mxu0
  %1749 = vmatprep.mubr.bf16.mxu0 0
  %1750 = vmatmul.mubr.bf16.gmra.mxu0 %v650
  %v1751 = vpop.f32.mrf.mxu0
  %v1752 = vadd.f32 %v1180, %v1751
  %v1753 = vpop.f32.mrf.mxu0
  %v1754 = vpop.f32.mrf.mxu0
  %v1755 = vadd.f32 %v1183, %v1754
  %v1756 = vpop.f32.mrf.mxu0
  %1757 = vmatprep.mubr.bf16.mxu0 0
  %1758 = vmatmul.mubr.bf16.gmra.mxu0 %v653
  %v1759 = vpop.f32.mrf.mxu0
  %v1760 = vadd.f32 %v1188, %v1759
  %v1761 = vpop.f32.mrf.mxu0
  %v1762 = vpop.f32.mrf.mxu0
  %v1763 = vadd.f32 %v1191, %v1762
  %v1764 = vpop.f32.mrf.mxu0
  %1765 = vmatprep.mubr.bf16.mxu0 0
  %1766 = vmatmul.mubr.bf16.gmra.mxu0 %v656
  %v1767 = vpop.f32.mrf.mxu0
  %v1768 = vadd.f32 %v1196, %v1767
  %v1769 = vpop.f32.mrf.mxu0
  %v1770 = vpop.f32.mrf.mxu0
  %v1771 = vadd.f32 %v1199, %v1770
  %v1772 = vpop.f32.mrf.mxu0
  %1773 = vmatprep.mubr.bf16.mxu0 0
  %1774 = vmatmul.mubr.bf16.gmra.mxu0 %v659
  %v1775 = vpop.f32.mrf.mxu0
  %v1776 = vadd.f32 %v1204, %v1775
  %v1777 = vpop.f32.mrf.mxu0
  %v1778 = vpop.f32.mrf.mxu0
  %v1779 = vadd.f32 %v1207, %v1778
  %v1780 = vpop.f32.mrf.mxu0
  %1781 = vmatprep.mubr.bf16.mxu0 0
  %1782 = vmatmul.mubr.bf16.gmra.mxu0 %v662
  %v1783 = vpop.f32.mrf.mxu0
  %v1784 = vadd.f32 %v1212, %v1783
  %v1785 = vpop.f32.mrf.mxu0
  %v1786 = vpop.f32.mrf.mxu0
  %v1787 = vadd.f32 %v1215, %v1786
  %v1788 = vpop.f32.mrf.mxu0
  %1789 = vmatprep.mubr.bf16.mxu0 0
  %1790 = vmatmul.mubr.bf16.gmra.mxu0 %v665
  %v1791 = vpop.f32.mrf.mxu0
  %v1792 = vadd.f32 %v1220, %v1791
  %v1793 = vpop.f32.mrf.mxu0
  %v1794 = vpop.f32.mrf.mxu0
  %v1795 = vadd.f32 %v1223, %v1794
  %v1796 = vpop.f32.mrf.mxu0
  %1797 = vmatprep.mubr.bf16.mxu0 0
  %1798 = vmatmul.mubr.bf16.gmra.mxu0 %v668
  %v1799 = vpop.f32.mrf.mxu0
  %v1800 = vadd.f32 %v1228, %v1799
  %v1801 = vpop.f32.mrf.mxu0
  %v1802 = vpop.f32.mrf.mxu0
  %v1803 = vadd.f32 %v1231, %v1802
  %v1804 = vpop.f32.mrf.mxu0
  %1805 = vmatprep.mubr.bf16.mxu0 0
  %1806 = vmatmul.mubr.bf16.gmra.mxu0 %v671
  %v1807 = vpop.f32.mrf.mxu0
  %v1808 = vadd.f32 %v1236, %v1807
  %v1809 = vpop.f32.mrf.mxu0
  %v1810 = vpop.f32.mrf.mxu0
  %v1811 = vadd.f32 %v1239, %v1810
  %v1812 = vpop.f32.mrf.mxu0
  %1813 = vdwg.mxu0
  %s1814 = scalar_lea.vmem %s1, 64
  %v1815 = vld [vmem:[%s1814] sm:$0xf]
  %v1816 = vld [vmem:[%s1814 + $0x4] sm:$0xf]
  %v1817 = vld [vmem:[%s1814 + $0x8] sm:$0xf]
  %v1818 = vld [vmem:[%s1814 + $0xc] sm:$0xf]
  %v1819 = vld [vmem:[%s1814 + $0x10] sm:$0xf]
  %v1820 = vld [vmem:[%s1814 + $0x14] sm:$0xf]
  %v1821 = vld [vmem:[%s1814 + $0x18] sm:$0xf]
  %v1822 = vld [vmem:[%s1814 + $0x1c] sm:$0xf]
  %v1824 = vunpack.c.l.b16 0
  %v1825 = vpack.c.b16 %v1824, %v1824
  %v1834 = vunpack.c.l.b16 %v1815
  %v1835 = vunpack.c.l.b16 %v1816
  %v1836 = vunpack.c.l.b16 %v1817
  %v1837 = vunpack.c.l.b16 %v1818
  %v1838 = vunpack.c.l.b16 %v1819
  %v1839 = vunpack.c.l.b16 %v1820
  %v1840 = vunpack.c.l.b16 %v1821
  %v1841 = vunpack.c.l.b16 %v1822
  %v1842 = vpack.c.b16 %v1835, %v1834
  %v1843 = vpack.c.b16 %v1837, %v1836
  %v1844 = vpack.c.b16 %v1839, %v1838
  %v1845 = vpack.c.b16 %v1841, %v1840
  %v1851 = vsel %vm504, %v1825, 0
  %1853 = vmatprep.subr.bf16.mxu0 0
  %1854 = vmatpush1.bf16.msra.mxu0 0
  %1855 = vmatprep.subr.bf16.mxu0 0
  %1856 = vmatpush1.bf16.msra.mxu0 0
  %1857 = vmatprep.subr.bf16.mxu0 0
  %1858 = vmatpush1.bf16.msra.mxu0 0
  %1859 = vmatprep.subr.bf16.mxu0 0
  %1860 = vmatpush1.bf16.msra.mxu0 0
  %1861 = vmatprep.subr.bf16.mxu0 0
  %1862 = vmatpush1.bf16.msra.mxu0 %v1845
  %1863 = vmatprep.subr.bf16.mxu0 0
  %1864 = vmatpush1.bf16.msra.mxu0 %v1844
  %1865 = vmatprep.subr.bf16.mxu0 0
  %1866 = vmatpush1.bf16.msra.mxu0 %v1843
  %1867 = vmatprep.subr.bf16.mxu0 0
  %1868 = vmatpush1.bf16.msra.mxu0 %v1842
  %1869 = vmatprep.subr.bf16.mxu0 0
  %1870 = vmatpush2.bf16.msra.mxu0 0
  %1871 = vmatprep.subr.bf16.mxu0 0
  %1872 = vmatpush2.bf16.msra.mxu0 0
  %1873 = vmatprep.subr.bf16.mxu0 0
  %1874 = vmatpush2.bf16.msra.mxu0 0
  %1875 = vmatprep.subr.bf16.mxu0 0
  %1876 = vmatpush2.bf16.msra.mxu0 0
  %1877 = vmatprep.subr.bf16.mxu0 0
  %1878 = vmatpush2.bf16.msra.mxu0 0
  %1879 = vmatprep.subr.bf16.mxu0 0
  %1880 = vmatpush2.bf16.msra.mxu0 0
  %1881 = vmatprep.subr.bf16.mxu0 0
  %1882 = vmatpush2.bf16.msra.mxu0 0
  %1883 = vmatprep.subr.bf16.mxu0 0
  %1884 = vmatpush2.bf16.msra.mxu0 0
  %1885 = vmatprep.mubr.bf16.mxu0 0
  %1886 = vmatmul.mubr.bf16.gmra.mxu0 %v530
  %v1887 = vpop.f32.mrf.mxu0
  %v1888 = vadd.f32 0.0, %v1887
  %v1889 = vpop.f32.mrf.mxu0
  %v1890 = vpop.f32.mrf.mxu0
  %v1891 = vadd.f32 0.0, %v1890
  %v1892 = vpop.f32.mrf.mxu0
  %1893 = vmatprep.mubr.bf16.mxu0 0
  %1894 = vmatmul.mubr.bf16.gmra.mxu0 %v533
  %v1895 = vpop.f32.mrf.mxu0
  %v1896 = vadd.f32 0.0, %v1895
  %v1897 = vpop.f32.mrf.mxu0
  %v1898 = vpop.f32.mrf.mxu0
  %v1899 = vadd.f32 0.0, %v1898
  %v1900 = vpop.f32.mrf.mxu0
  %1901 = vmatprep.mubr.bf16.mxu0 0
  %1902 = vmatmul.mubr.bf16.gmra.mxu0 %v536
  %v1903 = vpop.f32.mrf.mxu0
  %v1904 = vadd.f32 0.0, %v1903
  %v1905 = vpop.f32.mrf.mxu0
  %v1906 = vpop.f32.mrf.mxu0
  %v1907 = vadd.f32 0.0, %v1906
  %v1908 = vpop.f32.mrf.mxu0
  %1909 = vmatprep.mubr.bf16.mxu0 0
  %1910 = vmatmul.mubr.bf16.gmra.mxu0 %v539
  %v1911 = vpop.f32.mrf.mxu0
  %v1912 = vadd.f32 0.0, %v1911
  %v1913 = vpop.f32.mrf.mxu0
  %v1914 = vpop.f32.mrf.mxu0
  %v1915 = vadd.f32 0.0, %v1914
  %v1916 = vpop.f32.mrf.mxu0
  %1917 = vmatprep.mubr.bf16.mxu0 0
  %1918 = vmatmul.mubr.bf16.gmra.mxu0 %v542
  %v1919 = vpop.f32.mrf.mxu0
  %v1920 = vadd.f32 0.0, %v1919
  %v1921 = vpop.f32.mrf.mxu0
  %v1922 = vpop.f32.mrf.mxu0
  %v1923 = vadd.f32 0.0, %v1922
  %v1924 = vpop.f32.mrf.mxu0
  %1925 = vmatprep.mubr.bf16.mxu0 0
  %1926 = vmatmul.mubr.bf16.gmra.mxu0 %v545
  %v1927 = vpop.f32.mrf.mxu0
  %v1928 = vadd.f32 0.0, %v1927
  %v1929 = vpop.f32.mrf.mxu0
  %v1930 = vpop.f32.mrf.mxu0
  %v1931 = vadd.f32 0.0, %v1930
  %v1932 = vpop.f32.mrf.mxu0
  %1933 = vmatprep.mubr.bf16.mxu0 0
  %1934 = vmatmul.mubr.bf16.gmra.mxu0 %v548
  %v1935 = vpop.f32.mrf.mxu0
  %v1936 = vadd.f32 0.0, %v1935
  %v1937 = vpop.f32.mrf.mxu0
  %v1938 = vpop.f32.mrf.mxu0
  %v1939 = vadd.f32 0.0, %v1938
  %v1940 = vpop.f32.mrf.mxu0
  %1941 = vmatprep.mubr.bf16.mxu0 0
  %1942 = vmatmul.mubr.bf16.gmra.mxu0 %v551
  %v1943 = vpop.f32.mrf.mxu0
  %v1944 = vadd.f32 0.0, %v1943
  %v1945 = vpop.f32.mrf.mxu0
  %v1946 = vpop.f32.mrf.mxu0
  %v1947 = vadd.f32 0.0, %v1946
  %v1948 = vpop.f32.mrf.mxu0
  %1949 = vmatprep.mubr.bf16.mxu0 0
  %1950 = vmatmul.mubr.bf16.gmra.mxu0 %v554
  %v1951 = vpop.f32.mrf.mxu0
  %v1952 = vadd.f32 0.0, %v1951
  %v1953 = vpop.f32.mrf.mxu0
  %v1954 = vpop.f32.mrf.mxu0
  %v1955 = vadd.f32 0.0, %v1954
  %v1956 = vpop.f32.mrf.mxu0
  %1957 = vmatprep.mubr.bf16.mxu0 0
  %1958 = vmatmul.mubr.bf16.gmra.mxu0 %v557
  %v1959 = vpop.f32.mrf.mxu0
  %v1960 = vadd.f32 0.0, %v1959
  %v1961 = vpop.f32.mrf.mxu0
  %v1962 = vpop.f32.mrf.mxu0
  %v1963 = vadd.f32 0.0, %v1962
  %v1964 = vpop.f32.mrf.mxu0
  %1965 = vmatprep.mubr.bf16.mxu0 0
  %1966 = vmatmul.mubr.bf16.gmra.mxu0 %v560
  %v1967 = vpop.f32.mrf.mxu0
  %v1968 = vadd.f32 0.0, %v1967
  %v1969 = vpop.f32.mrf.mxu0
  %v1970 = vpop.f32.mrf.mxu0
  %v1971 = vadd.f32 0.0, %v1970
  %v1972 = vpop.f32.mrf.mxu0
  %1973 = vmatprep.mubr.bf16.mxu0 0
  %1974 = vmatmul.mubr.bf16.gmra.mxu0 %v563
  %v1975 = vpop.f32.mrf.mxu0
  %v1976 = vadd.f32 0.0, %v1975
  %v1977 = vpop.f32.mrf.mxu0
  %v1978 = vpop.f32.mrf.mxu0
  %v1979 = vadd.f32 0.0, %v1978
  %v1980 = vpop.f32.mrf.mxu0
  %1981 = vmatprep.mubr.bf16.mxu0 0
  %1982 = vmatmul.mubr.bf16.gmra.mxu0 %v566
  %v1983 = vpop.f32.mrf.mxu0
  %v1984 = vadd.f32 0.0, %v1983
  %v1985 = vpop.f32.mrf.mxu0
  %v1986 = vpop.f32.mrf.mxu0
  %v1987 = vadd.f32 0.0, %v1986
  %v1988 = vpop.f32.mrf.mxu0
  %1989 = vmatprep.mubr.bf16.mxu0 0
  %1990 = vmatmul.mubr.bf16.gmra.mxu0 %v569
  %v1991 = vpop.f32.mrf.mxu0
  %v1992 = vadd.f32 0.0, %v1991
  %v1993 = vpop.f32.mrf.mxu0
  %v1994 = vpop.f32.mrf.mxu0
  %v1995 = vadd.f32 0.0, %v1994
  %v1996 = vpop.f32.mrf.mxu0
  %1997 = vmatprep.mubr.bf16.mxu0 0
  %1998 = vmatmul.mubr.bf16.gmra.mxu0 %v572
  %v1999 = vpop.f32.mrf.mxu0
  %v2000 = vadd.f32 0.0, %v1999
  %v2001 = vpop.f32.mrf.mxu0
  %v2002 = vpop.f32.mrf.mxu0
  %v2003 = vadd.f32 0.0, %v2002
  %v2004 = vpop.f32.mrf.mxu0
  %2005 = vmatprep.mubr.bf16.mxu0 0
  %2006 = vmatmul.mubr.bf16.gmra.mxu0 %v575
  %v2007 = vpop.f32.mrf.mxu0
  %v2008 = vadd.f32 0.0, %v2007
  %v2009 = vpop.f32.mrf.mxu0
  %v2010 = vpop.f32.mrf.mxu0
  %v2011 = vadd.f32 0.0, %v2010
  %v2012 = vpop.f32.mrf.mxu0
  %2013 = vmatprep.mubr.bf16.mxu0 0
  %2014 = vmatmul.mubr.bf16.gmra.mxu0 %v578
  %v2015 = vpop.f32.mrf.mxu0
  %v2016 = vadd.f32 0.0, %v2015
  %v2017 = vpop.f32.mrf.mxu0
  %v2018 = vpop.f32.mrf.mxu0
  %v2019 = vadd.f32 0.0, %v2018
  %v2020 = vpop.f32.mrf.mxu0
  %2021 = vmatprep.mubr.bf16.mxu0 0
  %2022 = vmatmul.mubr.bf16.gmra.mxu0 %v581
  %v2023 = vpop.f32.mrf.mxu0
  %v2024 = vadd.f32 0.0, %v2023
  %v2025 = vpop.f32.mrf.mxu0
  %v2026 = vpop.f32.mrf.mxu0
  %v2027 = vadd.f32 0.0, %v2026
  %v2028 = vpop.f32.mrf.mxu0
  %2029 = vmatprep.mubr.bf16.mxu0 0
  %2030 = vmatmul.mubr.bf16.gmra.mxu0 %v584
  %v2031 = vpop.f32.mrf.mxu0
  %v2032 = vadd.f32 0.0, %v2031
  %v2033 = vpop.f32.mrf.mxu0
  %v2034 = vpop.f32.mrf.mxu0
  %v2035 = vadd.f32 0.0, %v2034
  %v2036 = vpop.f32.mrf.mxu0
  %2037 = vmatprep.mubr.bf16.mxu0 0
  %2038 = vmatmul.mubr.bf16.gmra.mxu0 %v587
  %v2039 = vpop.f32.mrf.mxu0
  %v2040 = vadd.f32 0.0, %v2039
  %v2041 = vpop.f32.mrf.mxu0
  %v2042 = vpop.f32.mrf.mxu0
  %v2043 = vadd.f32 0.0, %v2042
  %v2044 = vpop.f32.mrf.mxu0
  %2045 = vmatprep.mubr.bf16.mxu0 0
  %2046 = vmatmul.mubr.bf16.gmra.mxu0 %v590
  %v2047 = vpop.f32.mrf.mxu0
  %v2048 = vadd.f32 0.0, %v2047
  %v2049 = vpop.f32.mrf.mxu0
  %v2050 = vpop.f32.mrf.mxu0
  %v2051 = vadd.f32 0.0, %v2050
  %v2052 = vpop.f32.mrf.mxu0
  %2053 = vmatprep.mubr.bf16.mxu0 0
  %2054 = vmatmul.mubr.bf16.gmra.mxu0 %v593
  %v2055 = vpop.f32.mrf.mxu0
  %v2056 = vadd.f32 0.0, %v2055
  %v2057 = vpop.f32.mrf.mxu0
  %v2058 = vpop.f32.mrf.mxu0
  %v2059 = vadd.f32 0.0, %v2058
  %v2060 = vpop.f32.mrf.mxu0
  %2061 = vmatprep.mubr.bf16.mxu0 0
  %2062 = vmatmul.mubr.bf16.gmra.mxu0 %v596
  %v2063 = vpop.f32.mrf.mxu0
  %v2064 = vadd.f32 0.0, %v2063
  %v2065 = vpop.f32.mrf.mxu0
  %v2066 = vpop.f32.mrf.mxu0
  %v2067 = vadd.f32 0.0, %v2066
  %v2068 = vpop.f32.mrf.mxu0
  %2069 = vmatprep.mubr.bf16.mxu0 0
  %2070 = vmatmul.mubr.bf16.gmra.mxu0 %v599
  %v2071 = vpop.f32.mrf.mxu0
  %v2072 = vadd.f32 0.0, %v2071
  %v2073 = vpop.f32.mrf.mxu0
  %v2074 = vpop.f32.mrf.mxu0
  %v2075 = vadd.f32 0.0, %v2074
  %v2076 = vpop.f32.mrf.mxu0
  %2077 = vmatprep.mubr.bf16.mxu0 0
  %2078 = vmatmul.mubr.bf16.gmra.mxu0 %v602
  %v2079 = vpop.f32.mrf.mxu0
  %v2080 = vadd.f32 0.0, %v2079
  %v2081 = vpop.f32.mrf.mxu0
  %v2082 = vpop.f32.mrf.mxu0
  %v2083 = vadd.f32 0.0, %v2082
  %v2084 = vpop.f32.mrf.mxu0
  %2085 = vmatprep.mubr.bf16.mxu0 0
  %2086 = vmatmul.mubr.bf16.gmra.mxu0 %v605
  %v2087 = vpop.f32.mrf.mxu0
  %v2088 = vadd.f32 0.0, %v2087
  %v2089 = vpop.f32.mrf.mxu0
  %v2090 = vpop.f32.mrf.mxu0
  %v2091 = vadd.f32 0.0, %v2090
  %v2092 = vpop.f32.mrf.mxu0
  %2093 = vmatprep.mubr.bf16.mxu0 0
  %2094 = vmatmul.mubr.bf16.gmra.mxu0 %v608
  %v2095 = vpop.f32.mrf.mxu0
  %v2096 = vadd.f32 0.0, %v2095
  %v2097 = vpop.f32.mrf.mxu0
  %v2098 = vpop.f32.mrf.mxu0
  %v2099 = vadd.f32 0.0, %v2098
  %v2100 = vpop.f32.mrf.mxu0
  %2101 = vmatprep.mubr.bf16.mxu0 0
  %2102 = vmatmul.mubr.bf16.gmra.mxu0 %v611
  %v2103 = vpop.f32.mrf.mxu0
  %v2104 = vadd.f32 0.0, %v2103
  %v2105 = vpop.f32.mrf.mxu0
  %v2106 = vpop.f32.mrf.mxu0
  %v2107 = vadd.f32 0.0, %v2106
  %v2108 = vpop.f32.mrf.mxu0
  %2109 = vmatprep.mubr.bf16.mxu0 0
  %2110 = vmatmul.mubr.bf16.gmra.mxu0 %v614
  %v2111 = vpop.f32.mrf.mxu0
  %v2112 = vadd.f32 0.0, %v2111
  %v2113 = vpop.f32.mrf.mxu0
  %v2114 = vpop.f32.mrf.mxu0
  %v2115 = vadd.f32 0.0, %v2114
  %v2116 = vpop.f32.mrf.mxu0
  %2117 = vmatprep.mubr.bf16.mxu0 0
  %2118 = vmatmul.mubr.bf16.gmra.mxu0 %v617
  %v2119 = vpop.f32.mrf.mxu0
  %v2120 = vadd.f32 0.0, %v2119
  %v2121 = vpop.f32.mrf.mxu0
  %v2122 = vpop.f32.mrf.mxu0
  %v2123 = vadd.f32 0.0, %v2122
  %v2124 = vpop.f32.mrf.mxu0
  %2125 = vmatprep.mubr.bf16.mxu0 0
  %2126 = vmatmul.mubr.bf16.gmra.mxu0 %v620
  %v2127 = vpop.f32.mrf.mxu0
  %v2128 = vadd.f32 0.0, %v2127
  %v2129 = vpop.f32.mrf.mxu0
  %v2130 = vpop.f32.mrf.mxu0
  %v2131 = vadd.f32 0.0, %v2130
  %v2132 = vpop.f32.mrf.mxu0
  %2133 = vmatprep.mubr.bf16.mxu0 0
  %2134 = vmatmul.mubr.bf16.gmra.mxu0 %v623
  %v2135 = vpop.f32.mrf.mxu0
  %v2136 = vadd.f32 0.0, %v2135
  %v2137 = vpop.f32.mrf.mxu0
  %v2138 = vpop.f32.mrf.mxu0
  %v2139 = vadd.f32 0.0, %v2138
  %v2140 = vpop.f32.mrf.mxu0
  %2141 = vmatprep.mubr.bf16.mxu0 0
  %2142 = vmatmul.mubr.bf16.gmra.mxu0 %v626
  %v2143 = vpop.f32.mrf.mxu0
  %v2144 = vadd.f32 0.0, %v2143
  %v2145 = vpop.f32.mrf.mxu0
  %v2146 = vpop.f32.mrf.mxu0
  %v2147 = vadd.f32 0.0, %v2146
  %v2148 = vpop.f32.mrf.mxu0
  %2149 = vmatprep.mubr.bf16.mxu0 0
  %2150 = vmatmul.mubr.bf16.gmra.mxu0 %v629
  %v2151 = vpop.f32.mrf.mxu0
  %v2152 = vadd.f32 0.0, %v2151
  %v2153 = vpop.f32.mrf.mxu0
  %v2154 = vpop.f32.mrf.mxu0
  %v2155 = vadd.f32 0.0, %v2154
  %v2156 = vpop.f32.mrf.mxu0
  %2157 = vmatprep.mubr.bf16.mxu0 0
  %2158 = vmatmul.mubr.bf16.gmra.mxu0 %v632
  %v2159 = vpop.f32.mrf.mxu0
  %v2160 = vadd.f32 0.0, %v2159
  %v2161 = vpop.f32.mrf.mxu0
  %v2162 = vpop.f32.mrf.mxu0
  %v2163 = vadd.f32 0.0, %v2162
  %v2164 = vpop.f32.mrf.mxu0
  %2165 = vmatprep.mubr.bf16.mxu0 0
  %2166 = vmatmul.mubr.bf16.gmra.mxu0 %v635
  %v2167 = vpop.f32.mrf.mxu0
  %v2168 = vadd.f32 0.0, %v2167
  %v2169 = vpop.f32.mrf.mxu0
  %v2170 = vpop.f32.mrf.mxu0
  %v2171 = vadd.f32 0.0, %v2170
  %v2172 = vpop.f32.mrf.mxu0
  %2173 = vmatprep.mubr.bf16.mxu0 0
  %2174 = vmatmul.mubr.bf16.gmra.mxu0 %v638
  %v2175 = vpop.f32.mrf.mxu0
  %v2176 = vadd.f32 0.0, %v2175
  %v2177 = vpop.f32.mrf.mxu0
  %v2178 = vpop.f32.mrf.mxu0
  %v2179 = vadd.f32 0.0, %v2178
  %v2180 = vpop.f32.mrf.mxu0
  %2181 = vmatprep.mubr.bf16.mxu0 0
  %2182 = vmatmul.mubr.bf16.gmra.mxu0 %v641
  %v2183 = vpop.f32.mrf.mxu0
  %v2184 = vadd.f32 0.0, %v2183
  %v2185 = vpop.f32.mrf.mxu0
  %v2186 = vpop.f32.mrf.mxu0
  %v2187 = vadd.f32 0.0, %v2186
  %v2188 = vpop.f32.mrf.mxu0
  %2189 = vmatprep.mubr.bf16.mxu0 0
  %2190 = vmatmul.mubr.bf16.gmra.mxu0 %v644
  %v2191 = vpop.f32.mrf.mxu0
  %v2192 = vadd.f32 0.0, %v2191
  %v2193 = vpop.f32.mrf.mxu0
  %v2194 = vpop.f32.mrf.mxu0
  %v2195 = vadd.f32 0.0, %v2194
  %v2196 = vpop.f32.mrf.mxu0
  %2197 = vmatprep.mubr.bf16.mxu0 0
  %2198 = vmatmul.mubr.bf16.gmra.mxu0 %v647
  %v2199 = vpop.f32.mrf.mxu0
  %v2200 = vadd.f32 0.0, %v2199
  %v2201 = vpop.f32.mrf.mxu0
  %v2202 = vpop.f32.mrf.mxu0
  %v2203 = vadd.f32 0.0, %v2202
  %v2204 = vpop.f32.mrf.mxu0
  %2205 = vmatprep.mubr.bf16.mxu0 0
  %2206 = vmatmul.mubr.bf16.gmra.mxu0 %v650
  %v2207 = vpop.f32.mrf.mxu0
  %v2208 = vadd.f32 0.0, %v2207
  %v2209 = vpop.f32.mrf.mxu0
  %v2210 = vpop.f32.mrf.mxu0
  %v2211 = vadd.f32 0.0, %v2210
  %v2212 = vpop.f32.mrf.mxu0
  %2213 = vmatprep.mubr.bf16.mxu0 0
  %2214 = vmatmul.mubr.bf16.gmra.mxu0 %v653
  %v2215 = vpop.f32.mrf.mxu0
  %v2216 = vadd.f32 0.0, %v2215
  %v2217 = vpop.f32.mrf.mxu0
  %v2218 = vpop.f32.mrf.mxu0
  %v2219 = vadd.f32 0.0, %v2218
  %v2220 = vpop.f32.mrf.mxu0
  %2221 = vmatprep.mubr.bf16.mxu0 0
  %2222 = vmatmul.mubr.bf16.gmra.mxu0 %v656
  %v2223 = vpop.f32.mrf.mxu0
  %v2224 = vadd.f32 0.0, %v2223
  %v2225 = vpop.f32.mrf.mxu0
  %v2226 = vpop.f32.mrf.mxu0
  %v2227 = vadd.f32 0.0, %v2226
  %v2228 = vpop.f32.mrf.mxu0
  %2229 = vmatprep.mubr.bf16.mxu0 0
  %2230 = vmatmul.mubr.bf16.gmra.mxu0 %v659
  %v2231 = vpop.f32.mrf.mxu0
  %v2232 = vadd.f32 0.0, %v2231
  %v2233 = vpop.f32.mrf.mxu0
  %v2234 = vpop.f32.mrf.mxu0
  %v2235 = vadd.f32 0.0, %v2234
  %v2236 = vpop.f32.mrf.mxu0
  %2237 = vmatprep.mubr.bf16.mxu0 0
  %2238 = vmatmul.mubr.bf16.gmra.mxu0 %v662
  %v2239 = vpop.f32.mrf.mxu0
  %v2240 = vadd.f32 0.0, %v2239
  %v2241 = vpop.f32.mrf.mxu0
  %v2242 = vpop.f32.mrf.mxu0
  %v2243 = vadd.f32 0.0, %v2242
  %v2244 = vpop.f32.mrf.mxu0
  %2245 = vmatprep.mubr.bf16.mxu0 0
  %2246 = vmatmul.mubr.bf16.gmra.mxu0 %v665
  %v2247 = vpop.f32.mrf.mxu0
  %v2248 = vadd.f32 0.0, %v2247
  %v2249 = vpop.f32.mrf.mxu0
  %v2250 = vpop.f32.mrf.mxu0
  %v2251 = vadd.f32 0.0, %v2250
  %v2252 = vpop.f32.mrf.mxu0
  %2253 = vmatprep.mubr.bf16.mxu0 0
  %2254 = vmatmul.mubr.bf16.gmra.mxu0 %v668
  %v2255 = vpop.f32.mrf.mxu0
  %v2256 = vadd.f32 0.0, %v2255
  %v2257 = vpop.f32.mrf.mxu0
  %v2258 = vpop.f32.mrf.mxu0
  %v2259 = vadd.f32 0.0, %v2258
  %v2260 = vpop.f32.mrf.mxu0
  %2261 = vmatprep.mubr.bf16.mxu0 0
  %2262 = vmatmul.mubr.bf16.gmra.mxu0 %v671
  %v2263 = vpop.f32.mrf.mxu0
  %v2264 = vadd.f32 0.0, %v2263
  %v2265 = vpop.f32.mrf.mxu0
  %v2266 = vpop.f32.mrf.mxu0
  %v2267 = vadd.f32 0.0, %v2266
  %v2268 = vpop.f32.mrf.mxu0
  %2269 = vmatprep.mubr.bf16.mxu0 0
  %2270 = vmatmul.mubr.bf16.gmra.mxu0 %v674
  %v2271 = vpop.f32.mrf.mxu0
  %v2272 = vadd.f32 0.0, %v2271
  %v2273 = vpop.f32.mrf.mxu0
  %v2274 = vpop.f32.mrf.mxu0
  %v2275 = vadd.f32 0.0, %v2274
  %v2276 = vpop.f32.mrf.mxu0
  %2277 = vmatprep.mubr.bf16.mxu0 0
  %2278 = vmatmul.mubr.bf16.gmra.mxu0 %v677
  %v2279 = vpop.f32.mrf.mxu0
  %v2280 = vadd.f32 0.0, %v2279
  %v2281 = vpop.f32.mrf.mxu0
  %v2282 = vpop.f32.mrf.mxu0
  %v2283 = vadd.f32 0.0, %v2282
  %v2284 = vpop.f32.mrf.mxu0
  %2285 = vmatprep.mubr.bf16.mxu0 0
  %2286 = vmatmul.mubr.bf16.gmra.mxu0 %v680
  %v2287 = vpop.f32.mrf.mxu0
  %v2288 = vadd.f32 0.0, %v2287
  %v2289 = vpop.f32.mrf.mxu0
  %v2290 = vpop.f32.mrf.mxu0
  %v2291 = vadd.f32 0.0, %v2290
  %v2292 = vpop.f32.mrf.mxu0
  %2293 = vmatprep.mubr.bf16.mxu0 0
  %2294 = vmatmul.mubr.bf16.gmra.mxu0 %v683
  %v2295 = vpop.f32.mrf.mxu0
  %v2296 = vadd.f32 0.0, %v2295
  %v2297 = vpop.f32.mrf.mxu0
  %v2298 = vpop.f32.mrf.mxu0
  %v2299 = vadd.f32 0.0, %v2298
  %v2300 = vpop.f32.mrf.mxu0
  %2301 = vmatprep.mubr.bf16.mxu0 0
  %2302 = vmatmul.mubr.bf16.gmra.mxu0 %v686
  %v2303 = vpop.f32.mrf.mxu0
  %v2304 = vadd.f32 0.0, %v2303
  %v2305 = vpop.f32.mrf.mxu0
  %v2306 = vpop.f32.mrf.mxu0
  %v2307 = vadd.f32 0.0, %v2306
  %v2308 = vpop.f32.mrf.mxu0
  %2309 = vmatprep.mubr.bf16.mxu0 0
  %2310 = vmatmul.mubr.bf16.gmra.mxu0 %v689
  %v2311 = vpop.f32.mrf.mxu0
  %v2312 = vadd.f32 0.0, %v2311
  %v2313 = vpop.f32.mrf.mxu0
  %v2314 = vpop.f32.mrf.mxu0
  %v2315 = vadd.f32 0.0, %v2314
  %v2316 = vpop.f32.mrf.mxu0
  %2317 = vmatprep.mubr.bf16.mxu0 0
  %2318 = vmatmul.mubr.bf16.gmra.mxu0 %v692
  %v2319 = vpop.f32.mrf.mxu0
  %v2320 = vadd.f32 0.0, %v2319
  %v2321 = vpop.f32.mrf.mxu0
  %v2322 = vpop.f32.mrf.mxu0
  %v2323 = vadd.f32 0.0, %v2322
  %v2324 = vpop.f32.mrf.mxu0
  %2325 = vmatprep.mubr.bf16.mxu0 0
  %2326 = vmatmul.mubr.bf16.gmra.mxu0 %v695
  %v2327 = vpop.f32.mrf.mxu0
  %v2328 = vadd.f32 0.0, %v2327
  %v2329 = vpop.f32.mrf.mxu0
  %v2330 = vpop.f32.mrf.mxu0
  %v2331 = vadd.f32 0.0, %v2330
  %v2332 = vpop.f32.mrf.mxu0
  %2333 = vmatprep.mubr.bf16.mxu0 0
  %2334 = vmatmul.mubr.bf16.gmra.mxu0 %v1851
  %v2335 = vpop.f32.mrf.mxu0
  %v2336 = vadd.f32 0.0, %v2335
  %v2337 = vpop.f32.mrf.mxu0
  %v2338 = vpop.f32.mrf.mxu0
  %v2339 = vadd.f32 0.0, %v2338
  %v2340 = vpop.f32.mrf.mxu0
  %2341 = vmatprep.mubr.bf16.mxu0 0
  %2342 = vmatmul.mubr.bf16.gmra.mxu0 %v1851
  %v2343 = vpop.f32.mrf.mxu0
  %v2344 = vadd.f32 0.0, %v2343
  %v2345 = vpop.f32.mrf.mxu0
  %v2346 = vpop.f32.mrf.mxu0
  %v2347 = vadd.f32 0.0, %v2346
  %v2348 = vpop.f32.mrf.mxu0
  %2349 = vmatprep.mubr.bf16.mxu0 0
  %2350 = vmatmul.mubr.bf16.gmra.mxu0 %v1851
  %v2351 = vpop.f32.mrf.mxu0
  %v2352 = vadd.f32 0.0, %v2351
  %v2353 = vpop.f32.mrf.mxu0
  %v2354 = vpop.f32.mrf.mxu0
  %v2355 = vadd.f32 0.0, %v2354
  %v2356 = vpop.f32.mrf.mxu0
  %2357 = vmatprep.mubr.bf16.mxu0 0
  %2358 = vmatmul.mubr.bf16.gmra.mxu0 %v1851
  %v2359 = vpop.f32.mrf.mxu0
  %v2360 = vadd.f32 0.0, %v2359
  %v2361 = vpop.f32.mrf.mxu0
  %v2362 = vpop.f32.mrf.mxu0
  %v2363 = vadd.f32 0.0, %v2362
  %v2364 = vpop.f32.mrf.mxu0
  %2365 = vmatprep.mubr.bf16.mxu0 0
  %2366 = vmatmul.mubr.bf16.gmra.mxu0 %v1851
  %v2367 = vpop.f32.mrf.mxu0
  %v2368 = vadd.f32 0.0, %v2367
  %v2369 = vpop.f32.mrf.mxu0
  %v2370 = vpop.f32.mrf.mxu0
  %v2371 = vadd.f32 0.0, %v2370
  %v2372 = vpop.f32.mrf.mxu0
  %2373 = vmatprep.mubr.bf16.mxu0 0
  %2374 = vmatmul.mubr.bf16.gmra.mxu0 %v1851
  %v2375 = vpop.f32.mrf.mxu0
  %v2376 = vadd.f32 0.0, %v2375
  %v2377 = vpop.f32.mrf.mxu0
  %v2378 = vpop.f32.mrf.mxu0
  %v2379 = vadd.f32 0.0, %v2378
  %v2380 = vpop.f32.mrf.mxu0
  %2381 = vmatprep.mubr.bf16.mxu0 0
  %2382 = vmatmul.mubr.bf16.gmra.mxu0 %v1851
  %v2383 = vpop.f32.mrf.mxu0
  %v2384 = vadd.f32 0.0, %v2383
  %v2385 = vpop.f32.mrf.mxu0
  %v2386 = vpop.f32.mrf.mxu0
  %v2387 = vadd.f32 0.0, %v2386
  %v2388 = vpop.f32.mrf.mxu0
  %2389 = vmatprep.mubr.bf16.mxu0 0
  %2390 = vmatmul.mubr.bf16.gmra.mxu0 %v1851
  %v2391 = vpop.f32.mrf.mxu0
  %v2392 = vadd.f32 0.0, %v2391
  %v2393 = vpop.f32.mrf.mxu0
  %v2394 = vpop.f32.mrf.mxu0
  %v2395 = vadd.f32 0.0, %v2394
  %v2396 = vpop.f32.mrf.mxu0
  %2397 = vdwg.mxu0
  %v2398 = vadd.f32 %v1304, %v1888
  %v2399 = vadd.f32 %v1307, %v1891
  %v2400 = vadd.f32 %v1312, %v1896
  %v2401 = vadd.f32 %v1315, %v1899
  %v2402 = vadd.f32 %v1320, %v1904
  %v2403 = vadd.f32 %v1323, %v1907
  %v2404 = vadd.f32 %v1328, %v1912
  %v2405 = vadd.f32 %v1331, %v1915
  %v2406 = vadd.f32 %v1336, %v1920
  %v2407 = vadd.f32 %v1339, %v1923
  %v2408 = vadd.f32 %v1344, %v1928
  %v2409 = vadd.f32 %v1347, %v1931
  %v2410 = vadd.f32 %v1352, %v1936
  %v2411 = vadd.f32 %v1355, %v1939
  %v2412 = vadd.f32 %v1360, %v1944
  %v2413 = vadd.f32 %v1363, %v1947
  %v2414 = vadd.f32 %v1368, %v1952
  %v2415 = vadd.f32 %v1371, %v1955
  %v2416 = vadd.f32 %v1376, %v1960
  %v2417 = vadd.f32 %v1379, %v1963
  %v2418 = vadd.f32 %v1384, %v1968
  %v2419 = vadd.f32 %v1387, %v1971
  %v2420 = vadd.f32 %v1392, %v1976
  %v2421 = vadd.f32 %v1395, %v1979
  %v2422 = vadd.f32 %v1400, %v1984
  %v2423 = vadd.f32 %v1403, %v1987
  %v2424 = vadd.f32 %v1408, %v1992
  %v2425 = vadd.f32 %v1411, %v1995
  %v2426 = vadd.f32 %v1416, %v2000
  %v2427 = vadd.f32 %v1419, %v2003
  %v2428 = vadd.f32 %v1424, %v2008
  %v2429 = vadd.f32 %v1427, %v2011
  %v2430 = vadd.f32 %v1432, %v2016
  %v2431 = vadd.f32 %v1435, %v2019
  %v2432 = vadd.f32 %v1440, %v2024
  %v2433 = vadd.f32 %v1443, %v2027
  %v2434 = vadd.f32 %v1448, %v2032
  %v2435 = vadd.f32 %v1451, %v2035
  %v2436 = vadd.f32 %v1456, %v2040
  %v2437 = vadd.f32 %v1459, %v2043
  %v2438 = vadd.f32 %v1464, %v2048
  %v2439 = vadd.f32 %v1467, %v2051
  %v2440 = vadd.f32 %v1472, %v2056
  %v2441 = vadd.f32 %v1475, %v2059
  %v2442 = vadd.f32 %v1480, %v2064
  %v2443 = vadd.f32 %v1483, %v2067
  %v2444 = vadd.f32 %v1488, %v2072
  %v2445 = vadd.f32 %v1491, %v2075
  %v2446 = vadd.f32 %v1496, %v2080
  %v2447 = vadd.f32 %v1499, %v2083
  %v2448 = vadd.f32 %v1504, %v2088
  %v2449 = vadd.f32 %v1507, %v2091
  %v2450 = vadd.f32 %v1512, %v2096
  %v2451 = vadd.f32 %v1515, %v2099
  %v2452 = vadd.f32 %v1520, %v2104
  %v2453 = vadd.f32 %v1523, %v2107
  %v2454 = vadd.f32 %v1528, %v2112
  %v2455 = vadd.f32 %v1531, %v2115
  %v2456 = vadd.f32 %v1536, %v2120
  %v2457 = vadd.f32 %v1539, %v2123
  %v2458 = vadd.f32 %v1544, %v2128
  %v2459 = vadd.f32 %v1547, %v2131
  %v2460 = vadd.f32 %v1552, %v2136
  %v2461 = vadd.f32 %v1555, %v2139
  %v2462 = vadd.f32 %v1560, %v2144
  %v2463 = vadd.f32 %v1563, %v2147
  %v2464 = vadd.f32 %v1568, %v2152
  %v2465 = vadd.f32 %v1571, %v2155
  %v2466 = vadd.f32 %v1576, %v2160
  %v2467 = vadd.f32 %v1579, %v2163
  %v2468 = vadd.f32 %v1584, %v2168
  %v2469 = vadd.f32 %v1587, %v2171
  %v2470 = vadd.f32 %v1592, %v2176
  %v2471 = vadd.f32 %v1595, %v2179
  %v2472 = vadd.f32 %v1600, %v2184
  %v2473 = vadd.f32 %v1603, %v2187
  %v2474 = vadd.f32 %v1608, %v2192
  %v2475 = vadd.f32 %v1611, %v2195
  %v2476 = vadd.f32 %v1616, %v2200
  %v2477 = vadd.f32 %v1619, %v2203
  %v2478 = vadd.f32 %v1624, %v2208
  %v2479 = vadd.f32 %v1627, %v2211
  %v2480 = vadd.f32 %v1632, %v2216
  %v2481 = vadd.f32 %v1635, %v2219
  %v2482 = vadd.f32 %v1640, %v2224
  %v2483 = vadd.f32 %v1643, %v2227
  %v2484 = vadd.f32 %v1648, %v2232
  %v2485 = vadd.f32 %v1651, %v2235
  %v2486 = vadd.f32 %v1656, %v2240
  %v2487 = vadd.f32 %v1659, %v2243
  %v2488 = vadd.f32 %v1664, %v2248
  %v2489 = vadd.f32 %v1667, %v2251
  %v2490 = vadd.f32 %v1672, %v2256
  %v2491 = vadd.f32 %v1675, %v2259
  %v2492 = vadd.f32 %v1680, %v2264
  %v2493 = vadd.f32 %v1683, %v2267
  %v2494 = vadd.f32 %v1688, %v2272
  %v2495 = vadd.f32 %v1691, %v2275
  %v2496 = vadd.f32 %v1696, %v2280
  %v2497 = vadd.f32 %v1699, %v2283
  %v2498 = vadd.f32 %v1704, %v2288
  %v2499 = vadd.f32 %v1707, %v2291
  %v2500 = vadd.f32 %v1712, %v2296
  %v2501 = vadd.f32 %v1715, %v2299
  %v2502 = vadd.f32 %v1720, %v2304
  %v2503 = vadd.f32 %v1723, %v2307
  %v2504 = vadd.f32 %v1728, %v2312
  %v2505 = vadd.f32 %v1731, %v2315
  %v2506 = vadd.f32 %v1736, %v2320
  %v2507 = vadd.f32 %v1739, %v2323
  %v2508 = vadd.f32 %v1744, %v2328
  %v2509 = vadd.f32 %v1747, %v2331
  %v2510 = vadd.f32 %v1752, %v2336
  %v2511 = vadd.f32 %v1755, %v2339
  %v2512 = vadd.f32 %v1760, %v2344
  %v2513 = vadd.f32 %v1763, %v2347
  %v2514 = vadd.f32 %v1768, %v2352
  %v2515 = vadd.f32 %v1771, %v2355
  %v2516 = vadd.f32 %v1776, %v2360
  %v2517 = vadd.f32 %v1779, %v2363
  %v2518 = vadd.f32 %v1784, %v2368
  %v2519 = vadd.f32 %v1787, %v2371
  %v2520 = vadd.f32 %v1792, %v2376
  %v2521 = vadd.f32 %v1795, %v2379
  %v2522 = vadd.f32 %v1800, %v2384
  %v2523 = vadd.f32 %v1803, %v2387
  %v2524 = vadd.f32 %v1808, %v2392
  %v2525 = vadd.f32 %v1811, %v2395
  %v2526 = vld [vmem:[%s2] sm:$0x1]
  %v2528 = vlaneseq
  %v2529 = vshrl.u32 %v2528, 7
  %v2530 = vsub.s32 0, %v2529
  %v2531 = vrot.slane %v2526, %v2530
  %v2533 = vadd.f32 %v2398, %v2531
  %v2534 = vadd.f32 %v2399, %v2531
  %v2535 = vadd.f32 %v2400, %v2531
  %v2536 = vadd.f32 %v2401, %v2531
  %v2537 = vadd.f32 %v2402, %v2531
  %v2538 = vadd.f32 %v2403, %v2531
  %v2539 = vadd.f32 %v2404, %v2531
  %v2540 = vadd.f32 %v2405, %v2531
  %v2541 = vadd.f32 %v2406, %v2531
  %v2542 = vadd.f32 %v2407, %v2531
  %v2543 = vadd.f32 %v2408, %v2531
  %v2544 = vadd.f32 %v2409, %v2531
  %v2545 = vadd.f32 %v2410, %v2531
  %v2546 = vadd.f32 %v2411, %v2531
  %v2547 = vadd.f32 %v2412, %v2531
  %v2548 = vadd.f32 %v2413, %v2531
  %v2549 = vadd.f32 %v2414, %v2531
  %v2550 = vadd.f32 %v2415, %v2531
  %v2551 = vadd.f32 %v2416, %v2531
  %v2552 = vadd.f32 %v2417, %v2531
  %v2553 = vadd.f32 %v2418, %v2531
  %v2554 = vadd.f32 %v2419, %v2531
  %v2555 = vadd.f32 %v2420, %v2531
  %v2556 = vadd.f32 %v2421, %v2531
  %v2557 = vadd.f32 %v2422, %v2531
  %v2558 = vadd.f32 %v2423, %v2531
  %v2559 = vadd.f32 %v2424, %v2531
  %v2560 = vadd.f32 %v2425, %v2531
  %v2561 = vadd.f32 %v2426, %v2531
  %v2562 = vadd.f32 %v2427, %v2531
  %v2563 = vadd.f32 %v2428, %v2531
  %v2564 = vadd.f32 %v2429, %v2531
  %v2565 = vadd.f32 %v2430, %v2531
  %v2566 = vadd.f32 %v2431, %v2531
  %v2567 = vadd.f32 %v2432, %v2531
  %v2568 = vadd.f32 %v2433, %v2531
  %v2569 = vadd.f32 %v2434, %v2531
  %v2570 = vadd.f32 %v2435, %v2531
  %v2571 = vadd.f32 %v2436, %v2531
  %v2572 = vadd.f32 %v2437, %v2531
  %v2573 = vadd.f32 %v2438, %v2531
  %v2574 = vadd.f32 %v2439, %v2531
  %v2575 = vadd.f32 %v2440, %v2531
  %v2576 = vadd.f32 %v2441, %v2531
  %v2577 = vadd.f32 %v2442, %v2531
  %v2578 = vadd.f32 %v2443, %v2531
  %v2579 = vadd.f32 %v2444, %v2531
  %v2580 = vadd.f32 %v2445, %v2531
  %v2581 = vadd.f32 %v2446, %v2531
  %v2582 = vadd.f32 %v2447, %v2531
  %v2583 = vadd.f32 %v2448, %v2531
  %v2584 = vadd.f32 %v2449, %v2531
  %v2585 = vadd.f32 %v2450, %v2531
  %v2586 = vadd.f32 %v2451, %v2531
  %v2587 = vadd.f32 %v2452, %v2531
  %v2588 = vadd.f32 %v2453, %v2531
  %v2589 = vadd.f32 %v2454, %v2531
  %v2590 = vadd.f32 %v2455, %v2531
  %v2591 = vadd.f32 %v2456, %v2531
  %v2592 = vadd.f32 %v2457, %v2531
  %v2593 = vadd.f32 %v2458, %v2531
  %v2594 = vadd.f32 %v2459, %v2531
  %v2595 = vadd.f32 %v2460, %v2531
  %v2596 = vadd.f32 %v2461, %v2531
  %v2597 = vadd.f32 %v2462, %v2531
  %v2598 = vadd.f32 %v2463, %v2531
  %v2599 = vadd.f32 %v2464, %v2531
  %v2600 = vadd.f32 %v2465, %v2531
  %v2601 = vadd.f32 %v2466, %v2531
  %v2602 = vadd.f32 %v2467, %v2531
  %v2603 = vadd.f32 %v2468, %v2531
  %v2604 = vadd.f32 %v2469, %v2531
  %v2605 = vadd.f32 %v2470, %v2531
  %v2606 = vadd.f32 %v2471, %v2531
  %v2607 = vadd.f32 %v2472, %v2531
  %v2608 = vadd.f32 %v2473, %v2531
  %v2609 = vadd.f32 %v2474, %v2531
  %v2610 = vadd.f32 %v2475, %v2531
  %v2611 = vadd.f32 %v2476, %v2531
  %v2612 = vadd.f32 %v2477, %v2531
  %v2613 = vadd.f32 %v2478, %v2531
  %v2614 = vadd.f32 %v2479, %v2531
  %v2615 = vadd.f32 %v2480, %v2531
  %v2616 = vadd.f32 %v2481, %v2531
  %v2617 = vadd.f32 %v2482, %v2531
  %v2618 = vadd.f32 %v2483, %v2531
  %v2619 = vadd.f32 %v2484, %v2531
  %v2620 = vadd.f32 %v2485, %v2531
  %v2621 = vadd.f32 %v2486, %v2531
  %v2622 = vadd.f32 %v2487, %v2531
  %v2623 = vadd.f32 %v2488, %v2531
  %v2624 = vadd.f32 %v2489, %v2531
  %v2625 = vadd.f32 %v2490, %v2531
  %v2626 = vadd.f32 %v2491, %v2531
  %v2627 = vadd.f32 %v2492, %v2531
  %v2628 = vadd.f32 %v2493, %v2531
  %v2629 = vadd.f32 %v2494, %v2531
  %v2630 = vadd.f32 %v2495, %v2531
  %v2631 = vadd.f32 %v2496, %v2531
  %v2632 = vadd.f32 %v2497, %v2531
  %v2633 = vadd.f32 %v2498, %v2531
  %v2634 = vadd.f32 %v2499, %v2531
  %v2635 = vadd.f32 %v2500, %v2531
  %v2636 = vadd.f32 %v2501, %v2531
  %v2637 = vadd.f32 %v2502, %v2531
  %v2638 = vadd.f32 %v2503, %v2531
  %v2639 = vadd.f32 %v2504, %v2531
  %v2640 = vadd.f32 %v2505, %v2531
  %v2641 = vadd.f32 %v2506, %v2531
  %v2642 = vadd.f32 %v2507, %v2531
  %v2643 = vadd.f32 %v2508, %v2531
  %v2644 = vadd.f32 %v2509, %v2531
  %v2645 = vadd.f32 %v2510, %v2531
  %v2646 = vadd.f32 %v2511, %v2531
  %v2647 = vadd.f32 %v2512, %v2531
  %v2648 = vadd.f32 %v2513, %v2531
  %v2649 = vadd.f32 %v2514, %v2531
  %v2650 = vadd.f32 %v2515, %v2531
  %v2651 = vadd.f32 %v2516, %v2531
  %v2652 = vadd.f32 %v2517, %v2531
  %v2653 = vadd.f32 %v2518, %v2531
  %v2654 = vadd.f32 %v2519, %v2531
  %v2655 = vadd.f32 %v2520, %v2531
  %v2656 = vadd.f32 %v2521, %v2531
  %v2657 = vadd.f32 %v2522, %v2531
  %v2658 = vadd.f32 %v2523, %v2531
  %v2659 = vadd.f32 %v2524, %v2531
  %v2660 = vadd.f32 %v2525, %v2531
  %v2661 = vunpack.c.l.bf16 %v15
  %v2662 = vunpack.c.l.bf16 %v16
  %v2663 = vunpack.c.l.bf16 %v17
  %v2664 = vunpack.c.l.bf16 %v18
  %v2665 = vunpack.c.l.bf16 %v19
  %v2666 = vunpack.c.l.bf16 %v20
  %v2667 = vunpack.c.l.bf16 %v21
  %v2668 = vunpack.c.l.bf16 %v22
  %v2669 = vunpack.c.l.bf16 %v23
  %v2670 = vunpack.c.l.bf16 %v24
  %v2671 = vunpack.c.l.bf16 %v25
  %v2672 = vunpack.c.l.bf16 %v26
  %v2673 = vunpack.c.l.bf16 %v27
  %v2674 = vunpack.c.l.bf16 %v28
  %v2675 = vunpack.c.l.bf16 %v29
  %v2676 = vunpack.c.l.bf16 %v30
  %v2677 = vunpack.c.l.bf16 %v31
  %v2678 = vunpack.c.l.bf16 %v32
  %v2679 = vunpack.c.l.bf16 %v33
  %v2680 = vunpack.c.l.bf16 %v34
  %v2681 = vunpack.c.l.bf16 %v35
  %v2682 = vunpack.c.l.bf16 %v36
  %v2683 = vunpack.c.l.bf16 %v37
  %v2684 = vunpack.c.l.bf16 %v38
  %v2685 = vunpack.c.l.bf16 %v39
  %v2686 = vunpack.c.l.bf16 %v40
  %v2687 = vunpack.c.l.bf16 %v41
  %v2688 = vunpack.c.l.bf16 %v42
  %v2689 = vunpack.c.l.bf16 %v43
  %v2690 = vunpack.c.l.bf16 %v44
  %v2691 = vunpack.c.l.bf16 %v45
  %v2692 = vunpack.c.l.bf16 %v46
  %v2693 = vunpack.c.l.bf16 %v47
  %v2694 = vunpack.c.l.bf16 %v48
  %v2695 = vunpack.c.l.bf16 %v49
  %v2696 = vunpack.c.l.bf16 %v50
  %v2697 = vunpack.c.l.bf16 %v51
  %v2698 = vunpack.c.l.bf16 %v52
  %v2699 = vunpack.c.l.bf16 %v53
  %v2700 = vunpack.c.l.bf16 %v54
  %v2701 = vunpack.c.l.bf16 %v55
  %v2702 = vunpack.c.l.bf16 %v56
  %v2703 = vunpack.c.l.bf16 %v57
  %v2704 = vunpack.c.l.bf16 %v58
  %v2705 = vunpack.c.l.bf16 %v59
  %v2706 = vunpack.c.l.bf16 %v60
  %v2707 = vunpack.c.l.bf16 %v61
  %v2708 = vunpack.c.l.bf16 %v62
  %v2709 = vunpack.c.l.bf16 %v63
  %v2710 = vunpack.c.l.bf16 %v64
  %v2711 = vunpack.c.l.bf16 %v65
  %v2712 = vunpack.c.l.bf16 %v66
  %v2713 = vunpack.c.l.bf16 %v67
  %v2714 = vunpack.c.l.bf16 %v68
  %v2715 = vunpack.c.l.bf16 %v69
  %v2716 = vunpack.c.l.bf16 %v70
  %v2717 = vunpack.c.l.bf16 %v71
  %v2718 = vunpack.c.l.bf16 %v72
  %v2719 = vunpack.c.l.bf16 %v73
  %v2720 = vunpack.c.l.bf16 %v74
  %v2721 = vunpack.c.l.bf16 %v75
  %v2722 = vunpack.c.l.bf16 %v76
  %v2723 = vunpack.c.l.bf16 %v77
  %v2724 = vunpack.c.l.bf16 %v78
  %v2725 = vunpack.c.l.bf16 %v79
  %v2726 = vunpack.c.l.bf16 %v80
  %v2727 = vunpack.c.l.bf16 %v81
  %v2728 = vunpack.c.l.bf16 %v82
  %v2729 = vunpack.c.l.bf16 %v83
  %v2730 = vunpack.c.l.bf16 %v84
  %v2731 = vunpack.c.l.bf16 %v85
  %v2732 = vunpack.c.l.bf16 %v86
  %v2733 = vunpack.c.l.bf16 %v87
  %v2734 = vunpack.c.l.bf16 %v88
  %v2735 = vunpack.c.l.bf16 %v89
  %v2736 = vunpack.c.l.bf16 %v90
  %v2737 = vunpack.c.l.bf16 %v91
  %v2738 = vunpack.c.l.bf16 %v92
  %v2739 = vunpack.c.l.bf16 %v93
  %v2740 = vunpack.c.l.bf16 %v94
  %v2741 = vunpack.c.l.bf16 %v95
  %v2742 = vunpack.c.l.bf16 %v96
  %v2743 = vunpack.c.l.bf16 %v97
  %v2744 = vunpack.c.l.bf16 %v98
  %v2745 = vunpack.c.l.bf16 %v99
  %v2746 = vunpack.c.l.bf16 %v100
  %v2747 = vunpack.c.l.bf16 %v101
  %v2748 = vunpack.c.l.bf16 %v102
  %v2749 = vunpack.c.l.bf16 %v103
  %v2750 = vunpack.c.l.bf16 %v104
  %v2751 = vunpack.c.l.bf16 %v105
  %v2752 = vunpack.c.l.bf16 %v106
  %v2753 = vunpack.c.l.bf16 %v107
  %v2754 = vunpack.c.l.bf16 %v108
  %v2755 = vunpack.c.l.bf16 %v109
  %v2756 = vunpack.c.l.bf16 %v110
  %v2757 = vunpack.c.l.bf16 %v111
  %v2758 = vunpack.c.l.bf16 %v112
  %v2759 = vunpack.c.l.bf16 %v113
  %v2760 = vunpack.c.l.bf16 %v114
  %v2761 = vunpack.c.l.bf16 %v115
  %v2762 = vunpack.c.l.bf16 %v116
  %v2763 = vunpack.c.l.bf16 %v117
  %v2764 = vunpack.c.l.bf16 %v118
  %v2765 = vunpack.c.l.bf16 %v119
  %v2766 = vunpack.c.l.bf16 %v120
  %v2767 = vunpack.c.l.bf16 %v121
  %v2768 = vunpack.c.l.bf16 %v122
  %v2769 = vunpack.c.l.bf16 %v123
  %v2770 = vunpack.c.l.bf16 %v124
  %v2771 = vunpack.c.l.bf16 %v125
  %v2772 = vunpack.c.l.bf16 %v126
  %v2773 = vunpack.c.l.bf16 %v127
  %v2774 = vunpack.c.l.bf16 %v128
  %v2775 = vunpack.c.l.bf16 %v129
  %v2776 = vunpack.c.l.bf16 %v130
  %v2777 = vunpack.c.l.bf16 %v131
  %v2778 = vunpack.c.l.bf16 %v132
  %v2779 = vunpack.c.l.bf16 %v133
  %v2780 = vunpack.c.l.bf16 %v134
  %v2781 = vunpack.c.l.bf16 %v135
  %v2782 = vunpack.c.l.bf16 %v136
  %v2783 = vunpack.c.l.bf16 %v137
  %v2784 = vunpack.c.l.bf16 %v138
  %v2785 = vunpack.c.l.bf16 %v139
  %v2786 = vunpack.c.l.bf16 %v140
  %v2787 = vunpack.c.l.bf16 %v141
  %v2788 = vunpack.c.l.bf16 %v142
  %v2789 = vadd.f32 %v2533, %v2661
  %v2790 = vadd.f32 %v2534, %v2662
  %v2791 = vadd.f32 %v2535, %v2663
  %v2792 = vadd.f32 %v2536, %v2664
  %v2793 = vadd.f32 %v2537, %v2665
  %v2794 = vadd.f32 %v2538, %v2666
  %v2795 = vadd.f32 %v2539, %v2667
  %v2796 = vadd.f32 %v2540, %v2668
  %v2797 = vadd.f32 %v2541, %v2669
  %v2798 = vadd.f32 %v2542, %v2670
  %v2799 = vadd.f32 %v2543, %v2671
  %v2800 = vadd.f32 %v2544, %v2672
  %v2801 = vadd.f32 %v2545, %v2673
  %v2802 = vadd.f32 %v2546, %v2674
  %v2803 = vadd.f32 %v2547, %v2675
  %v2804 = vadd.f32 %v2548, %v2676
  %v2805 = vadd.f32 %v2549, %v2677
  %v2806 = vadd.f32 %v2550, %v2678
  %v2807 = vadd.f32 %v2551, %v2679
  %v2808 = vadd.f32 %v2552, %v2680
  %v2809 = vadd.f32 %v2553, %v2681
  %v2810 = vadd.f32 %v2554, %v2682
  %v2811 = vadd.f32 %v2555, %v2683
  %v2812 = vadd.f32 %v2556, %v2684
  %v2813 = vadd.f32 %v2557, %v2685
  %v2814 = vadd.f32 %v2558, %v2686
  %v2815 = vadd.f32 %v2559, %v2687
  %v2816 = vadd.f32 %v2560, %v2688
  %v2817 = vadd.f32 %v2561, %v2689
  %v2818 = vadd.f32 %v2562, %v2690
  %v2819 = vadd.f32 %v2563, %v2691
  %v2820 = vadd.f32 %v2564, %v2692
  %v2821 = vadd.f32 %v2565, %v2693
  %v2822 = vadd.f32 %v2566, %v2694
  %v2823 = vadd.f32 %v2567, %v2695
  %v2824 = vadd.f32 %v2568, %v2696
  %v2825 = vadd.f32 %v2569, %v2697
  %v2826 = vadd.f32 %v2570, %v2698
  %v2827 = vadd.f32 %v2571, %v2699
  %v2828 = vadd.f32 %v2572, %v2700
  %v2829 = vadd.f32 %v2573, %v2701
  %v2830 = vadd.f32 %v2574, %v2702
  %v2831 = vadd.f32 %v2575, %v2703
  %v2832 = vadd.f32 %v2576, %v2704
  %v2833 = vadd.f32 %v2577, %v2705
  %v2834 = vadd.f32 %v2578, %v2706
  %v2835 = vadd.f32 %v2579, %v2707
  %v2836 = vadd.f32 %v2580, %v2708
  %v2837 = vadd.f32 %v2581, %v2709
  %v2838 = vadd.f32 %v2582, %v2710
  %v2839 = vadd.f32 %v2583, %v2711
  %v2840 = vadd.f32 %v2584, %v2712
  %v2841 = vadd.f32 %v2585, %v2713
  %v2842 = vadd.f32 %v2586, %v2714
  %v2843 = vadd.f32 %v2587, %v2715
  %v2844 = vadd.f32 %v2588, %v2716
  %v2845 = vadd.f32 %v2589, %v2717
  %v2846 = vadd.f32 %v2590, %v2718
  %v2847 = vadd.f32 %v2591, %v2719
  %v2848 = vadd.f32 %v2592, %v2720
  %v2849 = vadd.f32 %v2593, %v2721
  %v2850 = vadd.f32 %v2594, %v2722
  %v2851 = vadd.f32 %v2595, %v2723
  %v2852 = vadd.f32 %v2596, %v2724
  %v2853 = vadd.f32 %v2597, %v2725
  %v2854 = vadd.f32 %v2598, %v2726
  %v2855 = vadd.f32 %v2599, %v2727
  %v2856 = vadd.f32 %v2600, %v2728
  %v2857 = vadd.f32 %v2601, %v2729
  %v2858 = vadd.f32 %v2602, %v2730
  %v2859 = vadd.f32 %v2603, %v2731
  %v2860 = vadd.f32 %v2604, %v2732
  %v2861 = vadd.f32 %v2605, %v2733
  %v2862 = vadd.f32 %v2606, %v2734
  %v2863 = vadd.f32 %v2607, %v2735
  %v2864 = vadd.f32 %v2608, %v2736
  %v2865 = vadd.f32 %v2609, %v2737
  %v2866 = vadd.f32 %v2610, %v2738
  %v2867 = vadd.f32 %v2611, %v2739
  %v2868 = vadd.f32 %v2612, %v2740
  %v2869 = vadd.f32 %v2613, %v2741
  %v2870 = vadd.f32 %v2614, %v2742
  %v2871 = vadd.f32 %v2615, %v2743
  %v2872 = vadd.f32 %v2616, %v2744
  %v2873 = vadd.f32 %v2617, %v2745
  %v2874 = vadd.f32 %v2618, %v2746
  %v2875 = vadd.f32 %v2619, %v2747
  %v2876 = vadd.f32 %v2620, %v2748
  %v2877 = vadd.f32 %v2621, %v2749
  %v2878 = vadd.f32 %v2622, %v2750
  %v2879 = vadd.f32 %v2623, %v2751
  %v2880 = vadd.f32 %v2624, %v2752
  %v2881 = vadd.f32 %v2625, %v2753
  %v2882 = vadd.f32 %v2626, %v2754
  %v2883 = vadd.f32 %v2627, %v2755
  %v2884 = vadd.f32 %v2628, %v2756
  %v2885 = vadd.f32 %v2629, %v2757
  %v2886 = vadd.f32 %v2630, %v2758
  %v2887 = vadd.f32 %v2631, %v2759
  %v2888 = vadd.f32 %v2632, %v2760
  %v2889 = vadd.f32 %v2633, %v2761
  %v2890 = vadd.f32 %v2634, %v2762
  %v2891 = vadd.f32 %v2635, %v2763
  %v2892 = vadd.f32 %v2636, %v2764
  %v2893 = vadd.f32 %v2637, %v2765
  %v2894 = vadd.f32 %v2638, %v2766
  %v2895 = vadd.f32 %v2639, %v2767
  %v2896 = vadd.f32 %v2640, %v2768
  %v2897 = vadd.f32 %v2641, %v2769
  %v2898 = vadd.f32 %v2642, %v2770
  %v2899 = vadd.f32 %v2643, %v2771
  %v2900 = vadd.f32 %v2644, %v2772
  %v2901 = vadd.f32 %v2645, %v2773
  %v2902 = vadd.f32 %v2646, %v2774
  %v2903 = vadd.f32 %v2647, %v2775
  %v2904 = vadd.f32 %v2648, %v2776
  %v2905 = vadd.f32 %v2649, %v2777
  %v2906 = vadd.f32 %v2650, %v2778
  %v2907 = vadd.f32 %v2651, %v2779
  %v2908 = vadd.f32 %v2652, %v2780
  %v2909 = vadd.f32 %v2653, %v2781
  %v2910 = vadd.f32 %v2654, %v2782
  %v2911 = vadd.f32 %v2655, %v2783
  %v2912 = vadd.f32 %v2656, %v2784
  %v2913 = vadd.f32 %v2657, %v2785
  %v2914 = vadd.f32 %v2658, %v2786
  %v2915 = vadd.f32 %v2659, %v2787
  %v2916 = vadd.f32 %v2660, %v2788
  %v2917 = vmax.f32 %v2789, 0.0
  %v2918 = vmax.f32 %v2790, 0.0
  %v2919 = vmax.f32 %v2791, 0.0
  %v2920 = vmax.f32 %v2792, 0.0
  %v2921 = vmax.f32 %v2793, 0.0
  %v2922 = vmax.f32 %v2794, 0.0
  %v2923 = vmax.f32 %v2795, 0.0
  %v2924 = vmax.f32 %v2796, 0.0
  %v2925 = vmax.f32 %v2797, 0.0
  %v2926 = vmax.f32 %v2798, 0.0
  %v2927 = vmax.f32 %v2799, 0.0
  %v2928 = vmax.f32 %v2800, 0.0
  %v2929 = vmax.f32 %v2801, 0.0
  %v2930 = vmax.f32 %v2802, 0.0
  %v2931 = vmax.f32 %v2803, 0.0
  %v2932 = vmax.f32 %v2804, 0.0
  %v2933 = vmax.f32 %v2805, 0.0
  %v2934 = vmax.f32 %v2806, 0.0
  %v2935 = vmax.f32 %v2807, 0.0
  %v2936 = vmax.f32 %v2808, 0.0
  %v2937 = vmax.f32 %v2809, 0.0
  %v2938 = vmax.f32 %v2810, 0.0
  %v2939 = vmax.f32 %v2811, 0.0
  %v2940 = vmax.f32 %v2812, 0.0
  %v2941 = vmax.f32 %v2813, 0.0
  %v2942 = vmax.f32 %v2814, 0.0
  %v2943 = vmax.f32 %v2815, 0.0
  %v2944 = vmax.f32 %v2816, 0.0
  %v2945 = vmax.f32 %v2817, 0.0
  %v2946 = vmax.f32 %v2818, 0.0
  %v2947 = vmax.f32 %v2819, 0.0
  %v2948 = vmax.f32 %v2820, 0.0
  %v2949 = vmax.f32 %v2821, 0.0
  %v2950 = vmax.f32 %v2822, 0.0
  %v2951 = vmax.f32 %v2823, 0.0
  %v2952 = vmax.f32 %v2824, 0.0
  %v2953 = vmax.f32 %v2825, 0.0
  %v2954 = vmax.f32 %v2826, 0.0
  %v2955 = vmax.f32 %v2827, 0.0
  %v2956 = vmax.f32 %v2828, 0.0
  %v2957 = vmax.f32 %v2829, 0.0
  %v2958 = vmax.f32 %v2830, 0.0
  %v2959 = vmax.f32 %v2831, 0.0
  %v2960 = vmax.f32 %v2832, 0.0
  %v2961 = vmax.f32 %v2833, 0.0
  %v2962 = vmax.f32 %v2834, 0.0
  %v2963 = vmax.f32 %v2835, 0.0
  %v2964 = vmax.f32 %v2836, 0.0
  %v2965 = vmax.f32 %v2837, 0.0
  %v2966 = vmax.f32 %v2838, 0.0
  %v2967 = vmax.f32 %v2839, 0.0
  %v2968 = vmax.f32 %v2840, 0.0
  %v2969 = vmax.f32 %v2841, 0.0
  %v2970 = vmax.f32 %v2842, 0.0
  %v2971 = vmax.f32 %v2843, 0.0
  %v2972 = vmax.f32 %v2844, 0.0
  %v2973 = vmax.f32 %v2845, 0.0
  %v2974 = vmax.f32 %v2846, 0.0
  %v2975 = vmax.f32 %v2847, 0.0
  %v2976 = vmax.f32 %v2848, 0.0
  %v2977 = vmax.f32 %v2849, 0.0
  %v2978 = vmax.f32 %v2850, 0.0
  %v2979 = vmax.f32 %v2851, 0.0
  %v2980 = vmax.f32 %v2852, 0.0
  %v2981 = vmax.f32 %v2853, 0.0
  %v2982 = vmax.f32 %v2854, 0.0
  %v2983 = vmax.f32 %v2855, 0.0
  %v2984 = vmax.f32 %v2856, 0.0
  %v2985 = vmax.f32 %v2857, 0.0
  %v2986 = vmax.f32 %v2858, 0.0
  %v2987 = vmax.f32 %v2859, 0.0
  %v2988 = vmax.f32 %v2860, 0.0
  %v2989 = vmax.f32 %v2861, 0.0
  %v2990 = vmax.f32 %v2862, 0.0
  %v2991 = vmax.f32 %v2863, 0.0
  %v2992 = vmax.f32 %v2864, 0.0
  %v2993 = vmax.f32 %v2865, 0.0
  %v2994 = vmax.f32 %v2866, 0.0
  %v2995 = vmax.f32 %v2867, 0.0
  %v2996 = vmax.f32 %v2868, 0.0
  %v2997 = vmax.f32 %v2869, 0.0
  %v2998 = vmax.f32 %v2870, 0.0
  %v2999 = vmax.f32 %v2871, 0.0
  %v3000 = vmax.f32 %v2872, 0.0
  %v3001 = vmax.f32 %v2873, 0.0
  %v3002 = vmax.f32 %v2874, 0.0
  %v3003 = vmax.f32 %v2875, 0.0
  %v3004 = vmax.f32 %v2876, 0.0
  %v3005 = vmax.f32 %v2877, 0.0
  %v3006 = vmax.f32 %v2878, 0.0
  %v3007 = vmax.f32 %v2879, 0.0
  %v3008 = vmax.f32 %v2880, 0.0
  %v3009 = vmax.f32 %v2881, 0.0
  %v3010 = vmax.f32 %v2882, 0.0
  %v3011 = vmax.f32 %v2883, 0.0
  %v3012 = vmax.f32 %v2884, 0.0
  %v3013 = vmax.f32 %v2885, 0.0
  %v3014 = vmax.f32 %v2886, 0.0
  %v3015 = vmax.f32 %v2887, 0.0
  %v3016 = vmax.f32 %v2888, 0.0
  %v3017 = vmax.f32 %v2889, 0.0
  %v3018 = vmax.f32 %v2890, 0.0
  %v3019 = vmax.f32 %v2891, 0.0
  %v3020 = vmax.f32 %v2892, 0.0
  %v3021 = vmax.f32 %v2893, 0.0
  %v3022 = vmax.f32 %v2894, 0.0
  %v3023 = vmax.f32 %v2895, 0.0
  %v3024 = vmax.f32 %v2896, 0.0
  %v3025 = vmax.f32 %v2897, 0.0
  %v3026 = vmax.f32 %v2898, 0.0
  %v3027 = vmax.f32 %v2899, 0.0
  %v3028 = vmax.f32 %v2900, 0.0
  %v3029 = vmax.f32 %v2901, 0.0
  %v3030 = vmax.f32 %v2902, 0.0
  %v3031 = vmax.f32 %v2903, 0.0
  %v3032 = vmax.f32 %v2904, 0.0
  %v3033 = vmax.f32 %v2905, 0.0
  %v3034 = vmax.f32 %v2906, 0.0
  %v3035 = vmax.f32 %v2907, 0.0
  %v3036 = vmax.f32 %v2908, 0.0
  %v3037 = vmax.f32 %v2909, 0.0
  %v3038 = vmax.f32 %v2910, 0.0
  %v3039 = vmax.f32 %v2911, 0.0
  %v3040 = vmax.f32 %v2912, 0.0
  %v3041 = vmax.f32 %v2913, 0.0
  %v3042 = vmax.f32 %v2914, 0.0
  %v3043 = vmax.f32 %v2915, 0.0
  %v3044 = vmax.f32 %v2916, 0.0
  %v3045 = vpack.c.bf16 %v2918, %v2917
  %v3046 = vpack.c.bf16 %v2920, %v2919
  %v3047 = vpack.c.bf16 %v2922, %v2921
  %v3048 = vpack.c.bf16 %v2924, %v2923
  %v3049 = vpack.c.bf16 %v2926, %v2925
  %v3050 = vpack.c.bf16 %v2928, %v2927
  %v3051 = vpack.c.bf16 %v2930, %v2929
  %v3052 = vpack.c.bf16 %v2932, %v2931
  %v3053 = vpack.c.bf16 %v2934, %v2933
  %v3054 = vpack.c.bf16 %v2936, %v2935
  %v3055 = vpack.c.bf16 %v2938, %v2937
  %v3056 = vpack.c.bf16 %v2940, %v2939
  %v3057 = vpack.c.bf16 %v2942, %v2941
  %v3058 = vpack.c.bf16 %v2944, %v2943
  %v3059 = vpack.c.bf16 %v2946, %v2945
  %v3060 = vpack.c.bf16 %v2948, %v2947
  %v3061 = vpack.c.bf16 %v2950, %v2949
  %v3062 = vpack.c.bf16 %v2952, %v2951
  %v3063 = vpack.c.bf16 %v2954, %v2953
  %v3064 = vpack.c.bf16 %v2956, %v2955
  %v3065 = vpack.c.bf16 %v2958, %v2957
  %v3066 = vpack.c.bf16 %v2960, %v2959
  %v3067 = vpack.c.bf16 %v2962, %v2961
  %v3068 = vpack.c.bf16 %v2964, %v2963
  %v3069 = vpack.c.bf16 %v2966, %v2965
  %v3070 = vpack.c.bf16 %v2968, %v2967
  %v3071 = vpack.c.bf16 %v2970, %v2969
  %v3072 = vpack.c.bf16 %v2972, %v2971
  %v3073 = vpack.c.bf16 %v2974, %v2973
  %v3074 = vpack.c.bf16 %v2976, %v2975
  %v3075 = vpack.c.bf16 %v2978, %v2977
  %v3076 = vpack.c.bf16 %v2980, %v2979
  %v3077 = vpack.c.bf16 %v2982, %v2981
  %v3078 = vpack.c.bf16 %v2984, %v2983
  %v3079 = vpack.c.bf16 %v2986, %v2985
  %v3080 = vpack.c.bf16 %v2988, %v2987
  %v3081 = vpack.c.bf16 %v2990, %v2989
  %v3082 = vpack.c.bf16 %v2992, %v2991
  %v3083 = vpack.c.bf16 %v2994, %v2993
  %v3084 = vpack.c.bf16 %v2996, %v2995
  %v3085 = vpack.c.bf16 %v2998, %v2997
  %v3086 = vpack.c.bf16 %v3000, %v2999
  %v3087 = vpack.c.bf16 %v3002, %v3001
  %v3088 = vpack.c.bf16 %v3004, %v3003
  %v3089 = vpack.c.bf16 %v3006, %v3005
  %v3090 = vpack.c.bf16 %v3008, %v3007
  %v3091 = vpack.c.bf16 %v3010, %v3009
  %v3092 = vpack.c.bf16 %v3012, %v3011
  %v3093 = vpack.c.bf16 %v3014, %v3013
  %v3094 = vpack.c.bf16 %v3016, %v3015
  %v3095 = vpack.c.bf16 %v3018, %v3017
  %v3096 = vpack.c.bf16 %v3020, %v3019
  %v3097 = vpack.c.bf16 %v3022, %v3021
  %v3098 = vpack.c.bf16 %v3024, %v3023
  %v3099 = vpack.c.bf16 %v3026, %v3025
  %v3100 = vpack.c.bf16 %v3028, %v3027
  %v3101 = vpack.c.bf16 %v3030, %v3029
  %v3102 = vpack.c.bf16 %v3032, %v3031
  %v3103 = vpack.c.bf16 %v3034, %v3033
  %v3104 = vpack.c.bf16 %v3036, %v3035
  %v3105 = vpack.c.bf16 %v3038, %v3037
  %v3106 = vpack.c.bf16 %v3040, %v3039
  %v3107 = vpack.c.bf16 %v3042, %v3041
  %v3108 = vpack.c.bf16 %v3044, %v3043
  %v3173 = vunpack.c.l.b16 %v3045
  %v3174 = vunpack.c.h.b16 %v3045
  %v3175 = vunpack.c.l.b16 %v3046
  %v3176 = vunpack.c.h.b16 %v3046
  %v3177 = vunpack.c.l.b16 %v3047
  %v3178 = vunpack.c.h.b16 %v3047
  %v3179 = vunpack.c.l.b16 %v3048
  %v3180 = vunpack.c.h.b16 %v3048
  %v3181 = vunpack.c.l.b16 %v3049
  %v3182 = vunpack.c.h.b16 %v3049
  %v3183 = vunpack.c.l.b16 %v3050
  %v3184 = vunpack.c.h.b16 %v3050
  %v3185 = vunpack.c.l.b16 %v3051
  %v3186 = vunpack.c.h.b16 %v3051
  %v3187 = vunpack.c.l.b16 %v3052
  %v3188 = vunpack.c.h.b16 %v3052
  %v3189 = vunpack.c.l.b16 %v3053
  %v3190 = vunpack.c.h.b16 %v3053
  %v3191 = vunpack.c.l.b16 %v3054
  %v3192 = vunpack.c.h.b16 %v3054
  %v3193 = vunpack.c.l.b16 %v3055
  %v3194 = vunpack.c.h.b16 %v3055
  %v3195 = vunpack.c.l.b16 %v3056
  %v3196 = vunpack.c.h.b16 %v3056
  %v3197 = vunpack.c.l.b16 %v3057
  %v3198 = vunpack.c.h.b16 %v3057
  %v3199 = vunpack.c.l.b16 %v3058
  %v3200 = vunpack.c.h.b16 %v3058
  %v3201 = vunpack.c.l.b16 %v3059
  %v3202 = vunpack.c.h.b16 %v3059
  %v3203 = vunpack.c.l.b16 %v3060
  %v3204 = vunpack.c.h.b16 %v3060
  %v3205 = vunpack.c.l.b16 %v3061
  %v3206 = vunpack.c.h.b16 %v3061
  %v3207 = vunpack.c.l.b16 %v3062
  %v3208 = vunpack.c.h.b16 %v3062
  %v3209 = vunpack.c.l.b16 %v3063
  %v3210 = vunpack.c.h.b16 %v3063
  %v3211 = vunpack.c.l.b16 %v3064
  %v3212 = vunpack.c.h.b16 %v3064
  %v3213 = vunpack.c.l.b16 %v3065
  %v3214 = vunpack.c.h.b16 %v3065
  %v3215 = vunpack.c.l.b16 %v3066
  %v3216 = vunpack.c.h.b16 %v3066
  %v3217 = vunpack.c.l.b16 %v3067
  %v3218 = vunpack.c.h.b16 %v3067
  %v3219 = vunpack.c.l.b16 %v3068
  %v3220 = vunpack.c.h.b16 %v3068
  %v3221 = vunpack.c.l.b16 %v3069
  %v3222 = vunpack.c.h.b16 %v3069
  %v3223 = vunpack.c.l.b16 %v3070
  %v3224 = vunpack.c.h.b16 %v3070
  %v3225 = vunpack.c.l.b16 %v3071
  %v3226 = vunpack.c.h.b16 %v3071
  %v3227 = vunpack.c.l.b16 %v3072
  %v3228 = vunpack.c.h.b16 %v3072
  %v3229 = vunpack.c.l.b16 %v3073
  %v3230 = vunpack.c.h.b16 %v3073
  %v3231 = vunpack.c.l.b16 %v3074
  %v3232 = vunpack.c.h.b16 %v3074
  %v3233 = vunpack.c.l.b16 %v3075
  %v3234 = vunpack.c.h.b16 %v3075
  %v3235 = vunpack.c.l.b16 %v3076
  %v3236 = vunpack.c.h.b16 %v3076
  %v3237 = vunpack.c.l.b16 %v3077
  %v3238 = vunpack.c.h.b16 %v3077
  %v3239 = vunpack.c.l.b16 %v3078
  %v3240 = vunpack.c.h.b16 %v3078
  %v3241 = vunpack.c.l.b16 %v3079
  %v3242 = vunpack.c.h.b16 %v3079
  %v3243 = vunpack.c.l.b16 %v3080
  %v3244 = vunpack.c.h.b16 %v3080
  %v3245 = vunpack.c.l.b16 %v3081
  %v3246 = vunpack.c.h.b16 %v3081
  %v3247 = vunpack.c.l.b16 %v3082
  %v3248 = vunpack.c.h.b16 %v3082
  %v3249 = vunpack.c.l.b16 %v3083
  %v3250 = vunpack.c.h.b16 %v3083
  %v3251 = vunpack.c.l.b16 %v3084
  %v3252 = vunpack.c.h.b16 %v3084
  %v3253 = vunpack.c.l.b16 %v3085
  %v3254 = vunpack.c.h.b16 %v3085
  %v3255 = vunpack.c.l.b16 %v3086
  %v3256 = vunpack.c.h.b16 %v3086
  %v3257 = vunpack.c.l.b16 %v3087
  %v3258 = vunpack.c.h.b16 %v3087
  %v3259 = vunpack.c.l.b16 %v3088
  %v3260 = vunpack.c.h.b16 %v3088
  %v3261 = vunpack.c.l.b16 %v3089
  %v3262 = vunpack.c.h.b16 %v3089
  %v3263 = vunpack.c.l.b16 %v3090
  %v3264 = vunpack.c.h.b16 %v3090
  %v3265 = vunpack.c.l.b16 %v3091
  %v3266 = vunpack.c.h.b16 %v3091
  %v3267 = vunpack.c.l.b16 %v3092
  %v3268 = vunpack.c.h.b16 %v3092
  %v3269 = vunpack.c.l.b16 %v3093
  %v3270 = vunpack.c.h.b16 %v3093
  %v3271 = vunpack.c.l.b16 %v3094
  %v3272 = vunpack.c.h.b16 %v3094
  %v3273 = vunpack.c.l.b16 %v3095
  %v3274 = vunpack.c.h.b16 %v3095
  %v3275 = vunpack.c.l.b16 %v3096
  %v3276 = vunpack.c.h.b16 %v3096
  %v3277 = vunpack.c.l.b16 %v3097
  %v3278 = vunpack.c.h.b16 %v3097
  %v3279 = vunpack.c.l.b16 %v3098
  %v3280 = vunpack.c.h.b16 %v3098
  %v3281 = vunpack.c.l.b16 %v3099
  %v3282 = vunpack.c.h.b16 %v3099
  %v3283 = vunpack.c.l.b16 %v3100
  %v3284 = vunpack.c.h.b16 %v3100
  %v3285 = vunpack.c.l.b16 %v3101
  %v3286 = vunpack.c.h.b16 %v3101
  %v3287 = vunpack.c.l.b16 %v3102
  %v3288 = vunpack.c.h.b16 %v3102
  %v3289 = vunpack.c.l.b16 %v3103
  %v3290 = vunpack.c.h.b16 %v3103
  %v3291 = vunpack.c.l.b16 %v3104
  %v3292 = vunpack.c.h.b16 %v3104
  %v3293 = vunpack.c.l.b16 %v3105
  %v3294 = vunpack.c.h.b16 %v3105
  %v3295 = vunpack.c.l.b16 %v3106
  %v3296 = vunpack.c.h.b16 %v3106
  %v3297 = vunpack.c.l.b16 %v3107
  %v3298 = vunpack.c.h.b16 %v3107
  %v3299 = vunpack.c.l.b16 %v3108
  %v3300 = vunpack.c.h.b16 %v3108
  %v3301 = vpack.c.b16 %v3173, %v3173
  %v3302 = vpack.c.b16 %v3174, %v3174
  %v3303 = vpack.c.b16 %v3175, %v3175
  %v3304 = vpack.c.b16 %v3176, %v3176
  %v3305 = vpack.c.b16 %v3177, %v3177
  %v3306 = vpack.c.b16 %v3178, %v3178
  %v3307 = vpack.c.b16 %v3179, %v3179
  %v3308 = vpack.c.b16 %v3180, %v3180
  %v3309 = vpack.c.b16 %v3181, %v3181
  %v3310 = vpack.c.b16 %v3182, %v3182
  %v3311 = vpack.c.b16 %v3183, %v3183
  %v3312 = vpack.c.b16 %v3184, %v3184
  %v3313 = vpack.c.b16 %v3185, %v3185
  %v3314 = vpack.c.b16 %v3186, %v3186
  %v3315 = vpack.c.b16 %v3187, %v3187
  %v3316 = vpack.c.b16 %v3188, %v3188
  %v3317 = vpack.c.b16 %v3189, %v3189
  %v3318 = vpack.c.b16 %v3190, %v3190
  %v3319 = vpack.c.b16 %v3191, %v3191
  %v3320 = vpack.c.b16 %v3192, %v3192
  %v3321 = vpack.c.b16 %v3193, %v3193
  %v3322 = vpack.c.b16 %v3194, %v3194
  %v3323 = vpack.c.b16 %v3195, %v3195
  %v3324 = vpack.c.b16 %v3196, %v3196
  %v3325 = vpack.c.b16 %v3197, %v3197
  %v3326 = vpack.c.b16 %v3198, %v3198
  %v3327 = vpack.c.b16 %v3199, %v3199
  %v3328 = vpack.c.b16 %v3200, %v3200
  %v3329 = vpack.c.b16 %v3201, %v3201
  %v3330 = vpack.c.b16 %v3202, %v3202
  %v3331 = vpack.c.b16 %v3203, %v3203
  %v3332 = vpack.c.b16 %v3204, %v3204
  %v3333 = vpack.c.b16 %v3205, %v3205
  %v3334 = vpack.c.b16 %v3206, %v3206
  %v3335 = vpack.c.b16 %v3207, %v3207
  %v3336 = vpack.c.b16 %v3208, %v3208
  %v3337 = vpack.c.b16 %v3209, %v3209
  %v3338 = vpack.c.b16 %v3210, %v3210
  %v3339 = vpack.c.b16 %v3211, %v3211
  %v3340 = vpack.c.b16 %v3212, %v3212
  %v3341 = vpack.c.b16 %v3213, %v3213
  %v3342 = vpack.c.b16 %v3214, %v3214
  %v3343 = vpack.c.b16 %v3215, %v3215
  %v3344 = vpack.c.b16 %v3216, %v3216
  %v3345 = vpack.c.b16 %v3217, %v3217
  %v3346 = vpack.c.b16 %v3218, %v3218
  %v3347 = vpack.c.b16 %v3219, %v3219
  %v3348 = vpack.c.b16 %v3220, %v3220
  %v3349 = vpack.c.b16 %v3221, %v3221
  %v3350 = vpack.c.b16 %v3222, %v3222
  %v3351 = vpack.c.b16 %v3223, %v3223
  %v3352 = vpack.c.b16 %v3224, %v3224
  %v3353 = vpack.c.b16 %v3225, %v3225
  %v3354 = vpack.c.b16 %v3226, %v3226
  %v3355 = vpack.c.b16 %v3227, %v3227
  %v3356 = vpack.c.b16 %v3228, %v3228
  %v3357 = vpack.c.b16 %v3229, %v3229
  %v3358 = vpack.c.b16 %v3230, %v3230
  %v3359 = vpack.c.b16 %v3231, %v3231
  %v3360 = vpack.c.b16 %v3232, %v3232
  %v3361 = vpack.c.b16 %v3233, %v3233
  %v3362 = vpack.c.b16 %v3234, %v3234
  %v3363 = vpack.c.b16 %v3235, %v3235
  %v3364 = vpack.c.b16 %v3236, %v3236
  %v3365 = vpack.c.b16 %v3237, %v3237
  %v3366 = vpack.c.b16 %v3238, %v3238
  %v3367 = vpack.c.b16 %v3239, %v3239
  %v3368 = vpack.c.b16 %v3240, %v3240
  %v3369 = vpack.c.b16 %v3241, %v3241
  %v3370 = vpack.c.b16 %v3242, %v3242
  %v3371 = vpack.c.b16 %v3243, %v3243
  %v3372 = vpack.c.b16 %v3244, %v3244
  %v3373 = vpack.c.b16 %v3245, %v3245
  %v3374 = vpack.c.b16 %v3246, %v3246
  %v3375 = vpack.c.b16 %v3247, %v3247
  %v3376 = vpack.c.b16 %v3248, %v3248
  %v3377 = vpack.c.b16 %v3249, %v3249
  %v3378 = vpack.c.b16 %v3250, %v3250
  %v3379 = vpack.c.b16 %v3251, %v3251
  %v3380 = vpack.c.b16 %v3252, %v3252
  %v3381 = vpack.c.b16 %v3253, %v3253
  %v3382 = vpack.c.b16 %v3254, %v3254
  %v3383 = vpack.c.b16 %v3255, %v3255
  %v3384 = vpack.c.b16 %v3256, %v3256
  %v3385 = vpack.c.b16 %v3257, %v3257
  %v3386 = vpack.c.b16 %v3258, %v3258
  %v3387 = vpack.c.b16 %v3259, %v3259
  %v3388 = vpack.c.b16 %v3260, %v3260
  %v3389 = vpack.c.b16 %v3261, %v3261
  %v3390 = vpack.c.b16 %v3262, %v3262
  %v3391 = vpack.c.b16 %v3263, %v3263
  %v3392 = vpack.c.b16 %v3264, %v3264
  %v3393 = vpack.c.b16 %v3265, %v3265
  %v3394 = vpack.c.b16 %v3266, %v3266
  %v3395 = vpack.c.b16 %v3267, %v3267
  %v3396 = vpack.c.b16 %v3268, %v3268
  %v3397 = vpack.c.b16 %v3269, %v3269
  %v3398 = vpack.c.b16 %v3270, %v3270
  %v3399 = vpack.c.b16 %v3271, %v3271
  %v3400 = vpack.c.b16 %v3272, %v3272
  %v3401 = vpack.c.b16 %v3273, %v3273
  %v3402 = vpack.c.b16 %v3274, %v3274
  %v3403 = vpack.c.b16 %v3275, %v3275
  %v3404 = vpack.c.b16 %v3276, %v3276
  %v3405 = vpack.c.b16 %v3277, %v3277
  %v3406 = vpack.c.b16 %v3278, %v3278
  %v3407 = vpack.c.b16 %v3279, %v3279
  %v3408 = vpack.c.b16 %v3280, %v3280
  %v3409 = vpack.c.b16 %v3281, %v3281
  %v3410 = vpack.c.b16 %v3282, %v3282
  %v3411 = vpack.c.b16 %v3283, %v3283
  %v3412 = vpack.c.b16 %v3284, %v3284
  %v3413 = vpack.c.b16 %v3285, %v3285
  %v3414 = vpack.c.b16 %v3286, %v3286
  %v3415 = vpack.c.b16 %v3287, %v3287
  %v3416 = vpack.c.b16 %v3288, %v3288
  %v3417 = vpack.c.b16 %v3289, %v3289
  %v3418 = vpack.c.b16 %v3290, %v3290
  %v3419 = vpack.c.b16 %v3291, %v3291
  %v3420 = vpack.c.b16 %v3292, %v3292
  %v3421 = vpack.c.b16 %v3293, %v3293
  %v3422 = vpack.c.b16 %v3294, %v3294
  %v3423 = vpack.c.b16 %v3295, %v3295
  %v3424 = vpack.c.b16 %v3296, %v3296
  %v3425 = vpack.c.b16 %v3297, %v3297
  %v3426 = vpack.c.b16 %v3298, %v3298
  %v3427 = vpack.c.b16 %v3299, %v3299
  %v3428 = vpack.c.b16 %v3300, %v3300
  %vm3557 = vcmask 519168
  %3558 = vst.msk [vmem:[%s3] sm:$0xf] %vm3557, %v3301
  %3559 = vst.msk [vmem:[%s3 + $0x4] sm:$0xf] %vm3557, %v3302
  %3560 = vst.msk [vmem:[%s3 + $0x8] sm:$0xf] %vm3557, %v3303
  %3561 = vst.msk [vmem:[%s3 + $0xc] sm:$0xf] %vm3557, %v3304
  %3562 = vst.msk [vmem:[%s3 + $0x10] sm:$0xf] %vm3557, %v3305
  %3563 = vst.msk [vmem:[%s3 + $0x14] sm:$0xf] %vm3557, %v3306
  %3564 = vst.msk [vmem:[%s3 + $0x18] sm:$0xf] %vm3557, %v3307
  %3565 = vst.msk [vmem:[%s3 + $0x1c] sm:$0xf] %vm3557, %v3308
  %3566 = vst.msk [vmem:[%s3 + $0x20] sm:$0xf] %vm3557, %v3309
  %3567 = vst.msk [vmem:[%s3 + $0x24] sm:$0xf] %vm3557, %v3310
  %3568 = vst.msk [vmem:[%s3 + $0x28] sm:$0xf] %vm3557, %v3311
  %3569 = vst.msk [vmem:[%s3 + $0x2c] sm:$0xf] %vm3557, %v3312
  %3570 = vst.msk [vmem:[%s3 + $0x30] sm:$0xf] %vm3557, %v3313
  %3571 = vst.msk [vmem:[%s3 + $0x34] sm:$0xf] %vm3557, %v3314
  %3572 = vst.msk [vmem:[%s3 + $0x38] sm:$0xf] %vm3557, %v3315
  %3573 = vst.msk [vmem:[%s3 + $0x3c] sm:$0xf] %vm3557, %v3316
  %3574 = vst.msk [vmem:[%s3 + $0x40] sm:$0xf] %vm3557, %v3317
  %3575 = vst.msk [vmem:[%s3 + $0x44] sm:$0xf] %vm3557, %v3318
  %3576 = vst.msk [vmem:[%s3 + $0x48] sm:$0xf] %vm3557, %v3319
  %3577 = vst.msk [vmem:[%s3 + $0x4c] sm:$0xf] %vm3557, %v3320
  %3578 = vst.msk [vmem:[%s3 + $0x50] sm:$0xf] %vm3557, %v3321
  %3579 = vst.msk [vmem:[%s3 + $0x54] sm:$0xf] %vm3557, %v3322
  %3580 = vst.msk [vmem:[%s3 + $0x58] sm:$0xf] %vm3557, %v3323
  %3581 = vst.msk [vmem:[%s3 + $0x5c] sm:$0xf] %vm3557, %v3324
  %3582 = vst.msk [vmem:[%s3 + $0x60] sm:$0xf] %vm3557, %v3325
  %3583 = vst.msk [vmem:[%s3 + $0x64] sm:$0xf] %vm3557, %v3326
  %3584 = vst.msk [vmem:[%s3 + $0x68] sm:$0xf] %vm3557, %v3327
  %3585 = vst.msk [vmem:[%s3 + $0x6c] sm:$0xf] %vm3557, %v3328
  %3586 = vst.msk [vmem:[%s3 + $0x70] sm:$0xf] %vm3557, %v3329
  %3587 = vst.msk [vmem:[%s3 + $0x74] sm:$0xf] %vm3557, %v3330
  %3588 = vst.msk [vmem:[%s3 + $0x78] sm:$0xf] %vm3557, %v3331
  %3589 = vst.msk [vmem:[%s3 + $0x7c] sm:$0xf] %vm3557, %v3332
  %3590 = vst.msk [vmem:[%s3 + $0x80] sm:$0xf] %vm3557, %v3333
  %3591 = vst.msk [vmem:[%s3 + $0x84] sm:$0xf] %vm3557, %v3334
  %3592 = vst.msk [vmem:[%s3 + $0x88] sm:$0xf] %vm3557, %v3335
  %3593 = vst.msk [vmem:[%s3 + $0x8c] sm:$0xf] %vm3557, %v3336
  %3594 = vst.msk [vmem:[%s3 + $0x90] sm:$0xf] %vm3557, %v3337
  %3595 = vst.msk [vmem:[%s3 + $0x94] sm:$0xf] %vm3557, %v3338
  %3596 = vst.msk [vmem:[%s3 + $0x98] sm:$0xf] %vm3557, %v3339
  %3597 = vst.msk [vmem:[%s3 + $0x9c] sm:$0xf] %vm3557, %v3340
  %3598 = vst.msk [vmem:[%s3 + $0xa0] sm:$0xf] %vm3557, %v3341
  %3599 = vst.msk [vmem:[%s3 + $0xa4] sm:$0xf] %vm3557, %v3342
  %3600 = vst.msk [vmem:[%s3 + $0xa8] sm:$0xf] %vm3557, %v3343
  %3601 = vst.msk [vmem:[%s3 + $0xac] sm:$0xf] %vm3557, %v3344
  %3602 = vst.msk [vmem:[%s3 + $0xb0] sm:$0xf] %vm3557, %v3345
  %3603 = vst.msk [vmem:[%s3 + $0xb4] sm:$0xf] %vm3557, %v3346
  %3604 = vst.msk [vmem:[%s3 + $0xb8] sm:$0xf] %vm3557, %v3347
  %3605 = vst.msk [vmem:[%s3 + $0xbc] sm:$0xf] %vm3557, %v3348
  %3606 = vst.msk [vmem:[%s3 + $0xc0] sm:$0xf] %vm3557, %v3349
  %3607 = vst.msk [vmem:[%s3 + $0xc4] sm:$0xf] %vm3557, %v3350
  %3608 = vst.msk [vmem:[%s3 + $0xc8] sm:$0xf] %vm3557, %v3351
  %3609 = vst.msk [vmem:[%s3 + $0xcc] sm:$0xf] %vm3557, %v3352
  %3610 = vst.msk [vmem:[%s3 + $0xd0] sm:$0xf] %vm3557, %v3353
  %3611 = vst.msk [vmem:[%s3 + $0xd4] sm:$0xf] %vm3557, %v3354
  %3612 = vst.msk [vmem:[%s3 + $0xd8] sm:$0xf] %vm3557, %v3355
  %3613 = vst.msk [vmem:[%s3 + $0xdc] sm:$0xf] %vm3557, %v3356
  %3614 = vst.msk [vmem:[%s3 + $0xe0] sm:$0xf] %vm3557, %v3357
  %3615 = vst.msk [vmem:[%s3 + $0xe4] sm:$0xf] %vm3557, %v3358
  %3616 = vst.msk [vmem:[%s3 + $0xe8] sm:$0xf] %vm3557, %v3359
  %3617 = vst.msk [vmem:[%s3 + $0xec] sm:$0xf] %vm3557, %v3360
  %3618 = vst.msk [vmem:[%s3 + $0xf0] sm:$0xf] %vm3557, %v3361
  %3619 = vst.msk [vmem:[%s3 + $0xf4] sm:$0xf] %vm3557, %v3362
  %3620 = vst.msk [vmem:[%s3 + $0xf8] sm:$0xf] %vm3557, %v3363
  %3621 = vst.msk [vmem:[%s3 + $0xfc] sm:$0xf] %vm3557, %v3364
  %3622 = vst.msk [vmem:[%s3 + $0x100] sm:$0xf] %vm3557, %v3365
  %3623 = vst.msk [vmem:[%s3 + $0x104] sm:$0xf] %vm3557, %v3366
  %3624 = vst.msk [vmem:[%s3 + $0x108] sm:$0xf] %vm3557, %v3367
  %3625 = vst.msk [vmem:[%s3 + $0x10c] sm:$0xf] %vm3557, %v3368
  %3626 = vst.msk [vmem:[%s3 + $0x110] sm:$0xf] %vm3557, %v3369
  %3627 = vst.msk [vmem:[%s3 + $0x114] sm:$0xf] %vm3557, %v3370
  %3628 = vst.msk [vmem:[%s3 + $0x118] sm:$0xf] %vm3557, %v3371
  %3629 = vst.msk [vmem:[%s3 + $0x11c] sm:$0xf] %vm3557, %v3372
  %3630 = vst.msk [vmem:[%s3 + $0x120] sm:$0xf] %vm3557, %v3373
  %3631 = vst.msk [vmem:[%s3 + $0x124] sm:$0xf] %vm3557, %v3374
  %3632 = vst.msk [vmem:[%s3 + $0x128] sm:$0xf] %vm3557, %v3375
  %3633 = vst.msk [vmem:[%s3 + $0x12c] sm:$0xf] %vm3557, %v3376
  %3634 = vst.msk [vmem:[%s3 + $0x130] sm:$0xf] %vm3557, %v3377
  %3635 = vst.msk [vmem:[%s3 + $0x134] sm:$0xf] %vm3557, %v3378
  %3636 = vst.msk [vmem:[%s3 + $0x138] sm:$0xf] %vm3557, %v3379
  %3637 = vst.msk [vmem:[%s3 + $0x13c] sm:$0xf] %vm3557, %v3380
  %3638 = vst.msk [vmem:[%s3 + $0x140] sm:$0xf] %vm3557, %v3381
  %3639 = vst.msk [vmem:[%s3 + $0x144] sm:$0xf] %vm3557, %v3382
  %3640 = vst.msk [vmem:[%s3 + $0x148] sm:$0xf] %vm3557, %v3383
  %3641 = vst.msk [vmem:[%s3 + $0x14c] sm:$0xf] %vm3557, %v3384
  %3642 = vst.msk [vmem:[%s3 + $0x150] sm:$0xf] %vm3557, %v3385
  %3643 = vst.msk [vmem:[%s3 + $0x154] sm:$0xf] %vm3557, %v3386
  %3644 = vst.msk [vmem:[%s3 + $0x158] sm:$0xf] %vm3557, %v3387
  %3645 = vst.msk [vmem:[%s3 + $0x15c] sm:$0xf] %vm3557, %v3388
  %3646 = vst.msk [vmem:[%s3 + $0x160] sm:$0xf] %vm3557, %v3389
  %3647 = vst.msk [vmem:[%s3 + $0x164] sm:$0xf] %vm3557, %v3390
  %3648 = vst.msk [vmem:[%s3 + $0x168] sm:$0xf] %vm3557, %v3391
  %3649 = vst.msk [vmem:[%s3 + $0x16c] sm:$0xf] %vm3557, %v3392
  %3650 = vst.msk [vmem:[%s3 + $0x170] sm:$0xf] %vm3557, %v3393
  %3651 = vst.msk [vmem:[%s3 + $0x174] sm:$0xf] %vm3557, %v3394
  %3652 = vst.msk [vmem:[%s3 + $0x178] sm:$0xf] %vm3557, %v3395
  %3653 = vst.msk [vmem:[%s3 + $0x17c] sm:$0xf] %vm3557, %v3396
  %3654 = vst.msk [vmem:[%s3 + $0x180] sm:$0xf] %vm3557, %v3397
  %3655 = vst.msk [vmem:[%s3 + $0x184] sm:$0xf] %vm3557, %v3398
  %3656 = vst.msk [vmem:[%s3 + $0x188] sm:$0xf] %vm3557, %v3399
  %3657 = vst.msk [vmem:[%s3 + $0x18c] sm:$0xf] %vm3557, %v3400
  %3658 = vst.msk [vmem:[%s3 + $0x190] sm:$0xf] %vm3557, %v3401
  %3659 = vst.msk [vmem:[%s3 + $0x194] sm:$0xf] %vm3557, %v3402
  %3660 = vst.msk [vmem:[%s3 + $0x198] sm:$0xf] %vm3557, %v3403
  %3661 = vst.msk [vmem:[%s3 + $0x19c] sm:$0xf] %vm3557, %v3404
  %3662 = vst.msk [vmem:[%s3 + $0x1a0] sm:$0xf] %vm3557, %v3405
  %3663 = vst.msk [vmem:[%s3 + $0x1a4] sm:$0xf] %vm3557, %v3406
  %3664 = vst.msk [vmem:[%s3 + $0x1a8] sm:$0xf] %vm3557, %v3407
  %3665 = vst.msk [vmem:[%s3 + $0x1ac] sm:$0xf] %vm3557, %v3408
  %3666 = vst.msk [vmem:[%s3 + $0x1b0] sm:$0xf] %vm3557, %v3409
  %3667 = vst.msk [vmem:[%s3 + $0x1b4] sm:$0xf] %vm3557, %v3410
  %3668 = vst.msk [vmem:[%s3 + $0x1b8] sm:$0xf] %vm3557, %v3411
  %3669 = vst.msk [vmem:[%s3 + $0x1bc] sm:$0xf] %vm3557, %v3412
  %3670 = vst.msk [vmem:[%s3 + $0x1c0] sm:$0xf] %vm3557, %v3413
  %3671 = vst.msk [vmem:[%s3 + $0x1c4] sm:$0xf] %vm3557, %v3414
  %3672 = vst.msk [vmem:[%s3 + $0x1c8] sm:$0xf] %vm3557, %v3415
  %3673 = vst.msk [vmem:[%s3 + $0x1cc] sm:$0xf] %vm3557, %v3416
  %3674 = vst.msk [vmem:[%s3 + $0x1d0] sm:$0xf] %vm3557, %v3417
  %3675 = vst.msk [vmem:[%s3 + $0x1d4] sm:$0xf] %vm3557, %v3418
  %3676 = vst.msk [vmem:[%s3 + $0x1d8] sm:$0xf] %vm3557, %v3419
  %3677 = vst.msk [vmem:[%s3 + $0x1dc] sm:$0xf] %vm3557, %v3420
  %3678 = vst.msk [vmem:[%s3 + $0x1e0] sm:$0xf] %vm3557, %v3421
  %3679 = vst.msk [vmem:[%s3 + $0x1e4] sm:$0xf] %vm3557, %v3422
  %3680 = vst.msk [vmem:[%s3 + $0x1e8] sm:$0xf] %vm3557, %v3423
  %3681 = vst.msk [vmem:[%s3 + $0x1ec] sm:$0xf] %vm3557, %v3424
  %3682 = vst.msk [vmem:[%s3 + $0x1f0] sm:$0xf] %vm3557, %v3425
  %3683 = vst.msk [vmem:[%s3 + $0x1f4] sm:$0xf] %vm3557, %v3426
  %3684 = vst.msk [vmem:[%s3 + $0x1f8] sm:$0xf] %vm3557, %v3427
  %3685 = vst.msk [vmem:[%s3 + $0x1fc] sm:$0xf] %vm3557, %v3428
  // Predicated region
  $region14: #{tpu_custom_call.1} parent=0 // pred_check
    _
  $region15: #{tpu_custom_call.1} parent=0 // pred_check_branch
    %3687 = sbr.rel (0) target = $region17
  $region16: #{tpu_custom_call.1} parent=0 // pred_region
    _
  $region17: #{tpu_custom_call.1} parent=0 // pred_fallthru
    _
  // Predicated region
  $region18: #{tpu_custom_call.1} parent=0 // pred_check
    _
  $region19: #{tpu_custom_call.1} parent=0 // pred_check_branch
    %3689 = sbr.rel (0) target = $region21
  $region20: #{tpu_custom_call.1} parent=0 // pred_region
    _
  $region21: #{tpu_custom_call.1} parent=0 // pred_fallthru
    _

</llo_original>
